<compile_context>
chip_gen: v7x
topology: tpu7x:2x2x1
jax: 0.10.0
libtpu: 0.0.40
codegen_flags: <defaults>
</compile_context>

<pallas_src>
import math
import numpy as np
import jax
import jax.numpy as jnp
from jax.experimental import pallas as pl
from jax.experimental.pallas import tpu as pltpu


# ----------------------------- fused decoder kernel ------------------------------

def make_decoder_kernel(n_layers, n_head, d_k, k1, eps=1e-5,
                        compute_dtype=jnp.float32):
    """Whole-decoder kernel: processes one batch element through all FFT blocks.

    compute_dtype: set to jnp.bfloat16 on v5e/v6e/v7x for MXU-native operand width
    (accumulation stays f32 via preferred_element_type); default f32 for bitwise
    fidelity to the PyTorch reference.
    """
    hd = n_head * d_k
    pad = (k1 - 1) // 2
    scale = 1.0 / math.sqrt(d_k)

    def mm(a, b):
        return jnp.dot(a.astype(compute_dtype), b.astype(compute_dtype),
                       preferred_element_type=jnp.float32)

    def qkT(a, b):  # (L, dk) x (L, dk) -> (L, L), contract last dims (A @ B^T on MXU)
        return jax.lax.dot_general(
            a.astype(compute_dtype), b.astype(compute_dtype),
            dimension_numbers=(((1,), (1,)), ((), ())),
            preferred_element_type=jnp.float32)

    def layer_norm(y, g, b):
        mu = jnp.mean(y, axis=-1, keepdims=True)
        var = jnp.mean(jnp.square(y - mu), axis=-1, keepdims=True)
        return (y - mu) * jax.lax.rsqrt(var + eps) * g + b

    def kernel(x_ref, pos_ref, mrow_ref, mcol_ref,
               wqkv_ref, bqkv_ref, wo_ref, bo_ref, ln1g_ref, ln1b_ref,
               w1_ref, b1_ref, w2_ref, b2_ref, ln2g_ref, ln2b_ref,
               o_ref):
        L, D = pos_ref.shape
        x = x_ref[0] + pos_ref[...]             # (L, D)  enc_seq + positional enc
        m_row = mrow_ref[0]                     # (1, L)  1.0 = padded key
        keep = 1.0 - mcol_ref[0]                # (L, 1)  0.0 on padded rows

        zpad = jnp.zeros((pad, D), jnp.float32) if pad > 0 else None

        for l in range(n_layers):               # static unroll over layers
            # ---------- multi-head self attention (fused QKV) ----------
            residual = x
            qkv = mm(x, wqkv_ref[l]) + bqkv_ref[l]          # (L, 3*hd)
            heads = []
            for h in range(n_head):                         # static head loop, lane slices
                qh = qkv[:, h * d_k:(h + 1) * d_k]
                kh = qkv[:, hd + h * d_k: hd + (h + 1) * d_k]
                vh = qkv[:, 2 * hd + h * d_k: 2 * hd + (h + 1) * d_k]
                s = qkT(qh, kh) * scale                     # (L, L)
                s = jnp.where(m_row > 0.5, jnp.full_like(s, -1e9), s)
                s = s - jnp.max(s, axis=-1, keepdims=True)
                e = jnp.exp(s)
                p = e * pl.reciprocal(jnp.sum(e, axis=-1, keepdims=True),
                                      approx=True)
                heads.append(mm(p, vh))                     # (L, dk)
            ao = jnp.concatenate(heads, axis=-1)            # (L, hd)
            attn_out = mm(ao, wo_ref[l]) + bo_ref[l]        # (L, D)
            x = layer_norm(attn_out + residual, ln1g_ref[l], ln1b_ref[l]) * keep

            # ---------- position-wise FFN: conv1d(k1) -> relu -> conv1d(1) ----------
            residual = x
            if pad > 0:
                xp = jnp.concatenate([zpad, x, zpad], axis=0)       # (L + k1 - 1, D)
            else:
                xp = x
            # im2col in VMEM -> single matmul with K = k1*D
            xcol = jnp.concatenate([xp[t:t + L, :] for t in range(k1)], axis=-1)
            h1 = jnp.maximum(mm(xcol, w1_ref[l]) + b1_ref[l], 0.0)  # (L, d_inner)
            ffn_out = mm(h1, w2_ref[l]) + b2_ref[l]                 # (L, D)
            x = layer_norm(ffn_out + residual, ln2g_ref[l], ln2b_ref[l]) * keep

        o_ref[0] = x.astype(o_ref.dtype)

    return kernel


# ----------------------------- model glue ------------------------------

def get_sinusoid_encoding_table(n_position, d_hid):
    pos = np.arange(n_position)[:, None].astype(np.float64)
    hid = np.arange(d_hid)[None, :]
    angle = pos / np.power(10000.0, 2 * (hid // 2) / d_hid)
    table = np.array(angle)
    table[:, 0::2] = np.sin(table[:, 0::2])
    table[:, 1::2] = np.cos(table[:, 1::2])
    return jnp.asarray(table, dtype=jnp.float32)


def init_decoder_params(key, config):
    D = config["transformer"]["decoder_hidden"]
    H = config["transformer"]["decoder_head"]
    dk = D // H
    d_inner = config["transformer"]["conv_filter_size"]
    k1, _ = config["transformer"]["conv_kernel_size"]
    n_layers = config["transformer"]["decoder_layer"]

    layers = []
    for _ in range(n_layers):
        key, *ks = jax.random.split(key, 8)
        layers.append(dict(
            wq=0.02 * jax.random.normal(ks[0], (D, H * dk), jnp.float32),
            bq=jnp.zeros((H * dk,), jnp.float32),
            wk=0.02 * jax.random.normal(ks[1], (D, H * dk), jnp.float32),
            bk=jnp.zeros((H * dk,), jnp.float32),
            wv=0.02 * jax.random.normal(ks[2], (D, H * dk), jnp.float32),
            bv=jnp.zeros((H * dk,), jnp.float32),
            wo=0.02 * jax.random.normal(ks[3], (H * dk, D), jnp.float32),
            bo=jnp.zeros((D,), jnp.float32),
            ln1_g=jnp.ones((D,), jnp.float32), ln1_b=jnp.zeros((D,), jnp.float32),
            # conv1 stored as (k1, C_in, C_out); conv2 has kernel size 1 -> (C_in, C_out)
            w1=0.02 * jax.random.normal(ks[4], (k1, D, d_inner), jnp.float32),
            b1=jnp.zeros((d_inner,), jnp.float32),
            w2=0.02 * jax.random.normal(ks[5], (d_inner, D), jnp.float32),
            b2=jnp.zeros((D,), jnp.float32),
            ln2_g=jnp.ones((D,), jnp.float32), ln2_b=jnp.zeros((D,), jnp.float32),
        ))
    return dict(pos_enc=get_sinusoid_encoding_table(config["max_seq_len"] + 1, D),
                layers=layers)


def decoder_forward(params, enc_seq, mask, config, compute_dtype=jnp.float32):
    """enc_seq: (B, L, D) float32, mask: (B, L) bool (True = padding)."""
    B, L, D = enc_seq.shape
    tcfg = config["transformer"]
    H = tcfg["decoder_head"]
    d_k = D // H
    hd = H * d_k
    d_inner = tcfg["conv_filter_size"]
    k1, k2 = tcfg["conv_kernel_size"]
    n_layers = tcfg["decoder_layer"]
    assert L <= config["max_seq_len"]   # eval/short-sequence branch of Decoder.forward
    assert k2 == 1   # TODO(synk): general second-conv kernel size (FastSpeech2 default is 1)
    assert k1 % 2 == 1   # TODO(synk): even conv kernels change seq length in the reference too

    layers = params["layers"]
    NL = n_layers

    # ---- stack per-layer weights (one-time tiny XLA concats outside the kernel) ----
    wqkv = jnp.stack([jnp.concatenate([lp["wq"], lp["wk"], lp["wv"]], axis=1)
                      for lp in layers])                                   # (NL, D, 3hd)
    bqkv = jnp.stack([jnp.concatenate([lp["bq"], lp["bk"], lp["bv"]])[None, :]
                      for lp in layers])                                   # (NL, 1, 3hd)
    wo = jnp.stack([lp["wo"] for lp in layers])                            # (NL, hd, D)
    bo = jnp.stack([lp["bo"][None, :] for lp in layers])                   # (NL, 1, D)
    ln1g = jnp.stack([lp["ln1_g"][None, :] for lp in layers])
    ln1b = jnp.stack([lp["ln1_b"][None, :] for lp in layers])
    w1u = jnp.stack([lp["w1"].reshape(k1 * D, d_inner) for lp in layers])  # (NL, k1*D, d_inner)
    b1 = jnp.stack([lp["b1"][None, :] for lp in layers])                   # (NL, 1, d_inner)
    w2 = jnp.stack([lp["w2"] for lp in layers])                            # (NL, d_inner, D)
    b2 = jnp.stack([lp["b2"][None, :] for lp in layers])                   # (NL, 1, D)
    ln2g = jnp.stack([lp["ln2_g"][None, :] for lp in layers])
    ln2b = jnp.stack([lp["ln2_b"][None, :] for lp in layers])

    pos = params["pos_enc"][:L]                      # (L, D)
    mask_f = mask.astype(jnp.float32)
    mask_row = mask_f[:, None, :]                    # (B, 1, L)  key-pad mask (attention)
    mask_col = mask_f[:, :, None]                    # (B, L, 1)  row-zeroing mask

    def rep(shape):       # replicated block (weights / pos enc): fetched once
        return pl.BlockSpec(shape, lambda b, _n=len(shape): (0,) * _n)

    def per_b(shape):     # per-batch block
        return pl.BlockSpec(shape, lambda b: (b, 0, 0))

    # TODO(synk): at production sizes (D=256, d_inner=1024, L~1000) tile the sequence
    # dim (blocks of 256-512 rows) and set vmem_limit_bytes for v7x's 64 MiB VMEM.
    out = pl.pallas_call(
        make_decoder_kernel(n_layers, H, d_k, k1, compute_dtype=compute_dtype),
        out_shape=jax.ShapeDtypeStruct((B, L, D), jnp.float32),
        grid=(B,),
        in_specs=[
            per_b((1, L, D)),                        # enc_seq
            rep((L, D)),                             # positional encoding
            per_b((1, 1, L)),                        # key-pad mask (row form)
            per_b((1, L, 1)),                        # pad mask (column form)
            rep((NL, D, 3 * hd)), rep((NL, 1, 3 * hd)),
            rep((NL, hd, D)), rep((NL, 1, D)),
            rep((NL, 1, D)), rep((NL, 1, D)),
            rep((NL, k1 * D, d_inner)), rep((NL, 1, d_inner)),
            rep((NL, d_inner, D)), rep((NL, 1, D)),
            rep((NL, 1, D)), rep((NL, 1, D)),
        ],
        out_specs=per_b((1, L, D)),
        compiler_params=pltpu.CompilerParams(
            dimension_semantics=("parallel",),       # batch axis -> both TCs on v7x
        ),
    )(enc_seq, pos, mask_row, mask_col,
      wqkv, bqkv, wo, bo, ln1g, ln1b, w1u, b1, w2, b2, ln2g, ln2b)

    return out, mask


# ----------------------------- main ------------------------------

if __name__ == "__main__":
    config = {
        "max_seq_len": 16,
        "transformer": {
            "decoder_hidden": 32,
            "decoder_layer": 2,
            "decoder_head": 2,
            "conv_filter_size": 64,
            "conv_kernel_size": [9, 1],
            "decoder_dropout": 0.2,   # eval mode -> dropout is identity
        },
    }

    key = jax.random.PRNGKey(0)
    k_param, k_input = jax.random.split(key)

    B, L, D = 2, 16, config["transformer"]["decoder_hidden"]
    enc_seq = jax.random.normal(k_input, (B, L, D), jnp.float32)
    lengths = jnp.array([16, 12], dtype=jnp.int32)
    mask = jnp.arange(L)[None, :] >= lengths[:, None]   # (B, L) bool, True = pad

    params = init_decoder_params(k_param, config)

    dec_out, out_mask = decoder_forward(params, enc_seq, mask, config)
    dec_out = jax.block_until_ready(dec_out)
    out_mask = jax.block_until_ready(out_mask)

    assert dec_out.shape == (B, L, D) and out_mask.shape == (B, L)
    assert bool(jnp.all(jnp.isfinite(dec_out)))
    # padded positions are zeroed by the final masked_fill
    assert float(jnp.max(jnp.abs(dec_out[1, 12:, :]))) == 0.0

    print("KERNEL_OK")
</pallas_src>

<mosaic_0001>
module attributes {stable_mosaic.version = 11 : i64} {
  func.func @kernel(%arg0: i32, %arg1: memref<1x16x32xf32, #tpu.memory_space<vmem>>, %arg2: memref<16x32xf32, #tpu.memory_space<vmem>>, %arg3: memref<1x1x16xf32, #tpu.memory_space<vmem>>, %arg4: memref<1x16x1xf32, #tpu.memory_space<vmem>>, %arg5: memref<2x32x96xf32, #tpu.memory_space<vmem>>, %arg6: memref<2x1x96xf32, #tpu.memory_space<vmem>>, %arg7: memref<2x32x32xf32, #tpu.memory_space<vmem>>, %arg8: memref<2x1x32xf32, #tpu.memory_space<vmem>>, %arg9: memref<2x1x32xf32, #tpu.memory_space<vmem>>, %arg10: memref<2x1x32xf32, #tpu.memory_space<vmem>>, %arg11: memref<2x288x64xf32, #tpu.memory_space<vmem>>, %arg12: memref<2x1x64xf32, #tpu.memory_space<vmem>>, %arg13: memref<2x64x32xf32, #tpu.memory_space<vmem>>, %arg14: memref<2x1x32xf32, #tpu.memory_space<vmem>>, %arg15: memref<2x1x32xf32, #tpu.memory_space<vmem>>, %arg16: memref<2x1x32xf32, #tpu.memory_space<vmem>>, %arg17: memref<1x16x32xf32, #tpu.memory_space<vmem>>) attributes {dimension_semantics = [#tpu.dimension_semantics<parallel>], iteration_bounds = array<i64: 2>, scalar_prefetch = 0 : i64, scratch_operands = 0 : i64, tpu.core_type = #tpu.core_type<tc>, window_params = [{transform_indices = @transform_0, window_bounds = array<i64: 1, 16, 32>}, {pipeline_mode = #tpu.pipeline_mode<synchronous>, transform_indices = @transform_1, window_bounds = array<i64: 16, 32>}, {transform_indices = @transform_2, window_bounds = array<i64: 1, 1, 16>}, {transform_indices = @transform_3, window_bounds = array<i64: 1, 16, 1>}, {pipeline_mode = #tpu.pipeline_mode<synchronous>, transform_indices = @transform_4, window_bounds = array<i64: 2, 32, 96>}, {pipeline_mode = #tpu.pipeline_mode<synchronous>, transform_indices = @transform_5, window_bounds = array<i64: 2, 1, 96>}, {pipeline_mode = #tpu.pipeline_mode<synchronous>, transform_indices = @transform_6, window_bounds = array<i64: 2, 32, 32>}, {pipeline_mode = #tpu.pipeline_mode<synchronous>, transform_indices = @transform_7, window_bounds = array<i64: 2, 1, 32>}, {pipeline_mode = #tpu.pipeline_mode<synchronous>, transform_indices = @transform_8, window_bounds = array<i64: 2, 1, 32>}, {pipeline_mode = #tpu.pipeline_mode<synchronous>, transform_indices = @transform_9, window_bounds = array<i64: 2, 1, 32>}, {pipeline_mode = #tpu.pipeline_mode<synchronous>, transform_indices = @transform_10, window_bounds = array<i64: 2, 288, 64>}, {pipeline_mode = #tpu.pipeline_mode<synchronous>, transform_indices = @transform_11, window_bounds = array<i64: 2, 1, 64>}, {pipeline_mode = #tpu.pipeline_mode<synchronous>, transform_indices = @transform_12, window_bounds = array<i64: 2, 64, 32>}, {pipeline_mode = #tpu.pipeline_mode<synchronous>, transform_indices = @transform_13, window_bounds = array<i64: 2, 1, 32>}, {pipeline_mode = #tpu.pipeline_mode<synchronous>, transform_indices = @transform_14, window_bounds = array<i64: 2, 1, 32>}, {pipeline_mode = #tpu.pipeline_mode<synchronous>, transform_indices = @transform_15, window_bounds = array<i64: 2, 1, 32>}, {transform_indices = @transform_16, window_bounds = array<i64: 1, 16, 32>}]} {
    %c0 = arith.constant 0 : index
    %c0_0 = arith.constant 0 : index
    %c0_1 = arith.constant 0 : index
    %0 = vector.load %arg1[%c0, %c0_0, %c0_1] : memref<1x16x32xf32, #tpu.memory_space<vmem>>, vector<1x16x32xf32>
    %1 = vector.shape_cast %0 : vector<1x16x32xf32> to vector<16x32xf32>
    %c0_2 = arith.constant 0 : index
    %c0_3 = arith.constant 0 : index
    %2 = vector.load %arg2[%c0_2, %c0_3] : memref<16x32xf32, #tpu.memory_space<vmem>>, vector<16x32xf32>
    %3 = arith.addf %1, %2 : vector<16x32xf32>
    %c0_4 = arith.constant 0 : index
    %c0_5 = arith.constant 0 : index
    %c0_6 = arith.constant 0 : index
    %4 = vector.load %arg3[%c0_4, %c0_5, %c0_6] : memref<1x1x16xf32, #tpu.memory_space<vmem>>, vector<1x1x16xf32>
    %5 = vector.shape_cast %4 : vector<1x1x16xf32> to vector<1x16xf32>
    %c0_7 = arith.constant 0 : index
    %c0_8 = arith.constant 0 : index
    %c0_9 = arith.constant 0 : index
    %6 = vector.load %arg4[%c0_7, %c0_8, %c0_9] : memref<1x16x1xf32, #tpu.memory_space<vmem>>, vector<1x16x1xf32>
    %7 = vector.shape_cast %6 : vector<1x16x1xf32> to vector<16x1xf32>
    %cst = arith.constant 1.000000e+00 : f32
    %8 = vector.broadcast %cst : f32 to vector<16x1xf32>
    %9 = arith.subf %8, %7 : vector<16x1xf32>
    %cst_10 = arith.constant 0.000000e+00 : f32
    %10 = vector.broadcast %cst_10 : f32 to vector<4x32xf32>
    %c0_11 = arith.constant 0 : index
    %c0_12 = arith.constant 0 : index
    %c0_13 = arith.constant 0 : index
    %11 = vector.load %arg5[%c0_11, %c0_12, %c0_13] : memref<2x32x96xf32, #tpu.memory_space<vmem>>, vector<1x32x96xf32>
    %12 = vector.shape_cast %11 : vector<1x32x96xf32> to vector<32x96xf32>
    %cst_14 = arith.constant dense<0.000000e+00> : vector<16x96xf32>
    %13 = tpu.matmul %3, %12, %cst_14 {dimension_numbers = #tpu.dot_dimension_numbers<[1], [0], [0], [1], [0, 0, 1, 1], [], []>} : vector<16x32xf32>, vector<32x96xf32>, vector<16x96xf32> -> vector<16x96xf32>
    %c0_15 = arith.constant 0 : index
    %c0_16 = arith.constant 0 : index
    %c0_17 = arith.constant 0 : index
    %14 = vector.load %arg6[%c0_15, %c0_16, %c0_17] : memref<2x1x96xf32, #tpu.memory_space<vmem>>, vector<1x1x96xf32>
    %15 = vector.shape_cast %14 : vector<1x1x96xf32> to vector<1x96xf32>
    %16 = vector.broadcast %15 : vector<1x96xf32> to vector<16x96xf32>
    %17 = arith.addf %13, %16 : vector<16x96xf32>
    %18 = vector.extract_strided_slice %17 {offsets = [0, 0], sizes = [16, 16], strides = [1, 1]} : vector<16x96xf32> to vector<16x16xf32>
    %19 = vector.extract_strided_slice %17 {offsets = [0, 32], sizes = [16, 16], strides = [1, 1]} : vector<16x96xf32> to vector<16x16xf32>
    %20 = vector.extract_strided_slice %17 {offsets = [0, 64], sizes = [16, 16], strides = [1, 1]} : vector<16x96xf32> to vector<16x16xf32>
    %cst_18 = arith.constant dense<0.000000e+00> : vector<16x16xf32>
    %21 = tpu.matmul %18, %19, %cst_18 {dimension_numbers = #tpu.dot_dimension_numbers<[1], [1], [0], [0], [0, 0, 1, 0], [], []>} : vector<16x16xf32>, vector<16x16xf32>, vector<16x16xf32> -> vector<16x16xf32>
    %cst_19 = arith.constant 2.500000e-01 : f32
    %22 = vector.broadcast %cst_19 : f32 to vector<16x16xf32>
    %23 = arith.mulf %21, %22 : vector<16x16xf32>
    %cst_20 = arith.constant 5.000000e-01 : f32
    %24 = vector.broadcast %cst_20 : f32 to vector<1x16xf32>
    %25 = arith.cmpf ogt, %5, %24 : vector<1x16xf32>
    %cst_21 = arith.constant -1.000000e+09 : f32
    %26 = vector.broadcast %cst_21 : f32 to vector<16x16xf32>
    %27 = vector.shape_cast %25 : vector<1x16xi1> to vector<1x16xi1>
    %28 = vector.broadcast %27 : vector<1x16xi1> to vector<16x16xi1>
    %29 = arith.select %28, %26, %23 : vector<16x16xi1>, vector<16x16xf32>
    %cst_22 = arith.constant dense<0xFF800000> : vector<16xf32>
    %30 = vector.multi_reduction <maximumf>, %29, %cst_22 [1] : vector<16x16xf32> to vector<16xf32>
    %31 = vector.shape_cast %30 : vector<16xf32> to vector<16x1xf32>
    %32 = vector.broadcast %31 : vector<16x1xf32> to vector<16x16xf32>
    %33 = arith.subf %29, %32 : vector<16x16xf32>
    %34 = math.exp %33 : vector<16x16xf32>
    %cst_23 = arith.constant dense<0.000000e+00> : vector<16xf32>
    %35 = vector.multi_reduction <add>, %34, %cst_23 [1] : vector<16x16xf32> to vector<16xf32>
    %36 = vector.shape_cast %35 : vector<16xf32> to vector<16x1xf32>
    %37 = tpu.reciprocal %36 {approx = true} : vector<16x1xf32> -> vector<16x1xf32>
    %38 = vector.broadcast %37 : vector<16x1xf32> to vector<16x16xf32>
    %39 = arith.mulf %34, %38 : vector<16x16xf32>
    %cst_24 = arith.constant dense<0.000000e+00> : vector<16x16xf32>
    %40 = tpu.matmul %39, %20, %cst_24 {dimension_numbers = #tpu.dot_dimension_numbers<[1], [0], [0], [1], [0, 0, 1, 1], [], []>} : vector<16x16xf32>, vector<16x16xf32>, vector<16x16xf32> -> vector<16x16xf32>
    %41 = vector.extract_strided_slice %17 {offsets = [0, 16], sizes = [16, 16], strides = [1, 1]} : vector<16x96xf32> to vector<16x16xf32>
    %42 = vector.extract_strided_slice %17 {offsets = [0, 48], sizes = [16, 16], strides = [1, 1]} : vector<16x96xf32> to vector<16x16xf32>
    %43 = vector.extract_strided_slice %17 {offsets = [0, 80], sizes = [16, 16], strides = [1, 1]} : vector<16x96xf32> to vector<16x16xf32>
    %cst_25 = arith.constant dense<0.000000e+00> : vector<16x16xf32>
    %44 = tpu.matmul %41, %42, %cst_25 {dimension_numbers = #tpu.dot_dimension_numbers<[1], [1], [0], [0], [0, 0, 1, 0], [], []>} : vector<16x16xf32>, vector<16x16xf32>, vector<16x16xf32> -> vector<16x16xf32>
    %cst_26 = arith.constant 2.500000e-01 : f32
    %45 = vector.broadcast %cst_26 : f32 to vector<16x16xf32>
    %46 = arith.mulf %44, %45 : vector<16x16xf32>
    %cst_27 = arith.constant 5.000000e-01 : f32
    %47 = vector.broadcast %cst_27 : f32 to vector<1x16xf32>
    %48 = arith.cmpf ogt, %5, %47 : vector<1x16xf32>
    %cst_28 = arith.constant -1.000000e+09 : f32
    %49 = vector.broadcast %cst_28 : f32 to vector<16x16xf32>
    %50 = vector.shape_cast %48 : vector<1x16xi1> to vector<1x16xi1>
    %51 = vector.broadcast %50 : vector<1x16xi1> to vector<16x16xi1>
    %52 = arith.select %51, %49, %46 : vector<16x16xi1>, vector<16x16xf32>
    %cst_29 = arith.constant dense<0xFF800000> : vector<16xf32>
    %53 = vector.multi_reduction <maximumf>, %52, %cst_29 [1] : vector<16x16xf32> to vector<16xf32>
    %54 = vector.shape_cast %53 : vector<16xf32> to vector<16x1xf32>
    %55 = vector.broadcast %54 : vector<16x1xf32> to vector<16x16xf32>
    %56 = arith.subf %52, %55 : vector<16x16xf32>
    %57 = math.exp %56 : vector<16x16xf32>
    %cst_30 = arith.constant dense<0.000000e+00> : vector<16xf32>
    %58 = vector.multi_reduction <add>, %57, %cst_30 [1] : vector<16x16xf32> to vector<16xf32>
    %59 = vector.shape_cast %58 : vector<16xf32> to vector<16x1xf32>
    %60 = tpu.reciprocal %59 {approx = true} : vector<16x1xf32> -> vector<16x1xf32>
    %61 = vector.broadcast %60 : vector<16x1xf32> to vector<16x16xf32>
    %62 = arith.mulf %57, %61 : vector<16x16xf32>
    %cst_31 = arith.constant dense<0.000000e+00> : vector<16x16xf32>
    %63 = tpu.matmul %62, %43, %cst_31 {dimension_numbers = #tpu.dot_dimension_numbers<[1], [0], [0], [1], [0, 0, 1, 1], [], []>} : vector<16x16xf32>, vector<16x16xf32>, vector<16x16xf32> -> vector<16x16xf32>
    %64 = tpu.concatenate %40, %63 in 1 : vector<16x16xf32>, vector<16x16xf32> -> vector<16x32xf32>
    %c0_32 = arith.constant 0 : index
    %c0_33 = arith.constant 0 : index
    %c0_34 = arith.constant 0 : index
    %65 = vector.load %arg7[%c0_32, %c0_33, %c0_34] : memref<2x32x32xf32, #tpu.memory_space<vmem>>, vector<1x32x32xf32>
    %66 = vector.shape_cast %65 : vector<1x32x32xf32> to vector<32x32xf32>
    %cst_35 = arith.constant dense<0.000000e+00> : vector<16x32xf32>
    %67 = tpu.matmul %64, %66, %cst_35 {dimension_numbers = #tpu.dot_dimension_numbers<[1], [0], [0], [1], [0, 0, 1, 1], [], []>} : vector<16x32xf32>, vector<32x32xf32>, vector<16x32xf32> -> vector<16x32xf32>
    %c0_36 = arith.constant 0 : index
    %c0_37 = arith.constant 0 : index
    %c0_38 = arith.constant 0 : index
    %68 = vector.load %arg8[%c0_36, %c0_37, %c0_38] : memref<2x1x32xf32, #tpu.memory_space<vmem>>, vector<1x1x32xf32>
    %69 = vector.shape_cast %68 : vector<1x1x32xf32> to vector<1x32xf32>
    %70 = vector.broadcast %69 : vector<1x32xf32> to vector<16x32xf32>
    %71 = arith.addf %67, %70 : vector<16x32xf32>
    %72 = arith.addf %71, %3 : vector<16x32xf32>
    %c0_39 = arith.constant 0 : index
    %c0_40 = arith.constant 0 : index
    %c0_41 = arith.constant 0 : index
    %73 = vector.load %arg9[%c0_39, %c0_40, %c0_41] : memref<2x1x32xf32, #tpu.memory_space<vmem>>, vector<1x1x32xf32>
    %74 = vector.shape_cast %73 : vector<1x1x32xf32> to vector<1x32xf32>
    %c0_42 = arith.constant 0 : index
    %c0_43 = arith.constant 0 : index
    %c0_44 = arith.constant 0 : index
    %75 = vector.load %arg10[%c0_42, %c0_43, %c0_44] : memref<2x1x32xf32, #tpu.memory_space<vmem>>, vector<1x1x32xf32>
    %76 = vector.shape_cast %75 : vector<1x1x32xf32> to vector<1x32xf32>
    %cst_45 = arith.constant dense<0.000000e+00> : vector<16xf32>
    %77 = vector.multi_reduction <add>, %72, %cst_45 [1] : vector<16x32xf32> to vector<16xf32>
    %78 = vector.shape_cast %77 : vector<16xf32> to vector<16x1xf32>
    %cst_46 = arith.constant 3.200000e+01 : f32
    %79 = vector.broadcast %cst_46 : f32 to vector<16x1xf32>
    %80 = arith.divf %78, %79 : vector<16x1xf32>
    %81 = vector.broadcast %80 : vector<16x1xf32> to vector<16x32xf32>
    %82 = arith.subf %72, %81 : vector<16x32xf32>
    %83 = arith.mulf %82, %82 : vector<16x32xf32>
    %cst_47 = arith.constant dense<0.000000e+00> : vector<16xf32>
    %84 = vector.multi_reduction <add>, %83, %cst_47 [1] : vector<16x32xf32> to vector<16xf32>
    %85 = vector.shape_cast %84 : vector<16xf32> to vector<16x1xf32>
    %cst_48 = arith.constant 3.200000e+01 : f32
    %86 = vector.broadcast %cst_48 : f32 to vector<16x1xf32>
    %87 = arith.divf %85, %86 : vector<16x1xf32>
    %88 = vector.broadcast %80 : vector<16x1xf32> to vector<16x32xf32>
    %89 = arith.subf %72, %88 : vector<16x32xf32>
    %cst_49 = arith.constant 9.99999974E-6 : f32
    %90 = vector.broadcast %cst_49 : f32 to vector<16x1xf32>
    %91 = arith.addf %87, %90 : vector<16x1xf32>
    %92 = math.rsqrt %91 : vector<16x1xf32>
    %93 = vector.broadcast %92 : vector<16x1xf32> to vector<16x32xf32>
    %94 = arith.mulf %89, %93 : vector<16x32xf32>
    %95 = vector.broadcast %74 : vector<1x32xf32> to vector<16x32xf32>
    %96 = arith.mulf %94, %95 : vector<16x32xf32>
    %97 = vector.broadcast %76 : vector<1x32xf32> to vector<16x32xf32>
    %98 = arith.addf %96, %97 : vector<16x32xf32>
    %99 = vector.broadcast %9 : vector<16x1xf32> to vector<16x32xf32>
    %100 = arith.mulf %98, %99 : vector<16x32xf32>
    %101 = tpu.concatenate %10, %100, %10 in 0 : vector<4x32xf32>, vector<16x32xf32>, vector<4x32xf32> -> vector<24x32xf32>
    %102 = vector.extract_strided_slice %101 {offsets = [0, 0], sizes = [16, 32], strides = [1, 1]} : vector<24x32xf32> to vector<16x32xf32>
    %103 = vector.extract_strided_slice %101 {offsets = [1, 0], sizes = [16, 32], strides = [1, 1]} : vector<24x32xf32> to vector<16x32xf32>
    %104 = vector.extract_strided_slice %101 {offsets = [2, 0], sizes = [16, 32], strides = [1, 1]} : vector<24x32xf32> to vector<16x32xf32>
    %105 = vector.extract_strided_slice %101 {offsets = [3, 0], sizes = [16, 32], strides = [1, 1]} : vector<24x32xf32> to vector<16x32xf32>
    %106 = vector.extract_strided_slice %101 {offsets = [4, 0], sizes = [16, 32], strides = [1, 1]} : vector<24x32xf32> to vector<16x32xf32>
    %107 = vector.extract_strided_slice %101 {offsets = [5, 0], sizes = [16, 32], strides = [1, 1]} : vector<24x32xf32> to vector<16x32xf32>
    %108 = vector.extract_strided_slice %101 {offsets = [6, 0], sizes = [16, 32], strides = [1, 1]} : vector<24x32xf32> to vector<16x32xf32>
    %109 = vector.extract_strided_slice %101 {offsets = [7, 0], sizes = [16, 32], strides = [1, 1]} : vector<24x32xf32> to vector<16x32xf32>
    %110 = vector.extract_strided_slice %101 {offsets = [8, 0], sizes = [16, 32], strides = [1, 1]} : vector<24x32xf32> to vector<16x32xf32>
    %111 = tpu.concatenate %102, %103, %104, %105, %106, %107, %108, %109, %110 in 1 : vector<16x32xf32>, vector<16x32xf32>, vector<16x32xf32>, vector<16x32xf32>, vector<16x32xf32>, vector<16x32xf32>, vector<16x32xf32>, vector<16x32xf32>, vector<16x32xf32> -> vector<16x288xf32>
    %c0_50 = arith.constant 0 : index
    %c0_51 = arith.constant 0 : index
    %c0_52 = arith.constant 0 : index
    %112 = vector.load %arg11[%c0_50, %c0_51, %c0_52] : memref<2x288x64xf32, #tpu.memory_space<vmem>>, vector<1x288x64xf32>
    %113 = vector.shape_cast %112 : vector<1x288x64xf32> to vector<288x64xf32>
    %cst_53 = arith.constant dense<0.000000e+00> : vector<16x64xf32>
    %114 = tpu.matmul %111, %113, %cst_53 {dimension_numbers = #tpu.dot_dimension_numbers<[1], [0], [0], [1], [0, 0, 1, 1], [], []>} : vector<16x288xf32>, vector<288x64xf32>, vector<16x64xf32> -> vector<16x64xf32>
    %c0_54 = arith.constant 0 : index
    %c0_55 = arith.constant 0 : index
    %c0_56 = arith.constant 0 : index
    %115 = vector.load %arg12[%c0_54, %c0_55, %c0_56] : memref<2x1x64xf32, #tpu.memory_space<vmem>>, vector<1x1x64xf32>
    %116 = vector.shape_cast %115 : vector<1x1x64xf32> to vector<1x64xf32>
    %117 = vector.broadcast %116 : vector<1x64xf32> to vector<16x64xf32>
    %118 = arith.addf %114, %117 : vector<16x64xf32>
    %cst_57 = arith.constant 0.000000e+00 : f32
    %119 = vector.broadcast %cst_57 : f32 to vector<16x64xf32>
    %120 = arith.maximumf %118, %119 : vector<16x64xf32>
    %c0_58 = arith.constant 0 : index
    %c0_59 = arith.constant 0 : index
    %c0_60 = arith.constant 0 : index
    %121 = vector.load %arg13[%c0_58, %c0_59, %c0_60] : memref<2x64x32xf32, #tpu.memory_space<vmem>>, vector<1x64x32xf32>
    %122 = vector.shape_cast %121 : vector<1x64x32xf32> to vector<64x32xf32>
    %cst_61 = arith.constant dense<0.000000e+00> : vector<16x32xf32>
    %123 = tpu.matmul %120, %122, %cst_61 {dimension_numbers = #tpu.dot_dimension_numbers<[1], [0], [0], [1], [0, 0, 1, 1], [], []>} : vector<16x64xf32>, vector<64x32xf32>, vector<16x32xf32> -> vector<16x32xf32>
    %c0_62 = arith.constant 0 : index
    %c0_63 = arith.constant 0 : index
    %c0_64 = arith.constant 0 : index
    %124 = vector.load %arg14[%c0_62, %c0_63, %c0_64] : memref<2x1x32xf32, #tpu.memory_space<vmem>>, vector<1x1x32xf32>
    %125 = vector.shape_cast %124 : vector<1x1x32xf32> to vector<1x32xf32>
    %126 = vector.broadcast %125 : vector<1x32xf32> to vector<16x32xf32>
    %127 = arith.addf %123, %126 : vector<16x32xf32>
    %128 = arith.addf %127, %100 : vector<16x32xf32>
    %c0_65 = arith.constant 0 : index
    %c0_66 = arith.constant 0 : index
    %c0_67 = arith.constant 0 : index
    %129 = vector.load %arg15[%c0_65, %c0_66, %c0_67] : memref<2x1x32xf32, #tpu.memory_space<vmem>>, vector<1x1x32xf32>
    %130 = vector.shape_cast %129 : vector<1x1x32xf32> to vector<1x32xf32>
    %c0_68 = arith.constant 0 : index
    %c0_69 = arith.constant 0 : index
    %c0_70 = arith.constant 0 : index
    %131 = vector.load %arg16[%c0_68, %c0_69, %c0_70] : memref<2x1x32xf32, #tpu.memory_space<vmem>>, vector<1x1x32xf32>
    %132 = vector.shape_cast %131 : vector<1x1x32xf32> to vector<1x32xf32>
    %cst_71 = arith.constant dense<0.000000e+00> : vector<16xf32>
    %133 = vector.multi_reduction <add>, %128, %cst_71 [1] : vector<16x32xf32> to vector<16xf32>
    %134 = vector.shape_cast %133 : vector<16xf32> to vector<16x1xf32>
    %cst_72 = arith.constant 3.200000e+01 : f32
    %135 = vector.broadcast %cst_72 : f32 to vector<16x1xf32>
    %136 = arith.divf %134, %135 : vector<16x1xf32>
    %137 = vector.broadcast %136 : vector<16x1xf32> to vector<16x32xf32>
    %138 = arith.subf %128, %137 : vector<16x32xf32>
    %139 = arith.mulf %138, %138 : vector<16x32xf32>
    %cst_73 = arith.constant dense<0.000000e+00> : vector<16xf32>
    %140 = vector.multi_reduction <add>, %139, %cst_73 [1] : vector<16x32xf32> to vector<16xf32>
    %141 = vector.shape_cast %140 : vector<16xf32> to vector<16x1xf32>
    %cst_74 = arith.constant 3.200000e+01 : f32
    %142 = vector.broadcast %cst_74 : f32 to vector<16x1xf32>
    %143 = arith.divf %141, %142 : vector<16x1xf32>
    %144 = vector.broadcast %136 : vector<16x1xf32> to vector<16x32xf32>
    %145 = arith.subf %128, %144 : vector<16x32xf32>
    %cst_75 = arith.constant 9.99999974E-6 : f32
    %146 = vector.broadcast %cst_75 : f32 to vector<16x1xf32>
    %147 = arith.addf %143, %146 : vector<16x1xf32>
    %148 = math.rsqrt %147 : vector<16x1xf32>
    %149 = vector.broadcast %148 : vector<16x1xf32> to vector<16x32xf32>
    %150 = arith.mulf %145, %149 : vector<16x32xf32>
    %151 = vector.broadcast %130 : vector<1x32xf32> to vector<16x32xf32>
    %152 = arith.mulf %150, %151 : vector<16x32xf32>
    %153 = vector.broadcast %132 : vector<1x32xf32> to vector<16x32xf32>
    %154 = arith.addf %152, %153 : vector<16x32xf32>
    %155 = vector.broadcast %9 : vector<16x1xf32> to vector<16x32xf32>
    %156 = arith.mulf %154, %155 : vector<16x32xf32>
    %c1 = arith.constant 1 : index
    %c0_76 = arith.constant 0 : index
    %c0_77 = arith.constant 0 : index
    %157 = vector.load %arg5[%c1, %c0_76, %c0_77] : memref<2x32x96xf32, #tpu.memory_space<vmem>>, vector<1x32x96xf32>
    %158 = vector.shape_cast %157 : vector<1x32x96xf32> to vector<32x96xf32>
    %cst_78 = arith.constant dense<0.000000e+00> : vector<16x96xf32>
    %159 = tpu.matmul %156, %158, %cst_78 {dimension_numbers = #tpu.dot_dimension_numbers<[1], [0], [0], [1], [0, 0, 1, 1], [], []>} : vector<16x32xf32>, vector<32x96xf32>, vector<16x96xf32> -> vector<16x96xf32>
    %c1_79 = arith.constant 1 : index
    %c0_80 = arith.constant 0 : index
    %c0_81 = arith.constant 0 : index
    %160 = vector.load %arg6[%c1_79, %c0_80, %c0_81] : memref<2x1x96xf32, #tpu.memory_space<vmem>>, vector<1x1x96xf32>
    %161 = vector.shape_cast %160 : vector<1x1x96xf32> to vector<1x96xf32>
    %162 = vector.broadcast %161 : vector<1x96xf32> to vector<16x96xf32>
    %163 = arith.addf %159, %162 : vector<16x96xf32>
    %164 = vector.extract_strided_slice %163 {offsets = [0, 0], sizes = [16, 16], strides = [1, 1]} : vector<16x96xf32> to vector<16x16xf32>
    %165 = vector.extract_strided_slice %163 {offsets = [0, 32], sizes = [16, 16], strides = [1, 1]} : vector<16x96xf32> to vector<16x16xf32>
    %166 = vector.extract_strided_slice %163 {offsets = [0, 64], sizes = [16, 16], strides = [1, 1]} : vector<16x96xf32> to vector<16x16xf32>
    %cst_82 = arith.constant dense<0.000000e+00> : vector<16x16xf32>
    %167 = tpu.matmul %164, %165, %cst_82 {dimension_numbers = #tpu.dot_dimension_numbers<[1], [1], [0], [0], [0, 0, 1, 0], [], []>} : vector<16x16xf32>, vector<16x16xf32>, vector<16x16xf32> -> vector<16x16xf32>
    %cst_83 = arith.constant 2.500000e-01 : f32
    %168 = vector.broadcast %cst_83 : f32 to vector<16x16xf32>
    %169 = arith.mulf %167, %168 : vector<16x16xf32>
    %cst_84 = arith.constant 5.000000e-01 : f32
    %170 = vector.broadcast %cst_84 : f32 to vector<1x16xf32>
    %171 = arith.cmpf ogt, %5, %170 : vector<1x16xf32>
    %cst_85 = arith.constant -1.000000e+09 : f32
    %172 = vector.broadcast %cst_85 : f32 to vector<16x16xf32>
    %173 = vector.shape_cast %171 : vector<1x16xi1> to vector<1x16xi1>
    %174 = vector.broadcast %173 : vector<1x16xi1> to vector<16x16xi1>
    %175 = arith.select %174, %172, %169 : vector<16x16xi1>, vector<16x16xf32>
    %cst_86 = arith.constant dense<0xFF800000> : vector<16xf32>
    %176 = vector.multi_reduction <maximumf>, %175, %cst_86 [1] : vector<16x16xf32> to vector<16xf32>
    %177 = vector.shape_cast %176 : vector<16xf32> to vector<16x1xf32>
    %178 = vector.broadcast %177 : vector<16x1xf32> to vector<16x16xf32>
    %179 = arith.subf %175, %178 : vector<16x16xf32>
    %180 = math.exp %179 : vector<16x16xf32>
    %cst_87 = arith.constant dense<0.000000e+00> : vector<16xf32>
    %181 = vector.multi_reduction <add>, %180, %cst_87 [1] : vector<16x16xf32> to vector<16xf32>
    %182 = vector.shape_cast %181 : vector<16xf32> to vector<16x1xf32>
    %183 = tpu.reciprocal %182 {approx = true} : vector<16x1xf32> -> vector<16x1xf32>
    %184 = vector.broadcast %183 : vector<16x1xf32> to vector<16x16xf32>
    %185 = arith.mulf %180, %184 : vector<16x16xf32>
    %cst_88 = arith.constant dense<0.000000e+00> : vector<16x16xf32>
    %186 = tpu.matmul %185, %166, %cst_88 {dimension_numbers = #tpu.dot_dimension_numbers<[1], [0], [0], [1], [0, 0, 1, 1], [], []>} : vector<16x16xf32>, vector<16x16xf32>, vector<16x16xf32> -> vector<16x16xf32>
    %187 = vector.extract_strided_slice %163 {offsets = [0, 16], sizes = [16, 16], strides = [1, 1]} : vector<16x96xf32> to vector<16x16xf32>
    %188 = vector.extract_strided_slice %163 {offsets = [0, 48], sizes = [16, 16], strides = [1, 1]} : vector<16x96xf32> to vector<16x16xf32>
    %189 = vector.extract_strided_slice %163 {offsets = [0, 80], sizes = [16, 16], strides = [1, 1]} : vector<16x96xf32> to vector<16x16xf32>
    %cst_89 = arith.constant dense<0.000000e+00> : vector<16x16xf32>
    %190 = tpu.matmul %187, %188, %cst_89 {dimension_numbers = #tpu.dot_dimension_numbers<[1], [1], [0], [0], [0, 0, 1, 0], [], []>} : vector<16x16xf32>, vector<16x16xf32>, vector<16x16xf32> -> vector<16x16xf32>
    %cst_90 = arith.constant 2.500000e-01 : f32
    %191 = vector.broadcast %cst_90 : f32 to vector<16x16xf32>
    %192 = arith.mulf %190, %191 : vector<16x16xf32>
    %cst_91 = arith.constant 5.000000e-01 : f32
    %193 = vector.broadcast %cst_91 : f32 to vector<1x16xf32>
    %194 = arith.cmpf ogt, %5, %193 : vector<1x16xf32>
    %cst_92 = arith.constant -1.000000e+09 : f32
    %195 = vector.broadcast %cst_92 : f32 to vector<16x16xf32>
    %196 = vector.shape_cast %194 : vector<1x16xi1> to vector<1x16xi1>
    %197 = vector.broadcast %196 : vector<1x16xi1> to vector<16x16xi1>
    %198 = arith.select %197, %195, %192 : vector<16x16xi1>, vector<16x16xf32>
    %cst_93 = arith.constant dense<0xFF800000> : vector<16xf32>
    %199 = vector.multi_reduction <maximumf>, %198, %cst_93 [1] : vector<16x16xf32> to vector<16xf32>
    %200 = vector.shape_cast %199 : vector<16xf32> to vector<16x1xf32>
    %201 = vector.broadcast %200 : vector<16x1xf32> to vector<16x16xf32>
    %202 = arith.subf %198, %201 : vector<16x16xf32>
    %203 = math.exp %202 : vector<16x16xf32>
    %cst_94 = arith.constant dense<0.000000e+00> : vector<16xf32>
    %204 = vector.multi_reduction <add>, %203, %cst_94 [1] : vector<16x16xf32> to vector<16xf32>
    %205 = vector.shape_cast %204 : vector<16xf32> to vector<16x1xf32>
    %206 = tpu.reciprocal %205 {approx = true} : vector<16x1xf32> -> vector<16x1xf32>
    %207 = vector.broadcast %206 : vector<16x1xf32> to vector<16x16xf32>
    %208 = arith.mulf %203, %207 : vector<16x16xf32>
    %cst_95 = arith.constant dense<0.000000e+00> : vector<16x16xf32>
    %209 = tpu.matmul %208, %189, %cst_95 {dimension_numbers = #tpu.dot_dimension_numbers<[1], [0], [0], [1], [0, 0, 1, 1], [], []>} : vector<16x16xf32>, vector<16x16xf32>, vector<16x16xf32> -> vector<16x16xf32>
    %210 = tpu.concatenate %186, %209 in 1 : vector<16x16xf32>, vector<16x16xf32> -> vector<16x32xf32>
    %c1_96 = arith.constant 1 : index
    %c0_97 = arith.constant 0 : index
    %c0_98 = arith.constant 0 : index
    %211 = vector.load %arg7[%c1_96, %c0_97, %c0_98] : memref<2x32x32xf32, #tpu.memory_space<vmem>>, vector<1x32x32xf32>
    %212 = vector.shape_cast %211 : vector<1x32x32xf32> to vector<32x32xf32>
    %cst_99 = arith.constant dense<0.000000e+00> : vector<16x32xf32>
    %213 = tpu.matmul %210, %212, %cst_99 {dimension_numbers = #tpu.dot_dimension_numbers<[1], [0], [0], [1], [0, 0, 1, 1], [], []>} : vector<16x32xf32>, vector<32x32xf32>, vector<16x32xf32> -> vector<16x32xf32>
    %c1_100 = arith.constant 1 : index
    %c0_101 = arith.constant 0 : index
    %c0_102 = arith.constant 0 : index
    %214 = vector.load %arg8[%c1_100, %c0_101, %c0_102] : memref<2x1x32xf32, #tpu.memory_space<vmem>>, vector<1x1x32xf32>
    %215 = vector.shape_cast %214 : vector<1x1x32xf32> to vector<1x32xf32>
    %216 = vector.broadcast %215 : vector<1x32xf32> to vector<16x32xf32>
    %217 = arith.addf %213, %216 : vector<16x32xf32>
    %218 = arith.addf %217, %156 : vector<16x32xf32>
    %c1_103 = arith.constant 1 : index
    %c0_104 = arith.constant 0 : index
    %c0_105 = arith.constant 0 : index
    %219 = vector.load %arg9[%c1_103, %c0_104, %c0_105] : memref<2x1x32xf32, #tpu.memory_space<vmem>>, vector<1x1x32xf32>
    %220 = vector.shape_cast %219 : vector<1x1x32xf32> to vector<1x32xf32>
    %c1_106 = arith.constant 1 : index
    %c0_107 = arith.constant 0 : index
    %c0_108 = arith.constant 0 : index
    %221 = vector.load %arg10[%c1_106, %c0_107, %c0_108] : memref<2x1x32xf32, #tpu.memory_space<vmem>>, vector<1x1x32xf32>
    %222 = vector.shape_cast %221 : vector<1x1x32xf32> to vector<1x32xf32>
    %cst_109 = arith.constant dense<0.000000e+00> : vector<16xf32>
    %223 = vector.multi_reduction <add>, %218, %cst_109 [1] : vector<16x32xf32> to vector<16xf32>
    %224 = vector.shape_cast %223 : vector<16xf32> to vector<16x1xf32>
    %cst_110 = arith.constant 3.200000e+01 : f32
    %225 = vector.broadcast %cst_110 : f32 to vector<16x1xf32>
    %226 = arith.divf %224, %225 : vector<16x1xf32>
    %227 = vector.broadcast %226 : vector<16x1xf32> to vector<16x32xf32>
    %228 = arith.subf %218, %227 : vector<16x32xf32>
    %229 = arith.mulf %228, %228 : vector<16x32xf32>
    %cst_111 = arith.constant dense<0.000000e+00> : vector<16xf32>
    %230 = vector.multi_reduction <add>, %229, %cst_111 [1] : vector<16x32xf32> to vector<16xf32>
    %231 = vector.shape_cast %230 : vector<16xf32> to vector<16x1xf32>
    %cst_112 = arith.constant 3.200000e+01 : f32
    %232 = vector.broadcast %cst_112 : f32 to vector<16x1xf32>
    %233 = arith.divf %231, %232 : vector<16x1xf32>
    %234 = vector.broadcast %226 : vector<16x1xf32> to vector<16x32xf32>
    %235 = arith.subf %218, %234 : vector<16x32xf32>
    %cst_113 = arith.constant 9.99999974E-6 : f32
    %236 = vector.broadcast %cst_113 : f32 to vector<16x1xf32>
    %237 = arith.addf %233, %236 : vector<16x1xf32>
    %238 = math.rsqrt %237 : vector<16x1xf32>
    %239 = vector.broadcast %238 : vector<16x1xf32> to vector<16x32xf32>
    %240 = arith.mulf %235, %239 : vector<16x32xf32>
    %241 = vector.broadcast %220 : vector<1x32xf32> to vector<16x32xf32>
    %242 = arith.mulf %240, %241 : vector<16x32xf32>
    %243 = vector.broadcast %222 : vector<1x32xf32> to vector<16x32xf32>
    %244 = arith.addf %242, %243 : vector<16x32xf32>
    %245 = vector.broadcast %9 : vector<16x1xf32> to vector<16x32xf32>
    %246 = arith.mulf %244, %245 : vector<16x32xf32>
    %247 = tpu.concatenate %10, %246, %10 in 0 : vector<4x32xf32>, vector<16x32xf32>, vector<4x32xf32> -> vector<24x32xf32>
    %248 = vector.extract_strided_slice %247 {offsets = [0, 0], sizes = [16, 32], strides = [1, 1]} : vector<24x32xf32> to vector<16x32xf32>
    %249 = vector.extract_strided_slice %247 {offsets = [1, 0], sizes = [16, 32], strides = [1, 1]} : vector<24x32xf32> to vector<16x32xf32>
    %250 = vector.extract_strided_slice %247 {offsets = [2, 0], sizes = [16, 32], strides = [1, 1]} : vector<24x32xf32> to vector<16x32xf32>
    %251 = vector.extract_strided_slice %247 {offsets = [3, 0], sizes = [16, 32], strides = [1, 1]} : vector<24x32xf32> to vector<16x32xf32>
    %252 = vector.extract_strided_slice %247 {offsets = [4, 0], sizes = [16, 32], strides = [1, 1]} : vector<24x32xf32> to vector<16x32xf32>
    %253 = vector.extract_strided_slice %247 {offsets = [5, 0], sizes = [16, 32], strides = [1, 1]} : vector<24x32xf32> to vector<16x32xf32>
    %254 = vector.extract_strided_slice %247 {offsets = [6, 0], sizes = [16, 32], strides = [1, 1]} : vector<24x32xf32> to vector<16x32xf32>
    %255 = vector.extract_strided_slice %247 {offsets = [7, 0], sizes = [16, 32], strides = [1, 1]} : vector<24x32xf32> to vector<16x32xf32>
    %256 = vector.extract_strided_slice %247 {offsets = [8, 0], sizes = [16, 32], strides = [1, 1]} : vector<24x32xf32> to vector<16x32xf32>
    %257 = tpu.concatenate %248, %249, %250, %251, %252, %253, %254, %255, %256 in 1 : vector<16x32xf32>, vector<16x32xf32>, vector<16x32xf32>, vector<16x32xf32>, vector<16x32xf32>, vector<16x32xf32>, vector<16x32xf32>, vector<16x32xf32>, vector<16x32xf32> -> vector<16x288xf32>
    %c1_114 = arith.constant 1 : index
    %c0_115 = arith.constant 0 : index
    %c0_116 = arith.constant 0 : index
    %258 = vector.load %arg11[%c1_114, %c0_115, %c0_116] : memref<2x288x64xf32, #tpu.memory_space<vmem>>, vector<1x288x64xf32>
    %259 = vector.shape_cast %258 : vector<1x288x64xf32> to vector<288x64xf32>
    %cst_117 = arith.constant dense<0.000000e+00> : vector<16x64xf32>
    %260 = tpu.matmul %257, %259, %cst_117 {dimension_numbers = #tpu.dot_dimension_numbers<[1], [0], [0], [1], [0, 0, 1, 1], [], []>} : vector<16x288xf32>, vector<288x64xf32>, vector<16x64xf32> -> vector<16x64xf32>
    %c1_118 = arith.constant 1 : index
    %c0_119 = arith.constant 0 : index
    %c0_120 = arith.constant 0 : index
    %261 = vector.load %arg12[%c1_118, %c0_119, %c0_120] : memref<2x1x64xf32, #tpu.memory_space<vmem>>, vector<1x1x64xf32>
    %262 = vector.shape_cast %261 : vector<1x1x64xf32> to vector<1x64xf32>
    %263 = vector.broadcast %262 : vector<1x64xf32> to vector<16x64xf32>
    %264 = arith.addf %260, %263 : vector<16x64xf32>
    %cst_121 = arith.constant 0.000000e+00 : f32
    %265 = vector.broadcast %cst_121 : f32 to vector<16x64xf32>
    %266 = arith.maximumf %264, %265 : vector<16x64xf32>
    %c1_122 = arith.constant 1 : index
    %c0_123 = arith.constant 0 : index
    %c0_124 = arith.constant 0 : index
    %267 = vector.load %arg13[%c1_122, %c0_123, %c0_124] : memref<2x64x32xf32, #tpu.memory_space<vmem>>, vector<1x64x32xf32>
    %268 = vector.shape_cast %267 : vector<1x64x32xf32> to vector<64x32xf32>
    %cst_125 = arith.constant dense<0.000000e+00> : vector<16x32xf32>
    %269 = tpu.matmul %266, %268, %cst_125 {dimension_numbers = #tpu.dot_dimension_numbers<[1], [0], [0], [1], [0, 0, 1, 1], [], []>} : vector<16x64xf32>, vector<64x32xf32>, vector<16x32xf32> -> vector<16x32xf32>
    %c1_126 = arith.constant 1 : index
    %c0_127 = arith.constant 0 : index
    %c0_128 = arith.constant 0 : index
    %270 = vector.load %arg14[%c1_126, %c0_127, %c0_128] : memref<2x1x32xf32, #tpu.memory_space<vmem>>, vector<1x1x32xf32>
    %271 = vector.shape_cast %270 : vector<1x1x32xf32> to vector<1x32xf32>
    %272 = vector.broadcast %271 : vector<1x32xf32> to vector<16x32xf32>
    %273 = arith.addf %269, %272 : vector<16x32xf32>
    %274 = arith.addf %273, %246 : vector<16x32xf32>
    %c1_129 = arith.constant 1 : index
    %c0_130 = arith.constant 0 : index
    %c0_131 = arith.constant 0 : index
    %275 = vector.load %arg15[%c1_129, %c0_130, %c0_131] : memref<2x1x32xf32, #tpu.memory_space<vmem>>, vector<1x1x32xf32>
    %276 = vector.shape_cast %275 : vector<1x1x32xf32> to vector<1x32xf32>
    %c1_132 = arith.constant 1 : index
    %c0_133 = arith.constant 0 : index
    %c0_134 = arith.constant 0 : index
    %277 = vector.load %arg16[%c1_132, %c0_133, %c0_134] : memref<2x1x32xf32, #tpu.memory_space<vmem>>, vector<1x1x32xf32>
    %278 = vector.shape_cast %277 : vector<1x1x32xf32> to vector<1x32xf32>
    %cst_135 = arith.constant dense<0.000000e+00> : vector<16xf32>
    %279 = vector.multi_reduction <add>, %274, %cst_135 [1] : vector<16x32xf32> to vector<16xf32>
    %280 = vector.shape_cast %279 : vector<16xf32> to vector<16x1xf32>
    %cst_136 = arith.constant 3.200000e+01 : f32
    %281 = vector.broadcast %cst_136 : f32 to vector<16x1xf32>
    %282 = arith.divf %280, %281 : vector<16x1xf32>
    %283 = vector.broadcast %282 : vector<16x1xf32> to vector<16x32xf32>
    %284 = arith.subf %274, %283 : vector<16x32xf32>
    %285 = arith.mulf %284, %284 : vector<16x32xf32>
    %cst_137 = arith.constant dense<0.000000e+00> : vector<16xf32>
    %286 = vector.multi_reduction <add>, %285, %cst_137 [1] : vector<16x32xf32> to vector<16xf32>
    %287 = vector.shape_cast %286 : vector<16xf32> to vector<16x1xf32>
    %cst_138 = arith.constant 3.200000e+01 : f32
    %288 = vector.broadcast %cst_138 : f32 to vector<16x1xf32>
    %289 = arith.divf %287, %288 : vector<16x1xf32>
    %290 = vector.broadcast %282 : vector<16x1xf32> to vector<16x32xf32>
    %291 = arith.subf %274, %290 : vector<16x32xf32>
    %cst_139 = arith.constant 9.99999974E-6 : f32
    %292 = vector.broadcast %cst_139 : f32 to vector<16x1xf32>
    %293 = arith.addf %289, %292 : vector<16x1xf32>
    %294 = math.rsqrt %293 : vector<16x1xf32>
    %295 = vector.broadcast %294 : vector<16x1xf32> to vector<16x32xf32>
    %296 = arith.mulf %291, %295 : vector<16x32xf32>
    %297 = vector.broadcast %276 : vector<1x32xf32> to vector<16x32xf32>
    %298 = arith.mulf %296, %297 : vector<16x32xf32>
    %299 = vector.broadcast %278 : vector<1x32xf32> to vector<16x32xf32>
    %300 = arith.addf %298, %299 : vector<16x32xf32>
    %301 = vector.broadcast %9 : vector<16x1xf32> to vector<16x32xf32>
    %302 = arith.mulf %300, %301 : vector<16x32xf32>
    %c0_140 = arith.constant 0 : index
    %c0_141 = arith.constant 0 : index
    %c0_142 = arith.constant 0 : index
    %303 = vector.load %arg17[%c0_140, %c0_141, %c0_142] : memref<1x16x32xf32, #tpu.memory_space<vmem>>, vector<1x16x32xf32>
    %304 = vector.shape_cast %303 : vector<1x16x32xf32> to vector<16x32xf32>
    %305 = vector.shape_cast %302 : vector<16x32xf32> to vector<1x16x32xf32>
    tpu.vector_store %arg17[%c0_140, %c0_141, %c0_142], %305 {strides = array<i32>} : memref<1x16x32xf32, #tpu.memory_space<vmem>>, vector<1x16x32xf32>,
    return
  }
  func.func @transform_0(%arg0: i32) -> (i32, i32, i32) {
    %c0_i32 = arith.constant 0 : i32
    %c0_i32_0 = arith.constant 0 : i32
    %c0_i32_1 = arith.constant 0 : i32
    return %arg0, %c0_i32, %c0_i32_0 : i32, i32, i32
  }
  func.func @transform_1(%arg0: i32) -> (i32, i32) {
    %c0_i32 = arith.constant 0 : i32
    %c0_i32_0 = arith.constant 0 : i32
    %c0_i32_1 = arith.constant 0 : i32
    return %c0_i32, %c0_i32_0 : i32, i32
  }
  func.func @transform_2(%arg0: i32) -> (i32, i32, i32) {
    %c0_i32 = arith.constant 0 : i32
    %c0_i32_0 = arith.constant 0 : i32
    %c0_i32_1 = arith.constant 0 : i32
    return %arg0, %c0_i32, %c0_i32_0 : i32, i32, i32
  }
  func.func @transform_3(%arg0: i32) -> (i32, i32, i32) {
    %c0_i32 = arith.constant 0 : i32
    %c0_i32_0 = arith.constant 0 : i32
    %c0_i32_1 = arith.constant 0 : i32
    return %arg0, %c0_i32, %c0_i32_0 : i32, i32, i32
  }
  func.func @transform_4(%arg0: i32) -> (i32, i32, i32) {
    %c0_i32 = arith.constant 0 : i32
    %c0_i32_0 = arith.constant 0 : i32
    %c0_i32_1 = arith.constant 0 : i32
    %c0_i32_2 = arith.constant 0 : i32
    return %c0_i32, %c0_i32_0, %c0_i32_1 : i32, i32, i32
  }
  func.func @transform_5(%arg0: i32) -> (i32, i32, i32) {
    %c0_i32 = arith.constant 0 : i32
    %c0_i32_0 = arith.constant 0 : i32
    %c0_i32_1 = arith.constant 0 : i32
    %c0_i32_2 = arith.constant 0 : i32
    return %c0_i32, %c0_i32_0, %c0_i32_1 : i32, i32, i32
  }
  func.func @transform_6(%arg0: i32) -> (i32, i32, i32) {
    %c0_i32 = arith.constant 0 : i32
    %c0_i32_0 = arith.constant 0 : i32
    %c0_i32_1 = arith.constant 0 : i32
    %c0_i32_2 = arith.constant 0 : i32
    return %c0_i32, %c0_i32_0, %c0_i32_1 : i32, i32, i32
  }
  func.func @transform_7(%arg0: i32) -> (i32, i32, i32) {
    %c0_i32 = arith.constant 0 : i32
    %c0_i32_0 = arith.constant 0 : i32
    %c0_i32_1 = arith.constant 0 : i32
    %c0_i32_2 = arith.constant 0 : i32
    return %c0_i32, %c0_i32_0, %c0_i32_1 : i32, i32, i32
  }
  func.func @transform_8(%arg0: i32) -> (i32, i32, i32) {
    %c0_i32 = arith.constant 0 : i32
    %c0_i32_0 = arith.constant 0 : i32
    %c0_i32_1 = arith.constant 0 : i32
    %c0_i32_2 = arith.constant 0 : i32
    return %c0_i32, %c0_i32_0, %c0_i32_1 : i32, i32, i32
  }
  func.func @transform_9(%arg0: i32) -> (i32, i32, i32) {
    %c0_i32 = arith.constant 0 : i32
    %c0_i32_0 = arith.constant 0 : i32
    %c0_i32_1 = arith.constant 0 : i32
    %c0_i32_2 = arith.constant 0 : i32
    return %c0_i32, %c0_i32_0, %c0_i32_1 : i32, i32, i32
  }
  func.func @transform_10(%arg0: i32) -> (i32, i32, i32) {
    %c0_i32 = arith.constant 0 : i32
    %c0_i32_0 = arith.constant 0 : i32
    %c0_i32_1 = arith.constant 0 : i32
    %c0_i32_2 = arith.constant 0 : i32
    return %c0_i32, %c0_i32_0, %c0_i32_1 : i32, i32, i32
  }
  func.func @transform_11(%arg0: i32) -> (i32, i32, i32) {
    %c0_i32 = arith.constant 0 : i32
    %c0_i32_0 = arith.constant 0 : i32
    %c0_i32_1 = arith.constant 0 : i32
    %c0_i32_2 = arith.constant 0 : i32
    return %c0_i32, %c0_i32_0, %c0_i32_1 : i32, i32, i32
  }
  func.func @transform_12(%arg0: i32) -> (i32, i32, i32) {
    %c0_i32 = arith.constant 0 : i32
    %c0_i32_0 = arith.constant 0 : i32
    %c0_i32_1 = arith.constant 0 : i32
    %c0_i32_2 = arith.constant 0 : i32
    return %c0_i32, %c0_i32_0, %c0_i32_1 : i32, i32, i32
  }
  func.func @transform_13(%arg0: i32) -> (i32, i32, i32) {
    %c0_i32 = arith.constant 0 : i32
    %c0_i32_0 = arith.constant 0 : i32
    %c0_i32_1 = arith.constant 0 : i32
    %c0_i32_2 = arith.constant 0 : i32
    return %c0_i32, %c0_i32_0, %c0_i32_1 : i32, i32, i32
  }
  func.func @transform_14(%arg0: i32) -> (i32, i32, i32) {
    %c0_i32 = arith.constant 0 : i32
    %c0_i32_0 = arith.constant 0 : i32
    %c0_i32_1 = arith.constant 0 : i32
    %c0_i32_2 = arith.constant 0 : i32
    return %c0_i32, %c0_i32_0, %c0_i32_1 : i32, i32, i32
  }
  func.func @transform_15(%arg0: i32) -> (i32, i32, i32) {
    %c0_i32 = arith.constant 0 : i32
    %c0_i32_0 = arith.constant 0 : i32
    %c0_i32_1 = arith.constant 0 : i32
    %c0_i32_2 = arith.constant 0 : i32
    return %c0_i32, %c0_i32_0, %c0_i32_1 : i32, i32, i32
  }
  func.func @transform_16(%arg0: i32) -> (i32, i32, i32) {
    %c0_i32 = arith.constant 0 : i32
    %c0_i32_0 = arith.constant 0 : i32
    %c0_i32_1 = arith.constant 0 : i32
    return %arg0, %c0_i32, %c0_i32_0 : i32, i32, i32
  }
}

</mosaic_0001>

<llo_original>
// kernel: tpu_custom_call.1
$region0: #{tpu_custom_call.1}
  #allocation0 [shape = 'u32[]', space=smem, size = 0x4, offset = 0x4, fixed_abs, tag = 'smem constant byte address 0x4 - core index']
  #allocation1 [shape = 'u32[144,128]{1,0:T(1,128)}', space=vmem, size = 0x12000, scoped, tag = 'internal scratch']
  %s0 = inlined_call_operand.vmem [shape: f32[2,16,32], index: 0, kind: input, shape index: {}]
  %s1 = inlined_call_operand.vmem [shape: f32[16,32], index: 1, kind: input, shape index: {}]
  %s2 = inlined_call_operand.vmem [shape: f32[2,1,16], index: 2, kind: input, shape index: {}]
  %s3 = inlined_call_operand.vmem [shape: f32[2,16,1], index: 3, kind: input, shape index: {}]
  %s4 = inlined_call_operand.vmem [shape: f32[2,32,96], index: 4, kind: input, shape index: {}]
  %s5 = inlined_call_operand.vmem [shape: f32[2,1,96], index: 5, kind: input, shape index: {}]
  %s6 = inlined_call_operand.vmem [shape: f32[2,32,32], index: 6, kind: input, shape index: {}]
  %s7 = inlined_call_operand.vmem [shape: f32[2,1,32], index: 7, kind: input, shape index: {}]
  %s8 = inlined_call_operand.vmem [shape: f32[2,1,32], index: 8, kind: input, shape index: {}]
  %s9 = inlined_call_operand.vmem [shape: f32[2,1,32], index: 9, kind: input, shape index: {}]
  %s10 = inlined_call_operand.vmem [shape: f32[2,288,64], index: 10, kind: input, shape index: {}]
  %s11 = inlined_call_operand.vmem [shape: f32[2,1,64], index: 11, kind: input, shape index: {}]
  %s12 = inlined_call_operand.vmem [shape: f32[2,64,32], index: 12, kind: input, shape index: {}]
  %s13 = inlined_call_operand.vmem [shape: f32[2,1,32], index: 13, kind: input, shape index: {}]
  %s14 = inlined_call_operand.vmem [shape: f32[2,1,32], index: 14, kind: input, shape index: {}]
  %s15 = inlined_call_operand.vmem [shape: f32[2,1,32], index: 15, kind: input, shape index: {}]
  %s16 = inlined_call_operand.hbm [shape: f32[2,16,32], index: 16, kind: output, shape index: {}]
  %s17 = sld [smem:[#allocation0]]
  $region97: #{tpu_custom_call.1} parent=0
    _
  %s19 = ssub.s32 1, %s17
  %s20 = scalar_select 0, %s19, %s17
  $region1: #{tpu_custom_call.1} parent=0
    #allocation2 [shape = 'u8[16384]{0}', space=vmem, size = 0x4000, scoped, tag = 'output window, operand 0']
    #allocation3 [shape = 's32[2]{0}', space=sflag, size = 0x8, scoped, tag = 'scoped memory for tpu_custom_call.1']
    %21 = vsyncpa [#allocation3], 0
    %s22 = scalar_lea.sflag [#allocation3], 1
    %23 = vsyncpa %s22, 0
    loop: start=0, step=1, limit=4
    $region2: #{tpu_custom_call.1} parent=1 // loop_pre_header
      _
    $region3: #{tpu_custom_call.1} parent=1 // loop_header
      %s25 = sphi 0, %s29
      %p26 = scmp.ge.s32.totalorder %s25, 4
      %s35 = sphi 0, %s37
      %s38 = sphi 0, %s35
      %s39 = sphi 0, %s38
      %s55 = sphi 0, %s39
      %s59 = sphi 0, %s59
      %s61 = sphi 0, %s59
      %s62 = sphi 0, %s61
      %s76 = sphi 0, %s62
      %s82 = sphi 0, %s84
      %s85 = sphi 0, %s82
      %s86 = sphi 0, %s85
      %s102 = sphi 0, %s86
      %s108 = sphi 0, %s110
      %s111 = sphi 0, %s108
      %s112 = sphi 0, %s111
      %s128 = sphi 0, %s112
      %s132 = sphi 0, %s132
      %s134 = sphi 0, %s132
      %s135 = sphi 0, %s134
      %s149 = sphi 0, %s135
      %s153 = sphi 0, %s153
      %s155 = sphi 0, %s153
      %s156 = sphi 0, %s155
      %s170 = sphi 0, %s156
      %s174 = sphi 0, %s174
      %s176 = sphi 0, %s174
      %s177 = sphi 0, %s176
      %s191 = sphi 0, %s177
      %s195 = sphi 0, %s195
      %s197 = sphi 0, %s195
      %s198 = sphi 0, %s197
      %s212 = sphi 0, %s198
      %s216 = sphi 0, %s216
      %s218 = sphi 0, %s216
      %s219 = sphi 0, %s218
      %s233 = sphi 0, %s219
      %s237 = sphi 0, %s237
      %s239 = sphi 0, %s237
      %s240 = sphi 0, %s239
      %s254 = sphi 0, %s240
      %s258 = sphi 0, %s258
      %s260 = sphi 0, %s258
      %s261 = sphi 0, %s260
      %s275 = sphi 0, %s261
      %s279 = sphi 0, %s279
      %s281 = sphi 0, %s279
      %s282 = sphi 0, %s281
      %s296 = sphi 0, %s282
      %s300 = sphi 0, %s300
      %s302 = sphi 0, %s300
      %s303 = sphi 0, %s302
      %s317 = sphi 0, %s303
      %s321 = sphi 0, %s321
      %s323 = sphi 0, %s321
      %s324 = sphi 0, %s323
      %s338 = sphi 0, %s324
      %s342 = sphi 0, %s342
      %s344 = sphi 0, %s342
      %s345 = sphi 0, %s344
      %s359 = sphi 0, %s345
      %s363 = sphi 0, %s363
      %s365 = sphi 0, %s363
      %s366 = sphi 0, %s365
      %s380 = sphi 0, %s366
      %s386 = sphi 0, %s388
      %s389 = sphi 0, %s386
      %s390 = sphi 0, %s389
      %s406 = sphi 0, %s390
    $region4: #{tpu_custom_call.1} parent=1 // loop_header_branch
      %28 = sbr.rel (%p26) target = $region8
    $region5: #{tpu_custom_call.1} parent=1 // loop_body
      %s30 = ssub.s32 %s25, 1
      %s31 = ssub.s32 %s25, 2
      %s32 = sadd.s32 %s25, 1
      %s33 = ssub.s32 %s25, %s32
      %p34 = scmp.eq.s32.totalorder %s33, 0
      %s36 = sadd.s32 %s35, 1
      %s37 = scalar_select %p34, %s35, %s36
      %p40 = pneg %p34
      %p41 = scmp.eq.s32.totalorder %s25, 1
      %p42 = por %p40, %p41
      %p43 = scmp.ne.s32.totalorder %s35, %s38
      %p44 = scmp.eq.s32.totalorder %s25, 0
      %p45 = por %p43, %p44
      %p46 = scmp.ne.s32.totalorder %s35, %s38
      %p47 = scmp.eq.s32.totalorder %s30, 1
      %p48 = por %p46, %p47
      %p49 = scmp.ne.s32.totalorder %s38, %s39
      %p50 = scmp.eq.s32.totalorder %s30, 0
      %p51 = por %p49, %p50
      %p52 = scmp.ne.s32.totalorder %s38, %s39
      %p53 = scmp.eq.s32.totalorder %s31, 1
      %p54 = por %p52, %p53
      %p56 = scmp.ne.s32.totalorder %s39, %s55
      %p57 = scmp.eq.s32.totalorder %s31, 0
      %p58 = por %p56, %p57
      %s60 = sadd.s32 %s59, 1
      %p63 = scmp.eq.s32.totalorder %s25, 1
      %p64 = scmp.ne.s32.totalorder %s59, %s61
      %p65 = scmp.eq.s32.totalorder %s25, 0
      %p66 = por %p64, %p65
      %p67 = scmp.ne.s32.totalorder %s59, %s61
      %p68 = scmp.eq.s32.totalorder %s30, 1
      %p69 = por %p67, %p68
      %p70 = scmp.ne.s32.totalorder %s61, %s62
      %p71 = scmp.eq.s32.totalorder %s30, 0
      %p72 = por %p70, %p71
      %p73 = scmp.ne.s32.totalorder %s61, %s62
      %p74 = scmp.eq.s32.totalorder %s31, 1
      %p75 = por %p73, %p74
      %p77 = scmp.ne.s32.totalorder %s62, %s76
      %p78 = scmp.eq.s32.totalorder %s31, 0
      %p79 = por %p77, %p78
      %s80 = ssub.s32 %s25, %s32
      %p81 = scmp.eq.s32.totalorder %s80, 0
      %s83 = sadd.s32 %s82, 1
      %s84 = scalar_select %p81, %s82, %s83
      %p87 = pneg %p81
      %p88 = scmp.eq.s32.totalorder %s25, 1
      %p89 = por %p87, %p88
      %p90 = scmp.ne.s32.totalorder %s82, %s85
      %p91 = scmp.eq.s32.totalorder %s25, 0
      %p92 = por %p90, %p91
      %p93 = scmp.ne.s32.totalorder %s82, %s85
      %p94 = scmp.eq.s32.totalorder %s30, 1
      %p95 = por %p93, %p94
      %p96 = scmp.ne.s32.totalorder %s85, %s86
      %p97 = scmp.eq.s32.totalorder %s30, 0
      %p98 = por %p96, %p97
      %p99 = scmp.ne.s32.totalorder %s85, %s86
      %p100 = scmp.eq.s32.totalorder %s31, 1
      %p101 = por %p99, %p100
      %p103 = scmp.ne.s32.totalorder %s86, %s102
      %p104 = scmp.eq.s32.totalorder %s31, 0
      %p105 = por %p103, %p104
      %s106 = ssub.s32 %s25, %s32
      %p107 = scmp.eq.s32.totalorder %s106, 0
      %s109 = sadd.s32 %s108, 1
      %s110 = scalar_select %p107, %s108, %s109
      %p113 = pneg %p107
      %p114 = scmp.eq.s32.totalorder %s25, 1
      %p115 = por %p113, %p114
      %p116 = scmp.ne.s32.totalorder %s108, %s111
      %p117 = scmp.eq.s32.totalorder %s25, 0
      %p118 = por %p116, %p117
      %p119 = scmp.ne.s32.totalorder %s108, %s111
      %p120 = scmp.eq.s32.totalorder %s30, 1
      %p121 = por %p119, %p120
      %p122 = scmp.ne.s32.totalorder %s111, %s112
      %p123 = scmp.eq.s32.totalorder %s30, 0
      %p124 = por %p122, %p123
      %p125 = scmp.ne.s32.totalorder %s111, %s112
      %p126 = scmp.eq.s32.totalorder %s31, 1
      %p127 = por %p125, %p126
      %p129 = scmp.ne.s32.totalorder %s112, %s128
      %p130 = scmp.eq.s32.totalorder %s31, 0
      %p131 = por %p129, %p130
      %s133 = sadd.s32 %s132, 1
      %p136 = scmp.eq.s32.totalorder %s25, 1
      %p137 = scmp.ne.s32.totalorder %s132, %s134
      %p138 = scmp.eq.s32.totalorder %s25, 0
      %p139 = por %p137, %p138
      %p140 = scmp.ne.s32.totalorder %s132, %s134
      %p141 = scmp.eq.s32.totalorder %s30, 1
      %p142 = por %p140, %p141
      %p143 = scmp.ne.s32.totalorder %s134, %s135
      %p144 = scmp.eq.s32.totalorder %s30, 0
      %p145 = por %p143, %p144
      %p146 = scmp.ne.s32.totalorder %s134, %s135
      %p147 = scmp.eq.s32.totalorder %s31, 1
      %p148 = por %p146, %p147
      %p150 = scmp.ne.s32.totalorder %s135, %s149
      %p151 = scmp.eq.s32.totalorder %s31, 0
      %p152 = por %p150, %p151
      %s154 = sadd.s32 %s153, 1
      %p157 = scmp.eq.s32.totalorder %s25, 1
      %p158 = scmp.ne.s32.totalorder %s153, %s155
      %p159 = scmp.eq.s32.totalorder %s25, 0
      %p160 = por %p158, %p159
      %p161 = scmp.ne.s32.totalorder %s153, %s155
      %p162 = scmp.eq.s32.totalorder %s30, 1
      %p163 = por %p161, %p162
      %p164 = scmp.ne.s32.totalorder %s155, %s156
      %p165 = scmp.eq.s32.totalorder %s30, 0
      %p166 = por %p164, %p165
      %p167 = scmp.ne.s32.totalorder %s155, %s156
      %p168 = scmp.eq.s32.totalorder %s31, 1
      %p169 = por %p167, %p168
      %p171 = scmp.ne.s32.totalorder %s156, %s170
      %p172 = scmp.eq.s32.totalorder %s31, 0
      %p173 = por %p171, %p172
      %s175 = sadd.s32 %s174, 1
      %p178 = scmp.eq.s32.totalorder %s25, 1
      %p179 = scmp.ne.s32.totalorder %s174, %s176
      %p180 = scmp.eq.s32.totalorder %s25, 0
      %p181 = por %p179, %p180
      %p182 = scmp.ne.s32.totalorder %s174, %s176
      %p183 = scmp.eq.s32.totalorder %s30, 1
      %p184 = por %p182, %p183
      %p185 = scmp.ne.s32.totalorder %s176, %s177
      %p186 = scmp.eq.s32.totalorder %s30, 0
      %p187 = por %p185, %p186
      %p188 = scmp.ne.s32.totalorder %s176, %s177
      %p189 = scmp.eq.s32.totalorder %s31, 1
      %p190 = por %p188, %p189
      %p192 = scmp.ne.s32.totalorder %s177, %s191
      %p193 = scmp.eq.s32.totalorder %s31, 0
      %p194 = por %p192, %p193
      %s196 = sadd.s32 %s195, 1
      %p199 = scmp.eq.s32.totalorder %s25, 1
      %p200 = scmp.ne.s32.totalorder %s195, %s197
      %p201 = scmp.eq.s32.totalorder %s25, 0
      %p202 = por %p200, %p201
      %p203 = scmp.ne.s32.totalorder %s195, %s197
      %p204 = scmp.eq.s32.totalorder %s30, 1
      %p205 = por %p203, %p204
      %p206 = scmp.ne.s32.totalorder %s197, %s198
      %p207 = scmp.eq.s32.totalorder %s30, 0
      %p208 = por %p206, %p207
      %p209 = scmp.ne.s32.totalorder %s197, %s198
      %p210 = scmp.eq.s32.totalorder %s31, 1
      %p211 = por %p209, %p210
      %p213 = scmp.ne.s32.totalorder %s198, %s212
      %p214 = scmp.eq.s32.totalorder %s31, 0
      %p215 = por %p213, %p214
      %s217 = sadd.s32 %s216, 1
      %p220 = scmp.eq.s32.totalorder %s25, 1
      %p221 = scmp.ne.s32.totalorder %s216, %s218
      %p222 = scmp.eq.s32.totalorder %s25, 0
      %p223 = por %p221, %p222
      %p224 = scmp.ne.s32.totalorder %s216, %s218
      %p225 = scmp.eq.s32.totalorder %s30, 1
      %p226 = por %p224, %p225
      %p227 = scmp.ne.s32.totalorder %s218, %s219
      %p228 = scmp.eq.s32.totalorder %s30, 0
      %p229 = por %p227, %p228
      %p230 = scmp.ne.s32.totalorder %s218, %s219
      %p231 = scmp.eq.s32.totalorder %s31, 1
      %p232 = por %p230, %p231
      %p234 = scmp.ne.s32.totalorder %s219, %s233
      %p235 = scmp.eq.s32.totalorder %s31, 0
      %p236 = por %p234, %p235
      %s238 = sadd.s32 %s237, 1
      %p241 = scmp.eq.s32.totalorder %s25, 1
      %p242 = scmp.ne.s32.totalorder %s237, %s239
      %p243 = scmp.eq.s32.totalorder %s25, 0
      %p244 = por %p242, %p243
      %p245 = scmp.ne.s32.totalorder %s237, %s239
      %p246 = scmp.eq.s32.totalorder %s30, 1
      %p247 = por %p245, %p246
      %p248 = scmp.ne.s32.totalorder %s239, %s240
      %p249 = scmp.eq.s32.totalorder %s30, 0
      %p250 = por %p248, %p249
      %p251 = scmp.ne.s32.totalorder %s239, %s240
      %p252 = scmp.eq.s32.totalorder %s31, 1
      %p253 = por %p251, %p252
      %p255 = scmp.ne.s32.totalorder %s240, %s254
      %p256 = scmp.eq.s32.totalorder %s31, 0
      %p257 = por %p255, %p256
      %s259 = sadd.s32 %s258, 1
      %p262 = scmp.eq.s32.totalorder %s25, 1
      %p263 = scmp.ne.s32.totalorder %s258, %s260
      %p264 = scmp.eq.s32.totalorder %s25, 0
      %p265 = por %p263, %p264
      %p266 = scmp.ne.s32.totalorder %s258, %s260
      %p267 = scmp.eq.s32.totalorder %s30, 1
      %p268 = por %p266, %p267
      %p269 = scmp.ne.s32.totalorder %s260, %s261
      %p270 = scmp.eq.s32.totalorder %s30, 0
      %p271 = por %p269, %p270
      %p272 = scmp.ne.s32.totalorder %s260, %s261
      %p273 = scmp.eq.s32.totalorder %s31, 1
      %p274 = por %p272, %p273
      %p276 = scmp.ne.s32.totalorder %s261, %s275
      %p277 = scmp.eq.s32.totalorder %s31, 0
      %p278 = por %p276, %p277
      %s280 = sadd.s32 %s279, 1
      %p283 = scmp.eq.s32.totalorder %s25, 1
      %p284 = scmp.ne.s32.totalorder %s279, %s281
      %p285 = scmp.eq.s32.totalorder %s25, 0
      %p286 = por %p284, %p285
      %p287 = scmp.ne.s32.totalorder %s279, %s281
      %p288 = scmp.eq.s32.totalorder %s30, 1
      %p289 = por %p287, %p288
      %p290 = scmp.ne.s32.totalorder %s281, %s282
      %p291 = scmp.eq.s32.totalorder %s30, 0
      %p292 = por %p290, %p291
      %p293 = scmp.ne.s32.totalorder %s281, %s282
      %p294 = scmp.eq.s32.totalorder %s31, 1
      %p295 = por %p293, %p294
      %p297 = scmp.ne.s32.totalorder %s282, %s296
      %p298 = scmp.eq.s32.totalorder %s31, 0
      %p299 = por %p297, %p298
      %s301 = sadd.s32 %s300, 1
      %p304 = scmp.eq.s32.totalorder %s25, 1
      %p305 = scmp.ne.s32.totalorder %s300, %s302
      %p306 = scmp.eq.s32.totalorder %s25, 0
      %p307 = por %p305, %p306
      %p308 = scmp.ne.s32.totalorder %s300, %s302
      %p309 = scmp.eq.s32.totalorder %s30, 1
      %p310 = por %p308, %p309
      %p311 = scmp.ne.s32.totalorder %s302, %s303
      %p312 = scmp.eq.s32.totalorder %s30, 0
      %p313 = por %p311, %p312
      %p314 = scmp.ne.s32.totalorder %s302, %s303
      %p315 = scmp.eq.s32.totalorder %s31, 1
      %p316 = por %p314, %p315
      %p318 = scmp.ne.s32.totalorder %s303, %s317
      %p319 = scmp.eq.s32.totalorder %s31, 0
      %p320 = por %p318, %p319
      %s322 = sadd.s32 %s321, 1
      %p325 = scmp.eq.s32.totalorder %s25, 1
      %p326 = scmp.ne.s32.totalorder %s321, %s323
      %p327 = scmp.eq.s32.totalorder %s25, 0
      %p328 = por %p326, %p327
      %p329 = scmp.ne.s32.totalorder %s321, %s323
      %p330 = scmp.eq.s32.totalorder %s30, 1
      %p331 = por %p329, %p330
      %p332 = scmp.ne.s32.totalorder %s323, %s324
      %p333 = scmp.eq.s32.totalorder %s30, 0
      %p334 = por %p332, %p333
      %p335 = scmp.ne.s32.totalorder %s323, %s324
      %p336 = scmp.eq.s32.totalorder %s31, 1
      %p337 = por %p335, %p336
      %p339 = scmp.ne.s32.totalorder %s324, %s338
      %p340 = scmp.eq.s32.totalorder %s31, 0
      %p341 = por %p339, %p340
      %s343 = sadd.s32 %s342, 1
      %p346 = scmp.eq.s32.totalorder %s25, 1
      %p347 = scmp.ne.s32.totalorder %s342, %s344
      %p348 = scmp.eq.s32.totalorder %s25, 0
      %p349 = por %p347, %p348
      %p350 = scmp.ne.s32.totalorder %s342, %s344
      %p351 = scmp.eq.s32.totalorder %s30, 1
      %p352 = por %p350, %p351
      %p353 = scmp.ne.s32.totalorder %s344, %s345
      %p354 = scmp.eq.s32.totalorder %s30, 0
      %p355 = por %p353, %p354
      %p356 = scmp.ne.s32.totalorder %s344, %s345
      %p357 = scmp.eq.s32.totalorder %s31, 1
      %p358 = por %p356, %p357
      %p360 = scmp.ne.s32.totalorder %s345, %s359
      %p361 = scmp.eq.s32.totalorder %s31, 0
      %p362 = por %p360, %p361
      %s364 = sadd.s32 %s363, 1
      %p367 = scmp.eq.s32.totalorder %s25, 1
      %p368 = scmp.ne.s32.totalorder %s363, %s365
      %p369 = scmp.eq.s32.totalorder %s25, 0
      %p370 = por %p368, %p369
      %p371 = scmp.ne.s32.totalorder %s363, %s365
      %p372 = scmp.eq.s32.totalorder %s30, 1
      %p373 = por %p371, %p372
      %p374 = scmp.ne.s32.totalorder %s365, %s366
      %p375 = scmp.eq.s32.totalorder %s30, 0
      %p376 = por %p374, %p375
      %p377 = scmp.ne.s32.totalorder %s365, %s366
      %p378 = scmp.eq.s32.totalorder %s31, 1
      %p379 = por %p377, %p378
      %p381 = scmp.ne.s32.totalorder %s366, %s380
      %p382 = scmp.eq.s32.totalorder %s31, 0
      %p383 = por %p381, %p382
      %s384 = ssub.s32 %s25, %s32
      %p385 = scmp.eq.s32.totalorder %s384, 0
      %s387 = sadd.s32 %s386, 1
      %s388 = scalar_select %p385, %s386, %s387
      %p391 = pneg %p385
      %p392 = scmp.eq.s32.totalorder %s25, 1
      %p393 = por %p391, %p392
      %p394 = scmp.ne.s32.totalorder %s386, %s389
      %p395 = scmp.eq.s32.totalorder %s25, 0
      %p396 = por %p394, %p395
      %p397 = scmp.ne.s32.totalorder %s386, %s389
      %p398 = scmp.eq.s32.totalorder %s30, 1
      %p399 = por %p397, %p398
      %p400 = scmp.ne.s32.totalorder %s389, %s390
      %p401 = scmp.eq.s32.totalorder %s30, 0
      %p402 = por %p400, %p401
      %p403 = scmp.ne.s32.totalorder %s389, %s390
      %p404 = scmp.eq.s32.totalorder %s31, 1
      %p405 = por %p403, %p404
      %p407 = scmp.ne.s32.totalorder %s390, %s406
      %p408 = scmp.eq.s32.totalorder %s31, 0
      %p409 = por %p407, %p408
      %p410 = scmp.le.s32.totalorder 1, %s25
      %p411 = scmp.lt.s32.totalorder %s25, 3
      %p412 = pnand %p410, %p411
      %p413 = pneg %p412
      // Predicated region
      $region9: #{tpu_custom_call.1} parent=5 // pred_check
        _
      $region10: #{tpu_custom_call.1} parent=5 // pred_check_branch
        %415 = sbr.rel (%p412) target = $region12
      $region11: #{tpu_custom_call.1} parent=5 // pred_region
        %s416 = ssub.s32 %s25, 1
        // Predicated region
        $region13: #{tpu_custom_call.1} parent=11 // pred_check
          %p417 = pneg %p72
        $region14: #{tpu_custom_call.1} parent=11 // pred_check_branch
          %419 = sbr.rel (%p417) target = $region16
        $region15: #{tpu_custom_call.1} parent=11 // pred_region
          _
        $region16: #{tpu_custom_call.1} parent=11 // pred_fallthru
          _
        // Predicated region
        $region17: #{tpu_custom_call.1} parent=11 // pred_check
          %p420 = pneg %p145
        $region18: #{tpu_custom_call.1} parent=11 // pred_check_branch
          %422 = sbr.rel (%p420) target = $region20
        $region19: #{tpu_custom_call.1} parent=11 // pred_region
          _
        $region20: #{tpu_custom_call.1} parent=11 // pred_fallthru
          _
        // Predicated region
        $region21: #{tpu_custom_call.1} parent=11 // pred_check
          %p423 = pneg %p166
        $region22: #{tpu_custom_call.1} parent=11 // pred_check_branch
          %425 = sbr.rel (%p423) target = $region24
        $region23: #{tpu_custom_call.1} parent=11 // pred_region
          _
        $region24: #{tpu_custom_call.1} parent=11 // pred_fallthru
          _
        // Predicated region
        $region25: #{tpu_custom_call.1} parent=11 // pred_check
          %p426 = pneg %p187
        $region26: #{tpu_custom_call.1} parent=11 // pred_check_branch
          %428 = sbr.rel (%p426) target = $region28
        $region27: #{tpu_custom_call.1} parent=11 // pred_region
          _
        $region28: #{tpu_custom_call.1} parent=11 // pred_fallthru
          _
        // Predicated region
        $region29: #{tpu_custom_call.1} parent=11 // pred_check
          %p429 = pneg %p208
        $region30: #{tpu_custom_call.1} parent=11 // pred_check_branch
          %431 = sbr.rel (%p429) target = $region32
        $region31: #{tpu_custom_call.1} parent=11 // pred_region
          _
        $region32: #{tpu_custom_call.1} parent=11 // pred_fallthru
          _
        // Predicated region
        $region33: #{tpu_custom_call.1} parent=11 // pred_check
          %p432 = pneg %p229
        $region34: #{tpu_custom_call.1} parent=11 // pred_check_branch
          %434 = sbr.rel (%p432) target = $region36
        $region35: #{tpu_custom_call.1} parent=11 // pred_region
          _
        $region36: #{tpu_custom_call.1} parent=11 // pred_fallthru
          _
        // Predicated region
        $region37: #{tpu_custom_call.1} parent=11 // pred_check
          %p435 = pneg %p250
        $region38: #{tpu_custom_call.1} parent=11 // pred_check_branch
          %437 = sbr.rel (%p435) target = $region40
        $region39: #{tpu_custom_call.1} parent=11 // pred_region
          _
        $region40: #{tpu_custom_call.1} parent=11 // pred_fallthru
          _
        // Predicated region
        $region41: #{tpu_custom_call.1} parent=11 // pred_check
          %p438 = pneg %p271
        $region42: #{tpu_custom_call.1} parent=11 // pred_check_branch
          %440 = sbr.rel (%p438) target = $region44
        $region43: #{tpu_custom_call.1} parent=11 // pred_region
          _
        $region44: #{tpu_custom_call.1} parent=11 // pred_fallthru
          _
        // Predicated region
        $region45: #{tpu_custom_call.1} parent=11 // pred_check
          %p441 = pneg %p292
        $region46: #{tpu_custom_call.1} parent=11 // pred_check_branch
          %443 = sbr.rel (%p441) target = $region48
        $region47: #{tpu_custom_call.1} parent=11 // pred_region
          _
        $region48: #{tpu_custom_call.1} parent=11 // pred_fallthru
          _
        // Predicated region
        $region49: #{tpu_custom_call.1} parent=11 // pred_check
          %p444 = pneg %p313
        $region50: #{tpu_custom_call.1} parent=11 // pred_check_branch
          %446 = sbr.rel (%p444) target = $region52
        $region51: #{tpu_custom_call.1} parent=11 // pred_region
          _
        $region52: #{tpu_custom_call.1} parent=11 // pred_fallthru
          _
        // Predicated region
        $region53: #{tpu_custom_call.1} parent=11 // pred_check
          %p447 = pneg %p334
        $region54: #{tpu_custom_call.1} parent=11 // pred_check_branch
          %449 = sbr.rel (%p447) target = $region56
        $region55: #{tpu_custom_call.1} parent=11 // pred_region
          _
        $region56: #{tpu_custom_call.1} parent=11 // pred_fallthru
          _
        // Predicated region
        $region57: #{tpu_custom_call.1} parent=11 // pred_check
          %p450 = pneg %p355
        $region58: #{tpu_custom_call.1} parent=11 // pred_check_branch
          %452 = sbr.rel (%p450) target = $region60
        $region59: #{tpu_custom_call.1} parent=11 // pred_region
          _
        $region60: #{tpu_custom_call.1} parent=11 // pred_fallthru
          _
        // Predicated region
        $region61: #{tpu_custom_call.1} parent=11 // pred_check
          %p453 = pneg %p376
        $region62: #{tpu_custom_call.1} parent=11 // pred_check_branch
          %455 = sbr.rel (%p453) target = $region64
        $region63: #{tpu_custom_call.1} parent=11 // pred_region
          _
        $region64: #{tpu_custom_call.1} parent=11 // pred_fallthru
          _
      $region12: #{tpu_custom_call.1} parent=5 // pred_fallthru
        _
      %p456 = scmp.lt.s32.totalorder %s25, 2
      // Predicated region
      $region65: #{tpu_custom_call.1} parent=5 // pred_check
        %p457 = pneg %p456
      $region66: #{tpu_custom_call.1} parent=5 // pred_check_branch
        %459 = sbr.rel (%p457) target = $region68
      $region67: #{tpu_custom_call.1} parent=5 // pred_region
        // Predicated region
        $region69: #{tpu_custom_call.1} parent=67 // pred_check
          %p460 = pneg %p45
        $region70: #{tpu_custom_call.1} parent=67 // pred_check_branch
          %462 = sbr.rel (%p460) target = $region72
        $region71: #{tpu_custom_call.1} parent=67 // pred_region
          %p463 = scmp.lt.s32.totalorder %s25, 1
          %s464 = scalar_select %p463, %s25, 1
          %s465 = smul.addr %s464, 2
          %s466 = smul.addr %s465, 8
          %s467 = scalar_lea.vmem %s0, %s466
        $region72: #{tpu_custom_call.1} parent=67 // pred_fallthru
          _
        // Predicated region
        $region73: #{tpu_custom_call.1} parent=67 // pred_check
          %p468 = pneg %p92
        $region74: #{tpu_custom_call.1} parent=67 // pred_check_branch
          %470 = sbr.rel (%p468) target = $region76
        $region75: #{tpu_custom_call.1} parent=67 // pred_region
          %p471 = scmp.lt.s32.totalorder %s25, 1
          %s472 = scalar_select %p471, %s25, 1
          %s473 = scalar_lea.vmem %s2, %s472
        $region76: #{tpu_custom_call.1} parent=67 // pred_fallthru
          _
        // Predicated region
        $region77: #{tpu_custom_call.1} parent=67 // pred_check
          %p474 = pneg %p118
        $region78: #{tpu_custom_call.1} parent=67 // pred_check_branch
          %476 = sbr.rel (%p474) target = $region80
        $region79: #{tpu_custom_call.1} parent=67 // pred_region
          %p477 = scmp.lt.s32.totalorder %s25, 1
          %s478 = scalar_select %p477, %s25, 1
          %s479 = smul.addr %s478, 2
          %s480 = smul.addr %s479, 8
          %s481 = scalar_lea.vmem %s3, %s480
        $region80: #{tpu_custom_call.1} parent=67 // pred_fallthru
          _
      $region68: #{tpu_custom_call.1} parent=5 // pred_fallthru
        _
      %p482 = scmp.le.s32.totalorder 1, %s25
      %p483 = scmp.lt.s32.totalorder %s25, 3
      %p484 = pnand %p482, %p483
      %p485 = pneg %p484
      // Predicated region
      $region81: #{tpu_custom_call.1} parent=5 // pred_check
        _
      $region82: #{tpu_custom_call.1} parent=5 // pred_check_branch
        %487 = sbr.rel (%p484) target = $region84
      $region83: #{tpu_custom_call.1} parent=5 // pred_region
        %s488 = ssub.s32 %s25, 1
        %p489 = scmp.lt.s32.totalorder %s30, 1
        %s490 = scalar_select %p489, %s30, 1
        %s491 = smul.addr %s490, 2
        %s492 = smul.addr %s491, 8
        %s493 = scalar_lea.vmem %s0, %s492
        %p494 = pneg %p51
        %p495 = pneg %p48
        %p496 = pneg %p72
        %p497 = pneg %p69
        %p498 = scmp.lt.s32.totalorder %s30, 1
        %s499 = scalar_select %p498, %s30, 1
        %s500 = scalar_lea.vmem %s2, %s499
        %p501 = pneg %p98
        %p502 = pneg %p95
        %p503 = scmp.lt.s32.totalorder %s30, 1
        %s504 = scalar_select %p503, %s30, 1
        %s505 = smul.addr %s504, 2
        %s506 = smul.addr %s505, 8
        %s507 = scalar_lea.vmem %s3, %s506
        %p508 = pneg %p124
        %p509 = pneg %p121
        %p510 = pneg %p145
        %p511 = pneg %p142
        %p512 = pneg %p166
        %p513 = pneg %p163
        %p514 = pneg %p187
        %p515 = pneg %p184
        %p516 = pneg %p208
        %p517 = pneg %p205
        %p518 = pneg %p229
        %p519 = pneg %p226
        %p520 = pneg %p250
        %p521 = pneg %p247
        %p522 = pneg %p271
        %p523 = pneg %p268
        %p524 = pneg %p292
        %p525 = pneg %p289
        %p526 = pneg %p313
        %p527 = pneg %p310
        %p528 = pneg %p334
        %p529 = pneg %p331
        %p530 = pneg %p355
        %p531 = pneg %p352
        %p532 = pneg %p376
        %p533 = pneg %p373
        %p534 = pneg %p402
        %p535 = pneg %p399
        %s536 = sand.u32 %s389, 1
        %s537 = scalar_lea.sflag [#allocation3], %s536
        %s538 = sand.u32 %s389, 1
        %s539 = smul.addr %s538, 16
        %s540 = scalar_lea.vmem [#allocation2], %s539
        %p541 = scmp.lt.s32.totalorder %s30, 1
        %s542 = scalar_select %p541, %s30, 1
        %s543 = smul.addr %s542, 2
        %s544 = smul.addr %s543, 8
        %s545 = scalar_lea.vmem %s0, %s544
        %p546 = scmp.lt.s32.totalorder %s30, 1
        %s547 = scalar_select %p546, %s30, 1
        %s548 = scalar_lea.vmem %s2, %s547
        %p549 = scmp.lt.s32.totalorder %s30, 1
        %s550 = scalar_select %p549, %s30, 1
        %s551 = smul.addr %s550, 2
        %s552 = smul.addr %s551, 8
        %s553 = scalar_lea.vmem %s3, %s552
        %v554 = vld [vmem:[%s545] sm:$0xff]
        %v555 = vld [vmem:[%s545 + $0x8] sm:$0xff]
        %v556 = vld [vmem:[%s1] sm:$0xff]
        %v557 = vld [vmem:[%s1 + $0x8] sm:$0xff]
        %v558 = vadd.f32 %v554, %v556
        %v559 = vadd.f32 %v555, %v557
        %v560 = vld [vmem:[%s548] sm:$0x1]
        %v561 = vld [vmem:[%s553] sm:$0xff]
        %v562 = vld [vmem:[%s553 + $0x8] sm:$0xff]
        %v563 = vsub.f32 1.0, %v561
        %v564 = vsub.f32 1.0, %v562
        %v565 = vld [vmem:[%s4] sm:$0xff]
        %v566 = vld [vmem:[%s4 + $0x8] sm:$0xff]
        %v567 = vld [vmem:[%s4 + $0x10] sm:$0xff]
        %v568 = vld [vmem:[%s4 + $0x18] sm:$0xff]
        %v569 = vld [vmem:[%s5] sm:$0x1]
        %v571 = vlaneseq
        %v572 = vshrl.u32 %v571, 7
        %v573 = vsub.s32 0, %v572
        %v574 = vrot.slane %v569, %v573
        %vm576 = vcmask 261120
        %v578 = vsel %vm576, %v558, 0
        %v581 = vsel %vm576, %v559, 0
        %583 = vmatprep.subr.mxu0 0.0
        %584 = vmatpush1.msra.mxu0 %v565
        %585 = vmatprep.subr.mxu0 0.0
        %586 = vmatpush1.msra.mxu0 %v566
        %587 = vmatprep.subr.mxu0 0.0
        %588 = vmatpush1.msra.mxu0 %v567
        %589 = vmatprep.subr.mxu0 0.0
        %590 = vmatpush1.msra.mxu0 %v568
        %591 = vmatprep.subr.mxu0 0.0
        %592 = vmatpush1.msra.mxu0 0.0
        %593 = vmatprep.subr.mxu0 0.0
        %594 = vmatpush1.msra.mxu0 0.0
        %595 = vmatprep.subr.mxu0 0.0
        %596 = vmatpush1.msra.mxu0 0.0
        %597 = vmatprep.subr.mxu0 0.0
        %598 = vmatpush1.msra.mxu0 0.0
        %599 = vmatprep.subr.mxu0 0.0
        %600 = vmatpush1.msra.mxu0 0.0
        %601 = vmatprep.subr.mxu0 0.0
        %602 = vmatpush1.msra.mxu0 0.0
        %603 = vmatprep.subr.mxu0 0.0
        %604 = vmatpush1.msra.mxu0 0.0
        %605 = vmatprep.subr.mxu0 0.0
        %606 = vmatpush1.msra.mxu0 0.0
        %607 = vmatprep.subr.mxu0 0.0
        %608 = vmatpush1.msra.mxu0 0.0
        %609 = vmatprep.subr.mxu0 0.0
        %610 = vmatpush1.msra.mxu0 0.0
        %611 = vmatprep.subr.mxu0 0.0
        %612 = vmatpush1.msra.mxu0 0.0
        %613 = vmatprep.subr.mxu0 0.0
        %614 = vmatpush1.msra.mxu0 0.0
        %615 = vmatprep.subr.mxu0 0.0
        %616 = vmatpush1.msra.mxu0 0.0
        %617 = vmatprep.subr.mxu0 0.0
        %618 = vmatpush1.msra.mxu0 0.0
        %619 = vmatprep.subr.mxu0 0.0
        %620 = vmatpush1.msra.mxu0 0.0
        %621 = vmatprep.subr.mxu0 0.0
        %622 = vmatpush1.msra.mxu0 0.0
        %623 = vmatprep.subr.mxu0 0.0
        %624 = vmatpush1.msra.mxu0 0.0
        %625 = vmatprep.subr.mxu0 0.0
        %626 = vmatpush1.msra.mxu0 0.0
        %627 = vmatprep.subr.mxu0 0.0
        %628 = vmatpush1.msra.mxu0 0.0
        %629 = vmatprep.subr.mxu0 0.0
        %630 = vmatpush1.msra.mxu0 0.0
        %631 = vmatprep.subr.mxu0 0.0
        %632 = vmatpush1.msra.mxu0 0.0
        %633 = vmatprep.subr.mxu0 0.0
        %634 = vmatpush1.msra.mxu0 0.0
        %635 = vmatprep.subr.mxu0 0.0
        %636 = vmatpush1.msra.mxu0 0.0
        %637 = vmatprep.subr.mxu0 0.0
        %638 = vmatpush1.msra.mxu0 0.0
        %639 = vmatprep.subr.mxu0 0.0
        %640 = vmatpush1.msra.mxu0 0.0
        %641 = vmatprep.subr.mxu0 0.0
        %642 = vmatpush1.msra.mxu0 0.0
        %643 = vmatprep.subr.mxu0 0.0
        %644 = vmatpush1.msra.mxu0 0.0
        %645 = vmatprep.subr.mxu0 0.0
        %646 = vmatpush1.msra.mxu0 0.0
        %647 = vmatprep.mubr.f32.mxu0 0.0
        %648 = vmatmul.mubr.f32.gmra.mrb[0].mxu0 %v578
        %v649 = vpop.f32.mrb[0].mxu0
        %v650 = vadd.f32 %v574, %v649
        %v651 = vpop.f32.mrb[0].mxu0
        %652 = vmatprep.mubr.f32.mxu0 0.0
        %653 = vmatmul.mubr.f32.gmra.mrb[0].mxu0 %v581
        %v654 = vpop.f32.mrb[0].mxu0
        %v655 = vadd.f32 %v574, %v654
        %v656 = vpop.f32.mrb[0].mxu0
        %657 = vdwg.mxu0
        %660 = vrot.lane.b32.xlu0 %v650, 96
        %v661 = vpop.permute.xlu0 %660
        %662 = vrot.lane.b32.xlu0 %v655, 96
        %v663 = vpop.permute.xlu0 %662
        %vm664 = vcmask 130048
        %v665 = vsel %vm664, %v650, 0
        %v667 = vsel %vm664, %v655, 0
        %v669 = vsel %vm664, %v661, 0
        %v671 = vsel %vm664, %v663, 0
        %673 = vmatprep.subr.mxu0 0.0
        %674 = vmatpush1.xpose.msra.mxu0 %v669
        %675 = vmatprep.subr.mxu0 0.0
        %676 = vmatpush1.xpose.msra.mxu0 %v671
        %677 = vmatprep.subr.mxu0 0.0
        %678 = vmatpush1.xpose.msra.mxu0 0.0
        %679 = vmatprep.subr.mxu0 0.0
        %680 = vmatpush1.xpose.msra.mxu0 0.0
        %681 = vmatprep.subr.mxu0 0.0
        %682 = vmatpush1.xpose.msra.mxu0 0.0
        %683 = vmatprep.subr.mxu0 0.0
        %684 = vmatpush1.xpose.msra.mxu0 0.0
        %685 = vmatprep.subr.mxu0 0.0
        %686 = vmatpush1.xpose.msra.mxu0 0.0
        %687 = vmatprep.subr.mxu0 0.0
        %688 = vmatpush1.xpose.msra.mxu0 0.0
        %689 = vmatprep.subr.mxu0 0.0
        %690 = vmatpush1.xpose.msra.mxu0 0.0
        %691 = vmatprep.subr.mxu0 0.0
        %692 = vmatpush1.xpose.msra.mxu0 0.0
        %693 = vmatprep.subr.mxu0 0.0
        %694 = vmatpush1.xpose.msra.mxu0 0.0
        %695 = vmatprep.subr.mxu0 0.0
        %696 = vmatpush1.xpose.msra.mxu0 0.0
        %697 = vmatprep.subr.mxu0 0.0
        %698 = vmatpush1.xpose.msra.mxu0 0.0
        %699 = vmatprep.subr.mxu0 0.0
        %700 = vmatpush1.xpose.msra.mxu0 0.0
        %701 = vmatprep.subr.mxu0 0.0
        %702 = vmatpush1.xpose.msra.mxu0 0.0
        %703 = vmatprep.subr.mxu0 0.0
        %704 = vmatpush1.xpose.msra.mxu0 0.0
        %705 = vmatprep.subr.mxu0 0.0
        %706 = vmatpush1.xpose.msra.mxu0 0.0
        %707 = vmatprep.subr.mxu0 0.0
        %708 = vmatpush1.xpose.msra.mxu0 0.0
        %709 = vmatprep.subr.mxu0 0.0
        %710 = vmatpush1.xpose.msra.mxu0 0.0
        %711 = vmatprep.subr.mxu0 0.0
        %712 = vmatpush1.xpose.msra.mxu0 0.0
        %713 = vmatprep.subr.mxu0 0.0
        %714 = vmatpush1.xpose.msra.mxu0 0.0
        %715 = vmatprep.subr.mxu0 0.0
        %716 = vmatpush1.xpose.msra.mxu0 0.0
        %717 = vmatprep.subr.mxu0 0.0
        %718 = vmatpush1.xpose.msra.mxu0 0.0
        %719 = vmatprep.subr.mxu0 0.0
        %720 = vmatpush1.xpose.msra.mxu0 0.0
        %721 = vmatprep.subr.mxu0 0.0
        %722 = vmatpush1.xpose.msra.mxu0 0.0
        %723 = vmatprep.subr.mxu0 0.0
        %724 = vmatpush1.xpose.msra.mxu0 0.0
        %725 = vmatprep.subr.mxu0 0.0
        %726 = vmatpush1.xpose.msra.mxu0 0.0
        %727 = vmatprep.subr.mxu0 0.0
        %728 = vmatpush1.xpose.msra.mxu0 0.0
        %729 = vmatprep.subr.mxu0 0.0
        %730 = vmatpush1.xpose.msra.mxu0 0.0
        %731 = vmatprep.subr.mxu0 0.0
        %732 = vmatpush1.xpose.msra.mxu0 0.0
        %733 = vmatprep.subr.mxu0 0.0
        %734 = vmatpush1.xpose.msra.mxu0 0.0
        %735 = vmatprep.subr.mxu0 0.0
        %736 = vmatpush1.xpose.msra.mxu0 0.0
        %737 = vmatprep.mubr.f32.mxu0 0.0
        %738 = vmatmul.mubr.f32.gmra.mrb[0].mxu0 %v665
        %v739 = vpop.f32.mrb[0].mxu0
        %v740 = vadd.f32 0.0, %v739
        %v741 = vpop.f32.mrb[0].mxu0
        %742 = vmatprep.mubr.f32.mxu0 0.0
        %743 = vmatmul.mubr.f32.gmra.mrb[0].mxu0 %v667
        %v744 = vpop.f32.mrb[0].mxu0
        %v745 = vadd.f32 0.0, %v744
        %v746 = vpop.f32.mrb[0].mxu0
        %747 = vdwg.mxu0
        %v748 = vmul.f32 %v740, 0.25
        %v749 = vmul.f32 %v745, 0.25
        %vm750 = vcmp.gt.f32.partialorder %v560, 0.5
        %v751 = vsel %vm750, 1, 0
        %v752 = vlaneseq
        %v753 = vshrl.u32 %v752, 7
        %v754 = vsub.s32 0, %v753
        %v755 = vrot.slane %v751, %v754
        %vm756 = vcmp.eq.s32.totalorder %v755, 1
        %v757 = vsel %vm756, -1e+09, %v748
        %v758 = vsel %vm756, -1e+09, %v749
        %v759 = vsel %vm664, %v757, -inf
        %760 = vmax.xlane.f32.xlu0 %v759
        %v761 = vpop.xlane.xlu0 %760
        %v762 = vsel %vm664, %v758, -inf
        %763 = vmax.xlane.f32.xlu0 %v762
        %v764 = vpop.xlane.xlu0 %763
        %v765 = vsub.f32 %v757, %v761
        %v766 = vsub.f32 %v758, %v764
        %v767 = vmul.f32 %v765, 1.442695
        %v768 = vpow.pop %v767
        %v769 = vmul.f32 %v766, 1.442695
        %v770 = vpow.pop %v769
        %v771 = vsel %vm664, %v768, 0.0
        %772 = vadd.xlane.f32.xlu0 %v771
        %v773 = vpop.xlane.xlu0 %772
        %v774 = vsel %vm664, %v770, 0.0
        %775 = vadd.xlane.f32.xlu0 %v774
        %v776 = vpop.xlane.xlu0 %775
        %v777 = vrcp.pop %v773
        %v778 = vrcp.pop %v776
        %v779 = vmul.f32 %v768, %v777
        %v780 = vmul.f32 %v770, %v778
        %781 = vrot.lane.b32.xlu0 %v650, 64
        %v782 = vpop.permute.xlu0 %781
        %783 = vrot.lane.b32.xlu0 %v655, 64
        %v784 = vpop.permute.xlu0 %783
        %v788 = vsel %vm664, %v779, 0
        %v791 = vsel %vm664, %v780, 0
        %793 = vmatprep.subr.mxu0 0.0
        %794 = vmatpush1.msra.mxu0 %v782
        %795 = vmatprep.subr.mxu0 0.0
        %796 = vmatpush1.msra.mxu0 %v784
        %797 = vmatprep.subr.mxu0 0.0
        %798 = vmatpush1.msra.mxu0 0.0
        %799 = vmatprep.subr.mxu0 0.0
        %800 = vmatpush1.msra.mxu0 0.0
        %801 = vmatprep.subr.mxu0 0.0
        %802 = vmatpush1.msra.mxu0 0.0
        %803 = vmatprep.subr.mxu0 0.0
        %804 = vmatpush1.msra.mxu0 0.0
        %805 = vmatprep.subr.mxu0 0.0
        %806 = vmatpush1.msra.mxu0 0.0
        %807 = vmatprep.subr.mxu0 0.0
        %808 = vmatpush1.msra.mxu0 0.0
        %809 = vmatprep.subr.mxu0 0.0
        %810 = vmatpush1.msra.mxu0 0.0
        %811 = vmatprep.subr.mxu0 0.0
        %812 = vmatpush1.msra.mxu0 0.0
        %813 = vmatprep.subr.mxu0 0.0
        %814 = vmatpush1.msra.mxu0 0.0
        %815 = vmatprep.subr.mxu0 0.0
        %816 = vmatpush1.msra.mxu0 0.0
        %817 = vmatprep.subr.mxu0 0.0
        %818 = vmatpush1.msra.mxu0 0.0
        %819 = vmatprep.subr.mxu0 0.0
        %820 = vmatpush1.msra.mxu0 0.0
        %821 = vmatprep.subr.mxu0 0.0
        %822 = vmatpush1.msra.mxu0 0.0
        %823 = vmatprep.subr.mxu0 0.0
        %824 = vmatpush1.msra.mxu0 0.0
        %825 = vmatprep.subr.mxu0 0.0
        %826 = vmatpush1.msra.mxu0 0.0
        %827 = vmatprep.subr.mxu0 0.0
        %828 = vmatpush1.msra.mxu0 0.0
        %829 = vmatprep.subr.mxu0 0.0
        %830 = vmatpush1.msra.mxu0 0.0
        %831 = vmatprep.subr.mxu0 0.0
        %832 = vmatpush1.msra.mxu0 0.0
        %833 = vmatprep.subr.mxu0 0.0
        %834 = vmatpush1.msra.mxu0 0.0
        %835 = vmatprep.subr.mxu0 0.0
        %836 = vmatpush1.msra.mxu0 0.0
        %837 = vmatprep.subr.mxu0 0.0
        %838 = vmatpush1.msra.mxu0 0.0
        %839 = vmatprep.subr.mxu0 0.0
        %840 = vmatpush1.msra.mxu0 0.0
        %841 = vmatprep.subr.mxu0 0.0
        %842 = vmatpush1.msra.mxu0 0.0
        %843 = vmatprep.subr.mxu0 0.0
        %844 = vmatpush1.msra.mxu0 0.0
        %845 = vmatprep.subr.mxu0 0.0
        %846 = vmatpush1.msra.mxu0 0.0
        %847 = vmatprep.subr.mxu0 0.0
        %848 = vmatpush1.msra.mxu0 0.0
        %849 = vmatprep.subr.mxu0 0.0
        %850 = vmatpush1.msra.mxu0 0.0
        %851 = vmatprep.subr.mxu0 0.0
        %852 = vmatpush1.msra.mxu0 0.0
        %853 = vmatprep.subr.mxu0 0.0
        %854 = vmatpush1.msra.mxu0 0.0
        %855 = vmatprep.subr.mxu0 0.0
        %856 = vmatpush1.msra.mxu0 0.0
        %857 = vmatprep.mubr.f32.mxu0 0.0
        %858 = vmatmul.mubr.f32.gmra.mrb[0].mxu0 %v788
        %v859 = vpop.f32.mrb[0].mxu0
        %v860 = vadd.f32 0.0, %v859
        %v861 = vpop.f32.mrb[0].mxu0
        %862 = vmatprep.mubr.f32.mxu0 0.0
        %863 = vmatmul.mubr.f32.gmra.mrb[0].mxu0 %v791
        %v864 = vpop.f32.mrb[0].mxu0
        %v865 = vadd.f32 0.0, %v864
        %v866 = vpop.f32.mrb[0].mxu0
        %867 = vdwg.mxu0
        %868 = vrot.lane.b32.xlu0 %v650, 112
        %v869 = vpop.permute.xlu0 %868
        %870 = vrot.lane.b32.xlu0 %v655, 112
        %v871 = vpop.permute.xlu0 %870
        %872 = vrot.lane.b32.xlu0 %v650, 80
        %v873 = vpop.permute.xlu0 %872
        %874 = vrot.lane.b32.xlu0 %v655, 80
        %v875 = vpop.permute.xlu0 %874
        %v876 = vsel %vm664, %v869, 0
        %v878 = vsel %vm664, %v871, 0
        %v880 = vsel %vm664, %v873, 0
        %v882 = vsel %vm664, %v875, 0
        %884 = vmatprep.subr.mxu0 0.0
        %885 = vmatpush1.xpose.msra.mxu0 %v880
        %886 = vmatprep.subr.mxu0 0.0
        %887 = vmatpush1.xpose.msra.mxu0 %v882
        %888 = vmatprep.subr.mxu0 0.0
        %889 = vmatpush1.xpose.msra.mxu0 0.0
        %890 = vmatprep.subr.mxu0 0.0
        %891 = vmatpush1.xpose.msra.mxu0 0.0
        %892 = vmatprep.subr.mxu0 0.0
        %893 = vmatpush1.xpose.msra.mxu0 0.0
        %894 = vmatprep.subr.mxu0 0.0
        %895 = vmatpush1.xpose.msra.mxu0 0.0
        %896 = vmatprep.subr.mxu0 0.0
        %897 = vmatpush1.xpose.msra.mxu0 0.0
        %898 = vmatprep.subr.mxu0 0.0
        %899 = vmatpush1.xpose.msra.mxu0 0.0
        %900 = vmatprep.subr.mxu0 0.0
        %901 = vmatpush1.xpose.msra.mxu0 0.0
        %902 = vmatprep.subr.mxu0 0.0
        %903 = vmatpush1.xpose.msra.mxu0 0.0
        %904 = vmatprep.subr.mxu0 0.0
        %905 = vmatpush1.xpose.msra.mxu0 0.0
        %906 = vmatprep.subr.mxu0 0.0
        %907 = vmatpush1.xpose.msra.mxu0 0.0
        %908 = vmatprep.subr.mxu0 0.0
        %909 = vmatpush1.xpose.msra.mxu0 0.0
        %910 = vmatprep.subr.mxu0 0.0
        %911 = vmatpush1.xpose.msra.mxu0 0.0
        %912 = vmatprep.subr.mxu0 0.0
        %913 = vmatpush1.xpose.msra.mxu0 0.0
        %914 = vmatprep.subr.mxu0 0.0
        %915 = vmatpush1.xpose.msra.mxu0 0.0
        %916 = vmatprep.subr.mxu0 0.0
        %917 = vmatpush1.xpose.msra.mxu0 0.0
        %918 = vmatprep.subr.mxu0 0.0
        %919 = vmatpush1.xpose.msra.mxu0 0.0
        %920 = vmatprep.subr.mxu0 0.0
        %921 = vmatpush1.xpose.msra.mxu0 0.0
        %922 = vmatprep.subr.mxu0 0.0
        %923 = vmatpush1.xpose.msra.mxu0 0.0
        %924 = vmatprep.subr.mxu0 0.0
        %925 = vmatpush1.xpose.msra.mxu0 0.0
        %926 = vmatprep.subr.mxu0 0.0
        %927 = vmatpush1.xpose.msra.mxu0 0.0
        %928 = vmatprep.subr.mxu0 0.0
        %929 = vmatpush1.xpose.msra.mxu0 0.0
        %930 = vmatprep.subr.mxu0 0.0
        %931 = vmatpush1.xpose.msra.mxu0 0.0
        %932 = vmatprep.subr.mxu0 0.0
        %933 = vmatpush1.xpose.msra.mxu0 0.0
        %934 = vmatprep.subr.mxu0 0.0
        %935 = vmatpush1.xpose.msra.mxu0 0.0
        %936 = vmatprep.subr.mxu0 0.0
        %937 = vmatpush1.xpose.msra.mxu0 0.0
        %938 = vmatprep.subr.mxu0 0.0
        %939 = vmatpush1.xpose.msra.mxu0 0.0
        %940 = vmatprep.subr.mxu0 0.0
        %941 = vmatpush1.xpose.msra.mxu0 0.0
        %942 = vmatprep.subr.mxu0 0.0
        %943 = vmatpush1.xpose.msra.mxu0 0.0
        %944 = vmatprep.subr.mxu0 0.0
        %945 = vmatpush1.xpose.msra.mxu0 0.0
        %946 = vmatprep.subr.mxu0 0.0
        %947 = vmatpush1.xpose.msra.mxu0 0.0
        %948 = vmatprep.mubr.f32.mxu0 0.0
        %949 = vmatmul.mubr.f32.gmra.mrb[0].mxu0 %v876
        %v950 = vpop.f32.mrb[0].mxu0
        %v951 = vadd.f32 0.0, %v950
        %v952 = vpop.f32.mrb[0].mxu0
        %953 = vmatprep.mubr.f32.mxu0 0.0
        %954 = vmatmul.mubr.f32.gmra.mrb[0].mxu0 %v878
        %v955 = vpop.f32.mrb[0].mxu0
        %v956 = vadd.f32 0.0, %v955
        %v957 = vpop.f32.mrb[0].mxu0
        %958 = vdwg.mxu0
        %v959 = vmul.f32 %v951, 0.25
        %v960 = vmul.f32 %v956, 0.25
        %v961 = vsel %vm756, -1e+09, %v959
        %v962 = vsel %vm756, -1e+09, %v960
        %v963 = vsel %vm664, %v961, -inf
        %964 = vmax.xlane.f32.xlu0 %v963
        %v965 = vpop.xlane.xlu0 %964
        %v966 = vsel %vm664, %v962, -inf
        %967 = vmax.xlane.f32.xlu0 %v966
        %v968 = vpop.xlane.xlu0 %967
        %v969 = vsub.f32 %v961, %v965
        %v970 = vsub.f32 %v962, %v968
        %v971 = vmul.f32 %v969, 1.442695
        %v972 = vpow.pop %v971
        %v973 = vmul.f32 %v970, 1.442695
        %v974 = vpow.pop %v973
        %v975 = vsel %vm664, %v972, 0.0
        %976 = vadd.xlane.f32.xlu0 %v975
        %v977 = vpop.xlane.xlu0 %976
        %v978 = vsel %vm664, %v974, 0.0
        %979 = vadd.xlane.f32.xlu0 %v978
        %v980 = vpop.xlane.xlu0 %979
        %v981 = vrcp.pop %v977
        %v982 = vrcp.pop %v980
        %v983 = vmul.f32 %v972, %v981
        %v984 = vmul.f32 %v974, %v982
        %985 = vrot.lane.b32.xlu0 %v650, 48
        %v986 = vpop.permute.xlu0 %985
        %987 = vrot.lane.b32.xlu0 %v655, 48
        %v988 = vpop.permute.xlu0 %987
        %v992 = vsel %vm664, %v983, 0
        %v995 = vsel %vm664, %v984, 0
        %997 = vmatprep.subr.mxu0 0.0
        %998 = vmatpush1.msra.mxu0 %v986
        %999 = vmatprep.subr.mxu0 0.0
        %1000 = vmatpush1.msra.mxu0 %v988
        %1001 = vmatprep.subr.mxu0 0.0
        %1002 = vmatpush1.msra.mxu0 0.0
        %1003 = vmatprep.subr.mxu0 0.0
        %1004 = vmatpush1.msra.mxu0 0.0
        %1005 = vmatprep.subr.mxu0 0.0
        %1006 = vmatpush1.msra.mxu0 0.0
        %1007 = vmatprep.subr.mxu0 0.0
        %1008 = vmatpush1.msra.mxu0 0.0
        %1009 = vmatprep.subr.mxu0 0.0
        %1010 = vmatpush1.msra.mxu0 0.0
        %1011 = vmatprep.subr.mxu0 0.0
        %1012 = vmatpush1.msra.mxu0 0.0
        %1013 = vmatprep.subr.mxu0 0.0
        %1014 = vmatpush1.msra.mxu0 0.0
        %1015 = vmatprep.subr.mxu0 0.0
        %1016 = vmatpush1.msra.mxu0 0.0
        %1017 = vmatprep.subr.mxu0 0.0
        %1018 = vmatpush1.msra.mxu0 0.0
        %1019 = vmatprep.subr.mxu0 0.0
        %1020 = vmatpush1.msra.mxu0 0.0
        %1021 = vmatprep.subr.mxu0 0.0
        %1022 = vmatpush1.msra.mxu0 0.0
        %1023 = vmatprep.subr.mxu0 0.0
        %1024 = vmatpush1.msra.mxu0 0.0
        %1025 = vmatprep.subr.mxu0 0.0
        %1026 = vmatpush1.msra.mxu0 0.0
        %1027 = vmatprep.subr.mxu0 0.0
        %1028 = vmatpush1.msra.mxu0 0.0
        %1029 = vmatprep.subr.mxu0 0.0
        %1030 = vmatpush1.msra.mxu0 0.0
        %1031 = vmatprep.subr.mxu0 0.0
        %1032 = vmatpush1.msra.mxu0 0.0
        %1033 = vmatprep.subr.mxu0 0.0
        %1034 = vmatpush1.msra.mxu0 0.0
        %1035 = vmatprep.subr.mxu0 0.0
        %1036 = vmatpush1.msra.mxu0 0.0
        %1037 = vmatprep.subr.mxu0 0.0
        %1038 = vmatpush1.msra.mxu0 0.0
        %1039 = vmatprep.subr.mxu0 0.0
        %1040 = vmatpush1.msra.mxu0 0.0
        %1041 = vmatprep.subr.mxu0 0.0
        %1042 = vmatpush1.msra.mxu0 0.0
        %1043 = vmatprep.subr.mxu0 0.0
        %1044 = vmatpush1.msra.mxu0 0.0
        %1045 = vmatprep.subr.mxu0 0.0
        %1046 = vmatpush1.msra.mxu0 0.0
        %1047 = vmatprep.subr.mxu0 0.0
        %1048 = vmatpush1.msra.mxu0 0.0
        %1049 = vmatprep.subr.mxu0 0.0
        %1050 = vmatpush1.msra.mxu0 0.0
        %1051 = vmatprep.subr.mxu0 0.0
        %1052 = vmatpush1.msra.mxu0 0.0
        %1053 = vmatprep.subr.mxu0 0.0
        %1054 = vmatpush1.msra.mxu0 0.0
        %1055 = vmatprep.subr.mxu0 0.0
        %1056 = vmatpush1.msra.mxu0 0.0
        %1057 = vmatprep.subr.mxu0 0.0
        %1058 = vmatpush1.msra.mxu0 0.0
        %1059 = vmatprep.subr.mxu0 0.0
        %1060 = vmatpush1.msra.mxu0 0.0
        %1061 = vmatprep.mubr.f32.mxu0 0.0
        %1062 = vmatmul.mubr.f32.gmra.mrb[0].mxu0 %v992
        %v1063 = vpop.f32.mrb[0].mxu0
        %v1064 = vadd.f32 0.0, %v1063
        %v1065 = vpop.f32.mrb[0].mxu0
        %1066 = vmatprep.mubr.f32.mxu0 0.0
        %1067 = vmatmul.mubr.f32.gmra.mrb[0].mxu0 %v995
        %v1068 = vpop.f32.mrb[0].mxu0
        %v1069 = vadd.f32 0.0, %v1068
        %v1070 = vpop.f32.mrb[0].mxu0
        %1071 = vdwg.mxu0
        %1074 = vrot.lane.b32.xlu0 %v1064, 16
        %v1075 = vpop.permute.xlu0 %1074
        %1076 = vrot.lane.b32.xlu0 %v1069, 16
        %v1077 = vpop.permute.xlu0 %1076
        %v1080 = vsel %vm664, %v860, %v1075
        %v1081 = vsel %vm664, %v865, %v1077
        %v1082 = vld [vmem:[%s6] sm:$0xff]
        %v1083 = vld [vmem:[%s6 + $0x8] sm:$0xff]
        %v1084 = vld [vmem:[%s6 + $0x10] sm:$0xff]
        %v1085 = vld [vmem:[%s6 + $0x18] sm:$0xff]
        %v1086 = vld [vmem:[%s7] sm:$0x1]
        %v1088 = vlaneseq
        %v1089 = vshrl.u32 %v1088, 7
        %v1090 = vsub.s32 0, %v1089
        %v1091 = vrot.slane %v1086, %v1090
        %v1094 = vsel %vm576, %v1080, 0
        %v1097 = vsel %vm576, %v1081, 0
        %1099 = vmatprep.subr.mxu0 0.0
        %1100 = vmatpush1.msra.mxu0 %v1082
        %1101 = vmatprep.subr.mxu0 0.0
        %1102 = vmatpush1.msra.mxu0 %v1083
        %1103 = vmatprep.subr.mxu0 0.0
        %1104 = vmatpush1.msra.mxu0 %v1084
        %1105 = vmatprep.subr.mxu0 0.0
        %1106 = vmatpush1.msra.mxu0 %v1085
        %1107 = vmatprep.subr.mxu0 0.0
        %1108 = vmatpush1.msra.mxu0 0.0
        %1109 = vmatprep.subr.mxu0 0.0
        %1110 = vmatpush1.msra.mxu0 0.0
        %1111 = vmatprep.subr.mxu0 0.0
        %1112 = vmatpush1.msra.mxu0 0.0
        %1113 = vmatprep.subr.mxu0 0.0
        %1114 = vmatpush1.msra.mxu0 0.0
        %1115 = vmatprep.subr.mxu0 0.0
        %1116 = vmatpush1.msra.mxu0 0.0
        %1117 = vmatprep.subr.mxu0 0.0
        %1118 = vmatpush1.msra.mxu0 0.0
        %1119 = vmatprep.subr.mxu0 0.0
        %1120 = vmatpush1.msra.mxu0 0.0
        %1121 = vmatprep.subr.mxu0 0.0
        %1122 = vmatpush1.msra.mxu0 0.0
        %1123 = vmatprep.subr.mxu0 0.0
        %1124 = vmatpush1.msra.mxu0 0.0
        %1125 = vmatprep.subr.mxu0 0.0
        %1126 = vmatpush1.msra.mxu0 0.0
        %1127 = vmatprep.subr.mxu0 0.0
        %1128 = vmatpush1.msra.mxu0 0.0
        %1129 = vmatprep.subr.mxu0 0.0
        %1130 = vmatpush1.msra.mxu0 0.0
        %1131 = vmatprep.subr.mxu0 0.0
        %1132 = vmatpush1.msra.mxu0 0.0
        %1133 = vmatprep.subr.mxu0 0.0
        %1134 = vmatpush1.msra.mxu0 0.0
        %1135 = vmatprep.subr.mxu0 0.0
        %1136 = vmatpush1.msra.mxu0 0.0
        %1137 = vmatprep.subr.mxu0 0.0
        %1138 = vmatpush1.msra.mxu0 0.0
        %1139 = vmatprep.subr.mxu0 0.0
        %1140 = vmatpush1.msra.mxu0 0.0
        %1141 = vmatprep.subr.mxu0 0.0
        %1142 = vmatpush1.msra.mxu0 0.0
        %1143 = vmatprep.subr.mxu0 0.0
        %1144 = vmatpush1.msra.mxu0 0.0
        %1145 = vmatprep.subr.mxu0 0.0
        %1146 = vmatpush1.msra.mxu0 0.0
        %1147 = vmatprep.subr.mxu0 0.0
        %1148 = vmatpush1.msra.mxu0 0.0
        %1149 = vmatprep.subr.mxu0 0.0
        %1150 = vmatpush1.msra.mxu0 0.0
        %1151 = vmatprep.subr.mxu0 0.0
        %1152 = vmatpush1.msra.mxu0 0.0
        %1153 = vmatprep.subr.mxu0 0.0
        %1154 = vmatpush1.msra.mxu0 0.0
        %1155 = vmatprep.subr.mxu0 0.0
        %1156 = vmatpush1.msra.mxu0 0.0
        %1157 = vmatprep.subr.mxu0 0.0
        %1158 = vmatpush1.msra.mxu0 0.0
        %1159 = vmatprep.subr.mxu0 0.0
        %1160 = vmatpush1.msra.mxu0 0.0
        %1161 = vmatprep.subr.mxu0 0.0
        %1162 = vmatpush1.msra.mxu0 0.0
        %1163 = vmatprep.mubr.f32.mxu0 0.0
        %1164 = vmatmul.mubr.f32.gmra.mrb[0].mxu0 %v1094
        %v1165 = vpop.f32.mrb[0].mxu0
        %v1166 = vadd.f32 %v1091, %v1165
        %v1167 = vpop.f32.mrb[0].mxu0
        %1168 = vmatprep.mubr.f32.mxu0 0.0
        %1169 = vmatmul.mubr.f32.gmra.mrb[0].mxu0 %v1097
        %v1170 = vpop.f32.mrb[0].mxu0
        %v1171 = vadd.f32 %v1091, %v1170
        %v1172 = vpop.f32.mrb[0].mxu0
        %1173 = vdwg.mxu0
        %v1174 = vadd.f32 %v1166, %v558
        %v1175 = vadd.f32 %v1171, %v559
        %v1176 = vld [vmem:[%s8] sm:$0x1]
        %v1177 = vld [vmem:[%s9] sm:$0x1]
        %v1178 = vsel %vm576, %v1174, 0.0
        %1179 = vadd.xlane.f32.xlu0 %v1178
        %v1180 = vpop.xlane.xlu0 %1179
        %v1181 = vsel %vm576, %v1175, 0.0
        %1182 = vadd.xlane.f32.xlu0 %v1181
        %v1183 = vpop.xlane.xlu0 %1182
        %v1184 = vrcp.pop 32.0
        %v1185 = vmul.f32 %v1180, %v1184
        %v1186 = vmul.f32 %v1183, %v1184
        %v1187 = vsub.f32 %v1174, %v1185
        %v1188 = vsub.f32 %v1175, %v1186
        %v1189 = vmul.f32 %v1187, %v1187
        %v1190 = vmul.f32 %v1188, %v1188
        %v1191 = vsel %vm576, %v1189, 0.0
        %1192 = vadd.xlane.f32.xlu0 %v1191
        %v1193 = vpop.xlane.xlu0 %1192
        %v1194 = vsel %vm576, %v1190, 0.0
        %1195 = vadd.xlane.f32.xlu0 %v1194
        %v1196 = vpop.xlane.xlu0 %1195
        %v1197 = vmul.f32 %v1193, %v1184
        %v1198 = vmul.f32 %v1196, %v1184
        %v1199 = vadd.f32 %v1197, 1e-05
        %v1200 = vadd.f32 %v1198, 1e-05
        %v1201 = vrsqrt.pop %v1199
        %v1202 = vrsqrt.pop %v1200
        %v1203 = vmul.f32 %v1187, %v1201
        %v1204 = vmul.f32 %v1188, %v1202
        %v1206 = vlaneseq
        %v1207 = vshrl.u32 %v1206, 7
        %v1208 = vsub.s32 0, %v1207
        %v1209 = vrot.slane %v1176, %v1208
        %v1211 = vmul.f32 %v1203, %v1209
        %v1212 = vmul.f32 %v1204, %v1209
        %v1214 = vlaneseq
        %v1215 = vshrl.u32 %v1214, 7
        %v1216 = vsub.s32 0, %v1215
        %v1217 = vrot.slane %v1177, %v1216
        %v1219 = vadd.f32 %v1211, %v1217
        %v1220 = vadd.f32 %v1212, %v1217
        %1222 = vset.pattern.permute.xlu0 0
        %1223 = vperm.xlu0 %1222, %v563
        %v1224 = vpop.permute.xlu0 %1223
        %1227 = vset.pattern.permute.xlu0 0
        %1228 = vperm.xlu0 %1227, %v564
        %v1229 = vpop.permute.xlu0 %1228
        %v1231 = vmul.f32 %v1219, %v1224
        %v1232 = vmul.f32 %v1220, %v1229
        %vm1235 = vcmask 1043456
        %v1236 = vrot.slane %v1231, 4
        %v1237 = vrot.slane %v1232, 4
        %v1238 = vsel %vm1235, %v1236, %v1237
        %v1242 = vsel %vm1235, 0.0, %v1236
        %v1243 = vsel %vm1235, %v1237, 0.0
        %vm1246 = vcmask 1046528
        %v1247 = vrot.slane %v1242, 1
        %v1248 = vrot.slane %v1238, 1
        %v1249 = vsel %vm1246, %v1247, %v1248
        %v1250 = vrot.slane %v1243, 1
        %v1251 = vsel %vm1246, %v1248, %v1250
        %1252 = vrot.lane.b32.xlu0 %v1249, 32
        %v1253 = vpop.permute.xlu0 %1252
        %1254 = vrot.lane.b32.xlu0 %v1251, 32
        %v1255 = vpop.permute.xlu0 %1254
        %vm1258 = vcmask 1045504
        %v1259 = vrot.slane %v1242, 2
        %v1260 = vrot.slane %v1238, 2
        %v1261 = vsel %vm1258, %v1259, %v1260
        %v1262 = vrot.slane %v1243, 2
        %v1263 = vsel %vm1258, %v1260, %v1262
        %1264 = vrot.lane.b32.xlu0 %v1261, 64
        %v1265 = vpop.permute.xlu0 %1264
        %1266 = vrot.lane.b32.xlu0 %v1263, 64
        %v1267 = vpop.permute.xlu0 %1266
        %vm1270 = vcmask 1044480
        %v1271 = vrot.slane %v1242, 3
        %v1272 = vrot.slane %v1238, 3
        %v1273 = vsel %vm1270, %v1271, %v1272
        %v1274 = vrot.slane %v1243, 3
        %v1275 = vsel %vm1270, %v1272, %v1274
        %1276 = vrot.lane.b32.xlu0 %v1273, 96
        %v1277 = vpop.permute.xlu0 %1276
        %1278 = vrot.lane.b32.xlu0 %v1275, 96
        %v1279 = vpop.permute.xlu0 %1278
        %v1282 = vrot.slane %v1242, 4
        %v1283 = vrot.slane %v1238, 4
        %v1284 = vsel %vm1235, %v1282, %v1283
        %v1285 = vrot.slane %v1243, 4
        %v1286 = vsel %vm1235, %v1283, %v1285
        %vm1289 = vcmask 1042432
        %v1290 = vrot.slane %v1242, 5
        %v1291 = vrot.slane %v1238, 5
        %v1292 = vsel %vm1289, %v1290, %v1291
        %v1293 = vrot.slane %v1243, 5
        %v1294 = vsel %vm1289, %v1291, %v1293
        %1295 = vrot.lane.b32.xlu0 %v1292, 32
        %v1296 = vpop.permute.xlu0 %1295
        %1297 = vrot.lane.b32.xlu0 %v1294, 32
        %v1298 = vpop.permute.xlu0 %1297
        %vm1301 = vcmask 1041408
        %v1302 = vrot.slane %v1242, 6
        %v1303 = vrot.slane %v1238, 6
        %v1304 = vsel %vm1301, %v1302, %v1303
        %v1305 = vrot.slane %v1243, 6
        %v1306 = vsel %vm1301, %v1303, %v1305
        %1307 = vrot.lane.b32.xlu0 %v1304, 64
        %v1308 = vpop.permute.xlu0 %1307
        %1309 = vrot.lane.b32.xlu0 %v1306, 64
        %v1310 = vpop.permute.xlu0 %1309
        %vm1313 = vcmask 1040384
        %v1314 = vrot.slane %v1242, 7
        %v1315 = vrot.slane %v1238, 7
        %v1316 = vsel %vm1313, %v1314, %v1315
        %v1317 = vrot.slane %v1243, 7
        %v1318 = vsel %vm1313, %v1315, %v1317
        %1319 = vrot.lane.b32.xlu0 %v1316, 96
        %v1320 = vpop.permute.xlu0 %1319
        %1321 = vrot.lane.b32.xlu0 %v1318, 96
        %v1322 = vpop.permute.xlu0 %1321
        %v1325 = vsel %vm576, %v1242, %v1253
        %v1326 = vsel %vm576, %v1238, %v1255
        %vm1327 = vcmask 523264
        %v1328 = vsel %vm1327, %v1325, %v1265
        %v1329 = vsel %vm1327, %v1326, %v1267
        %vm1330 = vcmask 785408
        %v1331 = vsel %vm1330, %v1328, %v1277
        %v1332 = vsel %vm1330, %v1329, %v1279
        %v1333 = vsel %vm576, %v1284, %v1296
        %v1334 = vsel %vm576, %v1286, %v1298
        %v1335 = vsel %vm1327, %v1333, %v1308
        %v1336 = vsel %vm1327, %v1334, %v1310
        %v1337 = vsel %vm1330, %v1335, %v1320
        %v1338 = vsel %vm1330, %v1336, %v1322
        %v1339 = vld [vmem:[%s10] sm:$0xff]
        %v1340 = vld [vmem:[%s10 + $0x8] sm:$0xff]
        %v1341 = vld [vmem:[%s10 + $0x10] sm:$0xff]
        %v1342 = vld [vmem:[%s10 + $0x18] sm:$0xff]
        %v1343 = vld [vmem:[%s10 + $0x20] sm:$0xff]
        %v1344 = vld [vmem:[%s10 + $0x28] sm:$0xff]
        %v1345 = vld [vmem:[%s10 + $0x30] sm:$0xff]
        %v1346 = vld [vmem:[%s10 + $0x38] sm:$0xff]
        %v1347 = vld [vmem:[%s10 + $0x40] sm:$0xff]
        %v1348 = vld [vmem:[%s10 + $0x48] sm:$0xff]
        %v1349 = vld [vmem:[%s10 + $0x50] sm:$0xff]
        %v1350 = vld [vmem:[%s10 + $0x58] sm:$0xff]
        %v1351 = vld [vmem:[%s10 + $0x60] sm:$0xff]
        %v1352 = vld [vmem:[%s10 + $0x68] sm:$0xff]
        %v1353 = vld [vmem:[%s10 + $0x70] sm:$0xff]
        %v1354 = vld [vmem:[%s10 + $0x78] sm:$0xff]
        %v1355 = vld [vmem:[%s10 + $0x80] sm:$0xff]
        %v1356 = vld [vmem:[%s10 + $0x88] sm:$0xff]
        %v1357 = vld [vmem:[%s10 + $0x90] sm:$0xff]
        %v1358 = vld [vmem:[%s10 + $0x98] sm:$0xff]
        %v1359 = vld [vmem:[%s10 + $0xa0] sm:$0xff]
        %v1360 = vld [vmem:[%s10 + $0xa8] sm:$0xff]
        %v1361 = vld [vmem:[%s10 + $0xb0] sm:$0xff]
        %v1362 = vld [vmem:[%s10 + $0xb8] sm:$0xff]
        %v1363 = vld [vmem:[%s10 + $0xc0] sm:$0xff]
        %v1364 = vld [vmem:[%s10 + $0xc8] sm:$0xff]
        %v1365 = vld [vmem:[%s10 + $0xd0] sm:$0xff]
        %v1366 = vld [vmem:[%s10 + $0xd8] sm:$0xff]
        %v1367 = vld [vmem:[%s10 + $0xe0] sm:$0xff]
        %v1368 = vld [vmem:[%s10 + $0xe8] sm:$0xff]
        %v1369 = vld [vmem:[%s10 + $0xf0] sm:$0xff]
        %v1370 = vld [vmem:[%s10 + $0xf8] sm:$0xff]
        %v1371 = vld [vmem:[%s10 + $0x100] sm:$0xff]
        %v1372 = vld [vmem:[%s10 + $0x108] sm:$0xff]
        %v1373 = vld [vmem:[%s10 + $0x110] sm:$0xff]
        %v1374 = vld [vmem:[%s10 + $0x118] sm:$0xff]
        %v1375 = vld [vmem:[%s11] sm:$0x1]
        %v1377 = vlaneseq
        %v1378 = vshrl.u32 %v1377, 7
        %v1379 = vsub.s32 0, %v1378
        %v1380 = vrot.slane %v1375, %v1379
        %v1382 = vsel %vm576, %v1238, 0
        %v1384 = vsel %vm576, %v1243, 0
        %1386 = vmatprep.subr.mxu0 0.0
        %1387 = vmatpush1.msra.mxu0 %v1339
        %1388 = vmatprep.subr.mxu0 0.0
        %1389 = vmatpush1.msra.mxu0 %v1340
        %1390 = vmatprep.subr.mxu0 0.0
        %1391 = vmatpush1.msra.mxu0 %v1341
        %1392 = vmatprep.subr.mxu0 0.0
        %1393 = vmatpush1.msra.mxu0 %v1342
        %1394 = vmatprep.subr.mxu0 0.0
        %1395 = vmatpush1.msra.mxu0 %v1343
        %1396 = vmatprep.subr.mxu0 0.0
        %1397 = vmatpush1.msra.mxu0 %v1344
        %1398 = vmatprep.subr.mxu0 0.0
        %1399 = vmatpush1.msra.mxu0 %v1345
        %1400 = vmatprep.subr.mxu0 0.0
        %1401 = vmatpush1.msra.mxu0 %v1346
        %1402 = vmatprep.subr.mxu0 0.0
        %1403 = vmatpush1.msra.mxu0 %v1347
        %1404 = vmatprep.subr.mxu0 0.0
        %1405 = vmatpush1.msra.mxu0 %v1348
        %1406 = vmatprep.subr.mxu0 0.0
        %1407 = vmatpush1.msra.mxu0 %v1349
        %1408 = vmatprep.subr.mxu0 0.0
        %1409 = vmatpush1.msra.mxu0 %v1350
        %1410 = vmatprep.subr.mxu0 0.0
        %1411 = vmatpush1.msra.mxu0 %v1351
        %1412 = vmatprep.subr.mxu0 0.0
        %1413 = vmatpush1.msra.mxu0 %v1352
        %1414 = vmatprep.subr.mxu0 0.0
        %1415 = vmatpush1.msra.mxu0 %v1353
        %1416 = vmatprep.subr.mxu0 0.0
        %1417 = vmatpush1.msra.mxu0 %v1354
        %1418 = vmatprep.subr.mxu0 0.0
        %1419 = vmatpush1.msra.mxu0 %v1355
        %1420 = vmatprep.subr.mxu0 0.0
        %1421 = vmatpush1.msra.mxu0 %v1356
        %1422 = vmatprep.subr.mxu0 0.0
        %1423 = vmatpush1.msra.mxu0 %v1357
        %1424 = vmatprep.subr.mxu0 0.0
        %1425 = vmatpush1.msra.mxu0 %v1358
        %1426 = vmatprep.subr.mxu0 0.0
        %1427 = vmatpush1.msra.mxu0 %v1359
        %1428 = vmatprep.subr.mxu0 0.0
        %1429 = vmatpush1.msra.mxu0 %v1360
        %1430 = vmatprep.subr.mxu0 0.0
        %1431 = vmatpush1.msra.mxu0 %v1361
        %1432 = vmatprep.subr.mxu0 0.0
        %1433 = vmatpush1.msra.mxu0 %v1362
        %1434 = vmatprep.subr.mxu0 0.0
        %1435 = vmatpush1.msra.mxu0 %v1363
        %1436 = vmatprep.subr.mxu0 0.0
        %1437 = vmatpush1.msra.mxu0 %v1364
        %1438 = vmatprep.subr.mxu0 0.0
        %1439 = vmatpush1.msra.mxu0 %v1365
        %1440 = vmatprep.subr.mxu0 0.0
        %1441 = vmatpush1.msra.mxu0 %v1366
        %1442 = vmatprep.subr.mxu0 0.0
        %1443 = vmatpush1.msra.mxu0 %v1367
        %1444 = vmatprep.subr.mxu0 0.0
        %1445 = vmatpush1.msra.mxu0 %v1368
        %1446 = vmatprep.subr.mxu0 0.0
        %1447 = vmatpush1.msra.mxu0 %v1369
        %1448 = vmatprep.subr.mxu0 0.0
        %1449 = vmatpush1.msra.mxu0 %v1370
        %1450 = vmatprep.mubr.f32.mxu0 %v1337
        %1451 = vmatmul.mubr.f32.gmra.mrb[0].mxu0 %v1331
        %v1452 = vpop.f32.mrb[0].mxu0
        %v1453 = vadd.f32 %v1380, %v1452
        %v1454 = vpop.f32.mrb[0].mxu0
        %1455 = vmatprep.mubr.f32.mxu0 %v1338
        %1456 = vmatmul.mubr.f32.gmra.mrb[0].mxu0 %v1332
        %v1457 = vpop.f32.mrb[0].mxu0
        %v1458 = vadd.f32 %v1380, %v1457
        %v1459 = vpop.f32.mrb[0].mxu0
        %1460 = vdwg.mxu0
        %1461 = vmatprep.subr.mxu0 0.0
        %1462 = vmatpush1.msra.mxu0 %v1371
        %1463 = vmatprep.subr.mxu0 0.0
        %1464 = vmatpush1.msra.mxu0 %v1372
        %1465 = vmatprep.subr.mxu0 0.0
        %1466 = vmatpush1.msra.mxu0 %v1373
        %1467 = vmatprep.subr.mxu0 0.0
        %1468 = vmatpush1.msra.mxu0 %v1374
        %1469 = vmatprep.subr.mxu0 0.0
        %1470 = vmatpush1.msra.mxu0 0.0
        %1471 = vmatprep.subr.mxu0 0.0
        %1472 = vmatpush1.msra.mxu0 0.0
        %1473 = vmatprep.subr.mxu0 0.0
        %1474 = vmatpush1.msra.mxu0 0.0
        %1475 = vmatprep.subr.mxu0 0.0
        %1476 = vmatpush1.msra.mxu0 0.0
        %1477 = vmatprep.subr.mxu0 0.0
        %1478 = vmatpush1.msra.mxu0 0.0
        %1479 = vmatprep.subr.mxu0 0.0
        %1480 = vmatpush1.msra.mxu0 0.0
        %1481 = vmatprep.subr.mxu0 0.0
        %1482 = vmatpush1.msra.mxu0 0.0
        %1483 = vmatprep.subr.mxu0 0.0
        %1484 = vmatpush1.msra.mxu0 0.0
        %1485 = vmatprep.subr.mxu0 0.0
        %1486 = vmatpush1.msra.mxu0 0.0
        %1487 = vmatprep.subr.mxu0 0.0
        %1488 = vmatpush1.msra.mxu0 0.0
        %1489 = vmatprep.subr.mxu0 0.0
        %1490 = vmatpush1.msra.mxu0 0.0
        %1491 = vmatprep.subr.mxu0 0.0
        %1492 = vmatpush1.msra.mxu0 0.0
        %1493 = vmatprep.subr.mxu0 0.0
        %1494 = vmatpush1.msra.mxu0 0.0
        %1495 = vmatprep.subr.mxu0 0.0
        %1496 = vmatpush1.msra.mxu0 0.0
        %1497 = vmatprep.subr.mxu0 0.0
        %1498 = vmatpush1.msra.mxu0 0.0
        %1499 = vmatprep.subr.mxu0 0.0
        %1500 = vmatpush1.msra.mxu0 0.0
        %1501 = vmatprep.subr.mxu0 0.0
        %1502 = vmatpush1.msra.mxu0 0.0
        %1503 = vmatprep.subr.mxu0 0.0
        %1504 = vmatpush1.msra.mxu0 0.0
        %1505 = vmatprep.subr.mxu0 0.0
        %1506 = vmatpush1.msra.mxu0 0.0
        %1507 = vmatprep.subr.mxu0 0.0
        %1508 = vmatpush1.msra.mxu0 0.0
        %1509 = vmatprep.subr.mxu0 0.0
        %1510 = vmatpush1.msra.mxu0 0.0
        %1511 = vmatprep.subr.mxu0 0.0
        %1512 = vmatpush1.msra.mxu0 0.0
        %1513 = vmatprep.subr.mxu0 0.0
        %1514 = vmatpush1.msra.mxu0 0.0
        %1515 = vmatprep.subr.mxu0 0.0
        %1516 = vmatpush1.msra.mxu0 0.0
        %1517 = vmatprep.subr.mxu0 0.0
        %1518 = vmatpush1.msra.mxu0 0.0
        %1519 = vmatprep.subr.mxu0 0.0
        %1520 = vmatpush1.msra.mxu0 0.0
        %1521 = vmatprep.subr.mxu0 0.0
        %1522 = vmatpush1.msra.mxu0 0.0
        %1523 = vmatprep.subr.mxu0 0.0
        %1524 = vmatpush1.msra.mxu0 0.0
        %1525 = vmatprep.mubr.f32.mxu0 0.0
        %1526 = vmatmul.mubr.f32.gmra.mrb[0].mxu0 %v1382
        %v1527 = vpop.f32.mrb[0].mxu0
        %v1528 = vadd.f32 %v1453, %v1527
        %v1529 = vpop.f32.mrb[0].mxu0
        %1530 = vmatprep.mubr.f32.mxu0 0.0
        %1531 = vmatmul.mubr.f32.gmra.mrb[0].mxu0 %v1384
        %v1532 = vpop.f32.mrb[0].mxu0
        %v1533 = vadd.f32 %v1458, %v1532
        %v1534 = vpop.f32.mrb[0].mxu0
        %1535 = vdwg.mxu0
        %v1536 = vmax.f32 %v1528, 0.0
        %v1537 = vmax.f32 %v1533, 0.0
        %v1538 = vld [vmem:[%s12] sm:$0xff]
        %v1539 = vld [vmem:[%s12 + $0x8] sm:$0xff]
        %v1540 = vld [vmem:[%s12 + $0x10] sm:$0xff]
        %v1541 = vld [vmem:[%s12 + $0x18] sm:$0xff]
        %v1542 = vld [vmem:[%s12 + $0x20] sm:$0xff]
        %v1543 = vld [vmem:[%s12 + $0x28] sm:$0xff]
        %v1544 = vld [vmem:[%s12 + $0x30] sm:$0xff]
        %v1545 = vld [vmem:[%s12 + $0x38] sm:$0xff]
        %v1546 = vld [vmem:[%s13] sm:$0x1]
        %v1548 = vlaneseq
        %v1549 = vshrl.u32 %v1548, 7
        %v1550 = vsub.s32 0, %v1549
        %v1551 = vrot.slane %v1546, %v1550
        %v1554 = vsel %vm1327, %v1536, 0
        %v1557 = vsel %vm1327, %v1537, 0
        %1559 = vmatprep.subr.mxu0 0.0
        %1560 = vmatpush1.msra.mxu0 %v1538
        %1561 = vmatprep.subr.mxu0 0.0
        %1562 = vmatpush1.msra.mxu0 %v1539
        %1563 = vmatprep.subr.mxu0 0.0
        %1564 = vmatpush1.msra.mxu0 %v1540
        %1565 = vmatprep.subr.mxu0 0.0
        %1566 = vmatpush1.msra.mxu0 %v1541
        %1567 = vmatprep.subr.mxu0 0.0
        %1568 = vmatpush1.msra.mxu0 %v1542
        %1569 = vmatprep.subr.mxu0 0.0
        %1570 = vmatpush1.msra.mxu0 %v1543
        %1571 = vmatprep.subr.mxu0 0.0
        %1572 = vmatpush1.msra.mxu0 %v1544
        %1573 = vmatprep.subr.mxu0 0.0
        %1574 = vmatpush1.msra.mxu0 %v1545
        %1575 = vmatprep.subr.mxu0 0.0
        %1576 = vmatpush1.msra.mxu0 0.0
        %1577 = vmatprep.subr.mxu0 0.0
        %1578 = vmatpush1.msra.mxu0 0.0
        %1579 = vmatprep.subr.mxu0 0.0
        %1580 = vmatpush1.msra.mxu0 0.0
        %1581 = vmatprep.subr.mxu0 0.0
        %1582 = vmatpush1.msra.mxu0 0.0
        %1583 = vmatprep.subr.mxu0 0.0
        %1584 = vmatpush1.msra.mxu0 0.0
        %1585 = vmatprep.subr.mxu0 0.0
        %1586 = vmatpush1.msra.mxu0 0.0
        %1587 = vmatprep.subr.mxu0 0.0
        %1588 = vmatpush1.msra.mxu0 0.0
        %1589 = vmatprep.subr.mxu0 0.0
        %1590 = vmatpush1.msra.mxu0 0.0
        %1591 = vmatprep.subr.mxu0 0.0
        %1592 = vmatpush1.msra.mxu0 0.0
        %1593 = vmatprep.subr.mxu0 0.0
        %1594 = vmatpush1.msra.mxu0 0.0
        %1595 = vmatprep.subr.mxu0 0.0
        %1596 = vmatpush1.msra.mxu0 0.0
        %1597 = vmatprep.subr.mxu0 0.0
        %1598 = vmatpush1.msra.mxu0 0.0
        %1599 = vmatprep.subr.mxu0 0.0
        %1600 = vmatpush1.msra.mxu0 0.0
        %1601 = vmatprep.subr.mxu0 0.0
        %1602 = vmatpush1.msra.mxu0 0.0
        %1603 = vmatprep.subr.mxu0 0.0
        %1604 = vmatpush1.msra.mxu0 0.0
        %1605 = vmatprep.subr.mxu0 0.0
        %1606 = vmatpush1.msra.mxu0 0.0
        %1607 = vmatprep.subr.mxu0 0.0
        %1608 = vmatpush1.msra.mxu0 0.0
        %1609 = vmatprep.subr.mxu0 0.0
        %1610 = vmatpush1.msra.mxu0 0.0
        %1611 = vmatprep.subr.mxu0 0.0
        %1612 = vmatpush1.msra.mxu0 0.0
        %1613 = vmatprep.subr.mxu0 0.0
        %1614 = vmatpush1.msra.mxu0 0.0
        %1615 = vmatprep.subr.mxu0 0.0
        %1616 = vmatpush1.msra.mxu0 0.0
        %1617 = vmatprep.subr.mxu0 0.0
        %1618 = vmatpush1.msra.mxu0 0.0
        %1619 = vmatprep.subr.mxu0 0.0
        %1620 = vmatpush1.msra.mxu0 0.0
        %1621 = vmatprep.subr.mxu0 0.0
        %1622 = vmatpush1.msra.mxu0 0.0
        %1623 = vmatprep.mubr.f32.mxu0 0.0
        %1624 = vmatmul.mubr.f32.gmra.mrb[0].mxu0 %v1554
        %v1625 = vpop.f32.mrb[0].mxu0
        %v1626 = vadd.f32 %v1551, %v1625
        %v1627 = vpop.f32.mrb[0].mxu0
        %1628 = vmatprep.mubr.f32.mxu0 0.0
        %1629 = vmatmul.mubr.f32.gmra.mrb[0].mxu0 %v1557
        %v1630 = vpop.f32.mrb[0].mxu0
        %v1631 = vadd.f32 %v1551, %v1630
        %v1632 = vpop.f32.mrb[0].mxu0
        %1633 = vdwg.mxu0
        %v1634 = vadd.f32 %v1626, %v1231
        %v1635 = vadd.f32 %v1631, %v1232
        %v1636 = vld [vmem:[%s14] sm:$0x1]
        %v1637 = vld [vmem:[%s15] sm:$0x1]
        %v1638 = vsel %vm576, %v1634, 0.0
        %1639 = vadd.xlane.f32.xlu0 %v1638
        %v1640 = vpop.xlane.xlu0 %1639
        %v1641 = vsel %vm576, %v1635, 0.0
        %1642 = vadd.xlane.f32.xlu0 %v1641
        %v1643 = vpop.xlane.xlu0 %1642
        %v1644 = vmul.f32 %v1640, %v1184
        %v1645 = vmul.f32 %v1643, %v1184
        %v1646 = vsub.f32 %v1634, %v1644
        %v1647 = vsub.f32 %v1635, %v1645
        %v1648 = vmul.f32 %v1646, %v1646
        %v1649 = vmul.f32 %v1647, %v1647
        %v1650 = vsel %vm576, %v1648, 0.0
        %1651 = vadd.xlane.f32.xlu0 %v1650
        %v1652 = vpop.xlane.xlu0 %1651
        %v1653 = vsel %vm576, %v1649, 0.0
        %1654 = vadd.xlane.f32.xlu0 %v1653
        %v1655 = vpop.xlane.xlu0 %1654
        %v1656 = vmul.f32 %v1652, %v1184
        %v1657 = vmul.f32 %v1655, %v1184
        %v1658 = vadd.f32 %v1656, 1e-05
        %v1659 = vadd.f32 %v1657, 1e-05
        %v1660 = vrsqrt.pop %v1658
        %v1661 = vrsqrt.pop %v1659
        %v1662 = vmul.f32 %v1646, %v1660
        %v1663 = vmul.f32 %v1647, %v1661
        %v1665 = vlaneseq
        %v1666 = vshrl.u32 %v1665, 7
        %v1667 = vsub.s32 0, %v1666
        %v1668 = vrot.slane %v1636, %v1667
        %v1670 = vmul.f32 %v1662, %v1668
        %v1671 = vmul.f32 %v1663, %v1668
        %v1673 = vlaneseq
        %v1674 = vshrl.u32 %v1673, 7
        %v1675 = vsub.s32 0, %v1674
        %v1676 = vrot.slane %v1637, %v1675
        %v1678 = vadd.f32 %v1670, %v1676
        %v1679 = vadd.f32 %v1671, %v1676
        %v1680 = vmul.f32 %v1678, %v1224
        %v1681 = vmul.f32 %v1679, %v1229
        %s1682 = scalar_lea.vmem %s4, 32
        %v1683 = vld [vmem:[%s1682] sm:$0xff]
        %v1684 = vld [vmem:[%s1682 + $0x8] sm:$0xff]
        %v1685 = vld [vmem:[%s1682 + $0x10] sm:$0xff]
        %v1686 = vld [vmem:[%s1682 + $0x18] sm:$0xff]
        %s1687 = scalar_lea.vmem %s5, 1
        %v1688 = vld [vmem:[%s1687] sm:$0x1]
        %v1690 = vlaneseq
        %v1691 = vshrl.u32 %v1690, 7
        %v1692 = vsub.s32 0, %v1691
        %v1693 = vrot.slane %v1688, %v1692
        %v1696 = vsel %vm576, %v1680, 0
        %v1699 = vsel %vm576, %v1681, 0
        %1701 = vmatprep.subr.mxu0 0.0
        %1702 = vmatpush1.msra.mxu0 %v1683
        %1703 = vmatprep.subr.mxu0 0.0
        %1704 = vmatpush1.msra.mxu0 %v1684
        %1705 = vmatprep.subr.mxu0 0.0
        %1706 = vmatpush1.msra.mxu0 %v1685
        %1707 = vmatprep.subr.mxu0 0.0
        %1708 = vmatpush1.msra.mxu0 %v1686
        %1709 = vmatprep.subr.mxu0 0.0
        %1710 = vmatpush1.msra.mxu0 0.0
        %1711 = vmatprep.subr.mxu0 0.0
        %1712 = vmatpush1.msra.mxu0 0.0
        %1713 = vmatprep.subr.mxu0 0.0
        %1714 = vmatpush1.msra.mxu0 0.0
        %1715 = vmatprep.subr.mxu0 0.0
        %1716 = vmatpush1.msra.mxu0 0.0
        %1717 = vmatprep.subr.mxu0 0.0
        %1718 = vmatpush1.msra.mxu0 0.0
        %1719 = vmatprep.subr.mxu0 0.0
        %1720 = vmatpush1.msra.mxu0 0.0
        %1721 = vmatprep.subr.mxu0 0.0
        %1722 = vmatpush1.msra.mxu0 0.0
        %1723 = vmatprep.subr.mxu0 0.0
        %1724 = vmatpush1.msra.mxu0 0.0
        %1725 = vmatprep.subr.mxu0 0.0
        %1726 = vmatpush1.msra.mxu0 0.0
        %1727 = vmatprep.subr.mxu0 0.0
        %1728 = vmatpush1.msra.mxu0 0.0
        %1729 = vmatprep.subr.mxu0 0.0
        %1730 = vmatpush1.msra.mxu0 0.0
        %1731 = vmatprep.subr.mxu0 0.0
        %1732 = vmatpush1.msra.mxu0 0.0
        %1733 = vmatprep.subr.mxu0 0.0
        %1734 = vmatpush1.msra.mxu0 0.0
        %1735 = vmatprep.subr.mxu0 0.0
        %1736 = vmatpush1.msra.mxu0 0.0
        %1737 = vmatprep.subr.mxu0 0.0
        %1738 = vmatpush1.msra.mxu0 0.0
        %1739 = vmatprep.subr.mxu0 0.0
        %1740 = vmatpush1.msra.mxu0 0.0
        %1741 = vmatprep.subr.mxu0 0.0
        %1742 = vmatpush1.msra.mxu0 0.0
        %1743 = vmatprep.subr.mxu0 0.0
        %1744 = vmatpush1.msra.mxu0 0.0
        %1745 = vmatprep.subr.mxu0 0.0
        %1746 = vmatpush1.msra.mxu0 0.0
        %1747 = vmatprep.subr.mxu0 0.0
        %1748 = vmatpush1.msra.mxu0 0.0
        %1749 = vmatprep.subr.mxu0 0.0
        %1750 = vmatpush1.msra.mxu0 0.0
        %1751 = vmatprep.subr.mxu0 0.0
        %1752 = vmatpush1.msra.mxu0 0.0
        %1753 = vmatprep.subr.mxu0 0.0
        %1754 = vmatpush1.msra.mxu0 0.0
        %1755 = vmatprep.subr.mxu0 0.0
        %1756 = vmatpush1.msra.mxu0 0.0
        %1757 = vmatprep.subr.mxu0 0.0
        %1758 = vmatpush1.msra.mxu0 0.0
        %1759 = vmatprep.subr.mxu0 0.0
        %1760 = vmatpush1.msra.mxu0 0.0
        %1761 = vmatprep.subr.mxu0 0.0
        %1762 = vmatpush1.msra.mxu0 0.0
        %1763 = vmatprep.subr.mxu0 0.0
        %1764 = vmatpush1.msra.mxu0 0.0
        %1765 = vmatprep.mubr.f32.mxu0 0.0
        %1766 = vmatmul.mubr.f32.gmra.mrb[0].mxu0 %v1696
        %v1767 = vpop.f32.mrb[0].mxu0
        %v1768 = vadd.f32 %v1693, %v1767
        %v1769 = vpop.f32.mrb[0].mxu0
        %1770 = vmatprep.mubr.f32.mxu0 0.0
        %1771 = vmatmul.mubr.f32.gmra.mrb[0].mxu0 %v1699
        %v1772 = vpop.f32.mrb[0].mxu0
        %v1773 = vadd.f32 %v1693, %v1772
        %v1774 = vpop.f32.mrb[0].mxu0
        %1775 = vdwg.mxu0
        %1778 = vrot.lane.b32.xlu0 %v1768, 96
        %v1779 = vpop.permute.xlu0 %1778
        %1780 = vrot.lane.b32.xlu0 %v1773, 96
        %v1781 = vpop.permute.xlu0 %1780
        %v1782 = vsel %vm664, %v1768, 0
        %v1784 = vsel %vm664, %v1773, 0
        %v1786 = vsel %vm664, %v1779, 0
        %v1788 = vsel %vm664, %v1781, 0
        %1790 = vmatprep.subr.mxu0 0.0
        %1791 = vmatpush1.xpose.msra.mxu0 %v1786
        %1792 = vmatprep.subr.mxu0 0.0
        %1793 = vmatpush1.xpose.msra.mxu0 %v1788
        %1794 = vmatprep.subr.mxu0 0.0
        %1795 = vmatpush1.xpose.msra.mxu0 0.0
        %1796 = vmatprep.subr.mxu0 0.0
        %1797 = vmatpush1.xpose.msra.mxu0 0.0
        %1798 = vmatprep.subr.mxu0 0.0
        %1799 = vmatpush1.xpose.msra.mxu0 0.0
        %1800 = vmatprep.subr.mxu0 0.0
        %1801 = vmatpush1.xpose.msra.mxu0 0.0
        %1802 = vmatprep.subr.mxu0 0.0
        %1803 = vmatpush1.xpose.msra.mxu0 0.0
        %1804 = vmatprep.subr.mxu0 0.0
        %1805 = vmatpush1.xpose.msra.mxu0 0.0
        %1806 = vmatprep.subr.mxu0 0.0
        %1807 = vmatpush1.xpose.msra.mxu0 0.0
        %1808 = vmatprep.subr.mxu0 0.0
        %1809 = vmatpush1.xpose.msra.mxu0 0.0
        %1810 = vmatprep.subr.mxu0 0.0
        %1811 = vmatpush1.xpose.msra.mxu0 0.0
        %1812 = vmatprep.subr.mxu0 0.0
        %1813 = vmatpush1.xpose.msra.mxu0 0.0
        %1814 = vmatprep.subr.mxu0 0.0
        %1815 = vmatpush1.xpose.msra.mxu0 0.0
        %1816 = vmatprep.subr.mxu0 0.0
        %1817 = vmatpush1.xpose.msra.mxu0 0.0
        %1818 = vmatprep.subr.mxu0 0.0
        %1819 = vmatpush1.xpose.msra.mxu0 0.0
        %1820 = vmatprep.subr.mxu0 0.0
        %1821 = vmatpush1.xpose.msra.mxu0 0.0
        %1822 = vmatprep.subr.mxu0 0.0
        %1823 = vmatpush1.xpose.msra.mxu0 0.0
        %1824 = vmatprep.subr.mxu0 0.0
        %1825 = vmatpush1.xpose.msra.mxu0 0.0
        %1826 = vmatprep.subr.mxu0 0.0
        %1827 = vmatpush1.xpose.msra.mxu0 0.0
        %1828 = vmatprep.subr.mxu0 0.0
        %1829 = vmatpush1.xpose.msra.mxu0 0.0
        %1830 = vmatprep.subr.mxu0 0.0
        %1831 = vmatpush1.xpose.msra.mxu0 0.0
        %1832 = vmatprep.subr.mxu0 0.0
        %1833 = vmatpush1.xpose.msra.mxu0 0.0
        %1834 = vmatprep.subr.mxu0 0.0
        %1835 = vmatpush1.xpose.msra.mxu0 0.0
        %1836 = vmatprep.subr.mxu0 0.0
        %1837 = vmatpush1.xpose.msra.mxu0 0.0
        %1838 = vmatprep.subr.mxu0 0.0
        %1839 = vmatpush1.xpose.msra.mxu0 0.0
        %1840 = vmatprep.subr.mxu0 0.0
        %1841 = vmatpush1.xpose.msra.mxu0 0.0
        %1842 = vmatprep.subr.mxu0 0.0
        %1843 = vmatpush1.xpose.msra.mxu0 0.0
        %1844 = vmatprep.subr.mxu0 0.0
        %1845 = vmatpush1.xpose.msra.mxu0 0.0
        %1846 = vmatprep.subr.mxu0 0.0
        %1847 = vmatpush1.xpose.msra.mxu0 0.0
        %1848 = vmatprep.subr.mxu0 0.0
        %1849 = vmatpush1.xpose.msra.mxu0 0.0
        %1850 = vmatprep.subr.mxu0 0.0
        %1851 = vmatpush1.xpose.msra.mxu0 0.0
        %1852 = vmatprep.subr.mxu0 0.0
        %1853 = vmatpush1.xpose.msra.mxu0 0.0
        %1854 = vmatprep.mubr.f32.mxu0 0.0
        %1855 = vmatmul.mubr.f32.gmra.mrb[0].mxu0 %v1782
        %v1856 = vpop.f32.mrb[0].mxu0
        %v1857 = vadd.f32 0.0, %v1856
        %v1858 = vpop.f32.mrb[0].mxu0
        %1859 = vmatprep.mubr.f32.mxu0 0.0
        %1860 = vmatmul.mubr.f32.gmra.mrb[0].mxu0 %v1784
        %v1861 = vpop.f32.mrb[0].mxu0
        %v1862 = vadd.f32 0.0, %v1861
        %v1863 = vpop.f32.mrb[0].mxu0
        %1864 = vdwg.mxu0
        %v1865 = vmul.f32 %v1857, 0.25
        %v1866 = vmul.f32 %v1862, 0.25
        %v1867 = vsel %vm756, -1e+09, %v1865
        %v1868 = vsel %vm756, -1e+09, %v1866
        %v1869 = vsel %vm664, %v1867, -inf
        %1870 = vmax.xlane.f32.xlu0 %v1869
        %v1871 = vpop.xlane.xlu0 %1870
        %v1872 = vsel %vm664, %v1868, -inf
        %1873 = vmax.xlane.f32.xlu0 %v1872
        %v1874 = vpop.xlane.xlu0 %1873
        %v1875 = vsub.f32 %v1867, %v1871
        %v1876 = vsub.f32 %v1868, %v1874
        %v1877 = vmul.f32 %v1875, 1.442695
        %v1878 = vpow.pop %v1877
        %v1879 = vmul.f32 %v1876, 1.442695
        %v1880 = vpow.pop %v1879
        %v1881 = vsel %vm664, %v1878, 0.0
        %1882 = vadd.xlane.f32.xlu0 %v1881
        %v1883 = vpop.xlane.xlu0 %1882
        %v1884 = vsel %vm664, %v1880, 0.0
        %1885 = vadd.xlane.f32.xlu0 %v1884
        %v1886 = vpop.xlane.xlu0 %1885
        %v1887 = vrcp.pop %v1883
        %v1888 = vrcp.pop %v1886
        %v1889 = vmul.f32 %v1878, %v1887
        %v1890 = vmul.f32 %v1880, %v1888
        %1891 = vrot.lane.b32.xlu0 %v1768, 64
        %v1892 = vpop.permute.xlu0 %1891
        %1893 = vrot.lane.b32.xlu0 %v1773, 64
        %v1894 = vpop.permute.xlu0 %1893
        %v1898 = vsel %vm664, %v1889, 0
        %v1901 = vsel %vm664, %v1890, 0
        %1903 = vmatprep.subr.mxu0 0.0
        %1904 = vmatpush1.msra.mxu0 %v1892
        %1905 = vmatprep.subr.mxu0 0.0
        %1906 = vmatpush1.msra.mxu0 %v1894
        %1907 = vmatprep.subr.mxu0 0.0
        %1908 = vmatpush1.msra.mxu0 0.0
        %1909 = vmatprep.subr.mxu0 0.0
        %1910 = vmatpush1.msra.mxu0 0.0
        %1911 = vmatprep.subr.mxu0 0.0
        %1912 = vmatpush1.msra.mxu0 0.0
        %1913 = vmatprep.subr.mxu0 0.0
        %1914 = vmatpush1.msra.mxu0 0.0
        %1915 = vmatprep.subr.mxu0 0.0
        %1916 = vmatpush1.msra.mxu0 0.0
        %1917 = vmatprep.subr.mxu0 0.0
        %1918 = vmatpush1.msra.mxu0 0.0
        %1919 = vmatprep.subr.mxu0 0.0
        %1920 = vmatpush1.msra.mxu0 0.0
        %1921 = vmatprep.subr.mxu0 0.0
        %1922 = vmatpush1.msra.mxu0 0.0
        %1923 = vmatprep.subr.mxu0 0.0
        %1924 = vmatpush1.msra.mxu0 0.0
        %1925 = vmatprep.subr.mxu0 0.0
        %1926 = vmatpush1.msra.mxu0 0.0
        %1927 = vmatprep.subr.mxu0 0.0
        %1928 = vmatpush1.msra.mxu0 0.0
        %1929 = vmatprep.subr.mxu0 0.0
        %1930 = vmatpush1.msra.mxu0 0.0
        %1931 = vmatprep.subr.mxu0 0.0
        %1932 = vmatpush1.msra.mxu0 0.0
        %1933 = vmatprep.subr.mxu0 0.0
        %1934 = vmatpush1.msra.mxu0 0.0
        %1935 = vmatprep.subr.mxu0 0.0
        %1936 = vmatpush1.msra.mxu0 0.0
        %1937 = vmatprep.subr.mxu0 0.0
        %1938 = vmatpush1.msra.mxu0 0.0
        %1939 = vmatprep.subr.mxu0 0.0
        %1940 = vmatpush1.msra.mxu0 0.0
        %1941 = vmatprep.subr.mxu0 0.0
        %1942 = vmatpush1.msra.mxu0 0.0
        %1943 = vmatprep.subr.mxu0 0.0
        %1944 = vmatpush1.msra.mxu0 0.0
        %1945 = vmatprep.subr.mxu0 0.0
        %1946 = vmatpush1.msra.mxu0 0.0
        %1947 = vmatprep.subr.mxu0 0.0
        %1948 = vmatpush1.msra.mxu0 0.0
        %1949 = vmatprep.subr.mxu0 0.0
        %1950 = vmatpush1.msra.mxu0 0.0
        %1951 = vmatprep.subr.mxu0 0.0
        %1952 = vmatpush1.msra.mxu0 0.0
        %1953 = vmatprep.subr.mxu0 0.0
        %1954 = vmatpush1.msra.mxu0 0.0
        %1955 = vmatprep.subr.mxu0 0.0
        %1956 = vmatpush1.msra.mxu0 0.0
        %1957 = vmatprep.subr.mxu0 0.0
        %1958 = vmatpush1.msra.mxu0 0.0
        %1959 = vmatprep.subr.mxu0 0.0
        %1960 = vmatpush1.msra.mxu0 0.0
        %1961 = vmatprep.subr.mxu0 0.0
        %1962 = vmatpush1.msra.mxu0 0.0
        %1963 = vmatprep.subr.mxu0 0.0
        %1964 = vmatpush1.msra.mxu0 0.0
        %1965 = vmatprep.subr.mxu0 0.0
        %1966 = vmatpush1.msra.mxu0 0.0
        %1967 = vmatprep.mubr.f32.mxu0 0.0
        %1968 = vmatmul.mubr.f32.gmra.mrb[0].mxu0 %v1898
        %v1969 = vpop.f32.mrb[0].mxu0
        %v1970 = vadd.f32 0.0, %v1969
        %v1971 = vpop.f32.mrb[0].mxu0
        %1972 = vmatprep.mubr.f32.mxu0 0.0
        %1973 = vmatmul.mubr.f32.gmra.mrb[0].mxu0 %v1901
        %v1974 = vpop.f32.mrb[0].mxu0
        %v1975 = vadd.f32 0.0, %v1974
        %v1976 = vpop.f32.mrb[0].mxu0
        %1977 = vdwg.mxu0
        %1978 = vrot.lane.b32.xlu0 %v1768, 112
        %v1979 = vpop.permute.xlu0 %1978
        %1980 = vrot.lane.b32.xlu0 %v1773, 112
        %v1981 = vpop.permute.xlu0 %1980
        %1982 = vrot.lane.b32.xlu0 %v1768, 80
        %v1983 = vpop.permute.xlu0 %1982
        %1984 = vrot.lane.b32.xlu0 %v1773, 80
        %v1985 = vpop.permute.xlu0 %1984
        %v1986 = vsel %vm664, %v1979, 0
        %v1988 = vsel %vm664, %v1981, 0
        %v1990 = vsel %vm664, %v1983, 0
        %v1992 = vsel %vm664, %v1985, 0
        %1994 = vmatprep.subr.mxu0 0.0
        %1995 = vmatpush1.xpose.msra.mxu0 %v1990
        %1996 = vmatprep.subr.mxu0 0.0
        %1997 = vmatpush1.xpose.msra.mxu0 %v1992
        %1998 = vmatprep.subr.mxu0 0.0
        %1999 = vmatpush1.xpose.msra.mxu0 0.0
        %2000 = vmatprep.subr.mxu0 0.0
        %2001 = vmatpush1.xpose.msra.mxu0 0.0
        %2002 = vmatprep.subr.mxu0 0.0
        %2003 = vmatpush1.xpose.msra.mxu0 0.0
        %2004 = vmatprep.subr.mxu0 0.0
        %2005 = vmatpush1.xpose.msra.mxu0 0.0
        %2006 = vmatprep.subr.mxu0 0.0
        %2007 = vmatpush1.xpose.msra.mxu0 0.0
        %2008 = vmatprep.subr.mxu0 0.0
        %2009 = vmatpush1.xpose.msra.mxu0 0.0
        %2010 = vmatprep.subr.mxu0 0.0
        %2011 = vmatpush1.xpose.msra.mxu0 0.0
        %2012 = vmatprep.subr.mxu0 0.0
        %2013 = vmatpush1.xpose.msra.mxu0 0.0
        %2014 = vmatprep.subr.mxu0 0.0
        %2015 = vmatpush1.xpose.msra.mxu0 0.0
        %2016 = vmatprep.subr.mxu0 0.0
        %2017 = vmatpush1.xpose.msra.mxu0 0.0
        %2018 = vmatprep.subr.mxu0 0.0
        %2019 = vmatpush1.xpose.msra.mxu0 0.0
        %2020 = vmatprep.subr.mxu0 0.0
        %2021 = vmatpush1.xpose.msra.mxu0 0.0
        %2022 = vmatprep.subr.mxu0 0.0
        %2023 = vmatpush1.xpose.msra.mxu0 0.0
        %2024 = vmatprep.subr.mxu0 0.0
        %2025 = vmatpush1.xpose.msra.mxu0 0.0
        %2026 = vmatprep.subr.mxu0 0.0
        %2027 = vmatpush1.xpose.msra.mxu0 0.0
        %2028 = vmatprep.subr.mxu0 0.0
        %2029 = vmatpush1.xpose.msra.mxu0 0.0
        %2030 = vmatprep.subr.mxu0 0.0
        %2031 = vmatpush1.xpose.msra.mxu0 0.0
        %2032 = vmatprep.subr.mxu0 0.0
        %2033 = vmatpush1.xpose.msra.mxu0 0.0
        %2034 = vmatprep.subr.mxu0 0.0
        %2035 = vmatpush1.xpose.msra.mxu0 0.0
        %2036 = vmatprep.subr.mxu0 0.0
        %2037 = vmatpush1.xpose.msra.mxu0 0.0
        %2038 = vmatprep.subr.mxu0 0.0
        %2039 = vmatpush1.xpose.msra.mxu0 0.0
        %2040 = vmatprep.subr.mxu0 0.0
        %2041 = vmatpush1.xpose.msra.mxu0 0.0
        %2042 = vmatprep.subr.mxu0 0.0
        %2043 = vmatpush1.xpose.msra.mxu0 0.0
        %2044 = vmatprep.subr.mxu0 0.0
        %2045 = vmatpush1.xpose.msra.mxu0 0.0
        %2046 = vmatprep.subr.mxu0 0.0
        %2047 = vmatpush1.xpose.msra.mxu0 0.0
        %2048 = vmatprep.subr.mxu0 0.0
        %2049 = vmatpush1.xpose.msra.mxu0 0.0
        %2050 = vmatprep.subr.mxu0 0.0
        %2051 = vmatpush1.xpose.msra.mxu0 0.0
        %2052 = vmatprep.subr.mxu0 0.0
        %2053 = vmatpush1.xpose.msra.mxu0 0.0
        %2054 = vmatprep.subr.mxu0 0.0
        %2055 = vmatpush1.xpose.msra.mxu0 0.0
        %2056 = vmatprep.subr.mxu0 0.0
        %2057 = vmatpush1.xpose.msra.mxu0 0.0
        %2058 = vmatprep.mubr.f32.mxu0 0.0
        %2059 = vmatmul.mubr.f32.gmra.mrb[0].mxu0 %v1986
        %v2060 = vpop.f32.mrb[0].mxu0
        %v2061 = vadd.f32 0.0, %v2060
        %v2062 = vpop.f32.mrb[0].mxu0
        %2063 = vmatprep.mubr.f32.mxu0 0.0
        %2064 = vmatmul.mubr.f32.gmra.mrb[0].mxu0 %v1988
        %v2065 = vpop.f32.mrb[0].mxu0
        %v2066 = vadd.f32 0.0, %v2065
        %v2067 = vpop.f32.mrb[0].mxu0
        %2068 = vdwg.mxu0
        %v2069 = vmul.f32 %v2061, 0.25
        %v2070 = vmul.f32 %v2066, 0.25
        %v2071 = vsel %vm756, -1e+09, %v2069
        %v2072 = vsel %vm756, -1e+09, %v2070
        %v2073 = vsel %vm664, %v2071, -inf
        %2074 = vmax.xlane.f32.xlu0 %v2073
        %v2075 = vpop.xlane.xlu0 %2074
        %v2076 = vsel %vm664, %v2072, -inf
        %2077 = vmax.xlane.f32.xlu0 %v2076
        %v2078 = vpop.xlane.xlu0 %2077
        %v2079 = vsub.f32 %v2071, %v2075
        %v2080 = vsub.f32 %v2072, %v2078
        %v2081 = vmul.f32 %v2079, 1.442695
        %v2082 = vpow.pop %v2081
        %v2083 = vmul.f32 %v2080, 1.442695
        %v2084 = vpow.pop %v2083
        %v2085 = vsel %vm664, %v2082, 0.0
        %2086 = vadd.xlane.f32.xlu0 %v2085
        %v2087 = vpop.xlane.xlu0 %2086
        %v2088 = vsel %vm664, %v2084, 0.0
        %2089 = vadd.xlane.f32.xlu0 %v2088
        %v2090 = vpop.xlane.xlu0 %2089
        %v2091 = vrcp.pop %v2087
        %v2092 = vrcp.pop %v2090
        %v2093 = vmul.f32 %v2082, %v2091
        %v2094 = vmul.f32 %v2084, %v2092
        %2095 = vrot.lane.b32.xlu0 %v1768, 48
        %v2096 = vpop.permute.xlu0 %2095
        %2097 = vrot.lane.b32.xlu0 %v1773, 48
        %v2098 = vpop.permute.xlu0 %2097
        %v2102 = vsel %vm664, %v2093, 0
        %v2105 = vsel %vm664, %v2094, 0
        %2107 = vmatprep.subr.mxu0 0.0
        %2108 = vmatpush1.msra.mxu0 %v2096
        %2109 = vmatprep.subr.mxu0 0.0
        %2110 = vmatpush1.msra.mxu0 %v2098
        %2111 = vmatprep.subr.mxu0 0.0
        %2112 = vmatpush1.msra.mxu0 0.0
        %2113 = vmatprep.subr.mxu0 0.0
        %2114 = vmatpush1.msra.mxu0 0.0
        %2115 = vmatprep.subr.mxu0 0.0
        %2116 = vmatpush1.msra.mxu0 0.0
        %2117 = vmatprep.subr.mxu0 0.0
        %2118 = vmatpush1.msra.mxu0 0.0
        %2119 = vmatprep.subr.mxu0 0.0
        %2120 = vmatpush1.msra.mxu0 0.0
        %2121 = vmatprep.subr.mxu0 0.0
        %2122 = vmatpush1.msra.mxu0 0.0
        %2123 = vmatprep.subr.mxu0 0.0
        %2124 = vmatpush1.msra.mxu0 0.0
        %2125 = vmatprep.subr.mxu0 0.0
        %2126 = vmatpush1.msra.mxu0 0.0
        %2127 = vmatprep.subr.mxu0 0.0
        %2128 = vmatpush1.msra.mxu0 0.0
        %2129 = vmatprep.subr.mxu0 0.0
        %2130 = vmatpush1.msra.mxu0 0.0
        %2131 = vmatprep.subr.mxu0 0.0
        %2132 = vmatpush1.msra.mxu0 0.0
        %2133 = vmatprep.subr.mxu0 0.0
        %2134 = vmatpush1.msra.mxu0 0.0
        %2135 = vmatprep.subr.mxu0 0.0
        %2136 = vmatpush1.msra.mxu0 0.0
        %2137 = vmatprep.subr.mxu0 0.0
        %2138 = vmatpush1.msra.mxu0 0.0
        %2139 = vmatprep.subr.mxu0 0.0
        %2140 = vmatpush1.msra.mxu0 0.0
        %2141 = vmatprep.subr.mxu0 0.0
        %2142 = vmatpush1.msra.mxu0 0.0
        %2143 = vmatprep.subr.mxu0 0.0
        %2144 = vmatpush1.msra.mxu0 0.0
        %2145 = vmatprep.subr.mxu0 0.0
        %2146 = vmatpush1.msra.mxu0 0.0
        %2147 = vmatprep.subr.mxu0 0.0
        %2148 = vmatpush1.msra.mxu0 0.0
        %2149 = vmatprep.subr.mxu0 0.0
        %2150 = vmatpush1.msra.mxu0 0.0
        %2151 = vmatprep.subr.mxu0 0.0
        %2152 = vmatpush1.msra.mxu0 0.0
        %2153 = vmatprep.subr.mxu0 0.0
        %2154 = vmatpush1.msra.mxu0 0.0
        %2155 = vmatprep.subr.mxu0 0.0
        %2156 = vmatpush1.msra.mxu0 0.0
        %2157 = vmatprep.subr.mxu0 0.0
        %2158 = vmatpush1.msra.mxu0 0.0
        %2159 = vmatprep.subr.mxu0 0.0
        %2160 = vmatpush1.msra.mxu0 0.0
        %2161 = vmatprep.subr.mxu0 0.0
        %2162 = vmatpush1.msra.mxu0 0.0
        %2163 = vmatprep.subr.mxu0 0.0
        %2164 = vmatpush1.msra.mxu0 0.0
        %2165 = vmatprep.subr.mxu0 0.0
        %2166 = vmatpush1.msra.mxu0 0.0
        %2167 = vmatprep.subr.mxu0 0.0
        %2168 = vmatpush1.msra.mxu0 0.0
        %2169 = vmatprep.subr.mxu0 0.0
        %2170 = vmatpush1.msra.mxu0 0.0
        %2171 = vmatprep.mubr.f32.mxu0 0.0
        %2172 = vmatmul.mubr.f32.gmra.mrb[0].mxu0 %v2102
        %v2173 = vpop.f32.mrb[0].mxu0
        %v2174 = vadd.f32 0.0, %v2173
        %v2175 = vpop.f32.mrb[0].mxu0
        %2176 = vmatprep.mubr.f32.mxu0 0.0
        %2177 = vmatmul.mubr.f32.gmra.mrb[0].mxu0 %v2105
        %v2178 = vpop.f32.mrb[0].mxu0
        %v2179 = vadd.f32 0.0, %v2178
        %v2180 = vpop.f32.mrb[0].mxu0
        %2181 = vdwg.mxu0
        %2184 = vrot.lane.b32.xlu0 %v2174, 16
        %v2185 = vpop.permute.xlu0 %2184
        %2186 = vrot.lane.b32.xlu0 %v2179, 16
        %v2187 = vpop.permute.xlu0 %2186
        %v2190 = vsel %vm664, %v1970, %v2185
        %v2191 = vsel %vm664, %v1975, %v2187
        %s2192 = scalar_lea.vmem %s6, 32
        %v2193 = vld [vmem:[%s2192] sm:$0xff]
        %v2194 = vld [vmem:[%s2192 + $0x8] sm:$0xff]
        %v2195 = vld [vmem:[%s2192 + $0x10] sm:$0xff]
        %v2196 = vld [vmem:[%s2192 + $0x18] sm:$0xff]
        %s2197 = scalar_lea.vmem %s7, 1
        %v2198 = vld [vmem:[%s2197] sm:$0x1]
        %v2200 = vlaneseq
        %v2201 = vshrl.u32 %v2200, 7
        %v2202 = vsub.s32 0, %v2201
        %v2203 = vrot.slane %v2198, %v2202
        %v2206 = vsel %vm576, %v2190, 0
        %v2209 = vsel %vm576, %v2191, 0
        %2211 = vmatprep.subr.mxu0 0.0
        %2212 = vmatpush1.msra.mxu0 %v2193
        %2213 = vmatprep.subr.mxu0 0.0
        %2214 = vmatpush1.msra.mxu0 %v2194
        %2215 = vmatprep.subr.mxu0 0.0
        %2216 = vmatpush1.msra.mxu0 %v2195
        %2217 = vmatprep.subr.mxu0 0.0
        %2218 = vmatpush1.msra.mxu0 %v2196
        %2219 = vmatprep.subr.mxu0 0.0
        %2220 = vmatpush1.msra.mxu0 0.0
        %2221 = vmatprep.subr.mxu0 0.0
        %2222 = vmatpush1.msra.mxu0 0.0
        %2223 = vmatprep.subr.mxu0 0.0
        %2224 = vmatpush1.msra.mxu0 0.0
        %2225 = vmatprep.subr.mxu0 0.0
        %2226 = vmatpush1.msra.mxu0 0.0
        %2227 = vmatprep.subr.mxu0 0.0
        %2228 = vmatpush1.msra.mxu0 0.0
        %2229 = vmatprep.subr.mxu0 0.0
        %2230 = vmatpush1.msra.mxu0 0.0
        %2231 = vmatprep.subr.mxu0 0.0
        %2232 = vmatpush1.msra.mxu0 0.0
        %2233 = vmatprep.subr.mxu0 0.0
        %2234 = vmatpush1.msra.mxu0 0.0
        %2235 = vmatprep.subr.mxu0 0.0
        %2236 = vmatpush1.msra.mxu0 0.0
        %2237 = vmatprep.subr.mxu0 0.0
        %2238 = vmatpush1.msra.mxu0 0.0
        %2239 = vmatprep.subr.mxu0 0.0
        %2240 = vmatpush1.msra.mxu0 0.0
        %2241 = vmatprep.subr.mxu0 0.0
        %2242 = vmatpush1.msra.mxu0 0.0
        %2243 = vmatprep.subr.mxu0 0.0
        %2244 = vmatpush1.msra.mxu0 0.0
        %2245 = vmatprep.subr.mxu0 0.0
        %2246 = vmatpush1.msra.mxu0 0.0
        %2247 = vmatprep.subr.mxu0 0.0
        %2248 = vmatpush1.msra.mxu0 0.0
        %2249 = vmatprep.subr.mxu0 0.0
        %2250 = vmatpush1.msra.mxu0 0.0
        %2251 = vmatprep.subr.mxu0 0.0
        %2252 = vmatpush1.msra.mxu0 0.0
        %2253 = vmatprep.subr.mxu0 0.0
        %2254 = vmatpush1.msra.mxu0 0.0
        %2255 = vmatprep.subr.mxu0 0.0
        %2256 = vmatpush1.msra.mxu0 0.0
        %2257 = vmatprep.subr.mxu0 0.0
        %2258 = vmatpush1.msra.mxu0 0.0
        %2259 = vmatprep.subr.mxu0 0.0
        %2260 = vmatpush1.msra.mxu0 0.0
        %2261 = vmatprep.subr.mxu0 0.0
        %2262 = vmatpush1.msra.mxu0 0.0
        %2263 = vmatprep.subr.mxu0 0.0
        %2264 = vmatpush1.msra.mxu0 0.0
        %2265 = vmatprep.subr.mxu0 0.0
        %2266 = vmatpush1.msra.mxu0 0.0
        %2267 = vmatprep.subr.mxu0 0.0
        %2268 = vmatpush1.msra.mxu0 0.0
        %2269 = vmatprep.subr.mxu0 0.0
        %2270 = vmatpush1.msra.mxu0 0.0
        %2271 = vmatprep.subr.mxu0 0.0
        %2272 = vmatpush1.msra.mxu0 0.0
        %2273 = vmatprep.subr.mxu0 0.0
        %2274 = vmatpush1.msra.mxu0 0.0
        %2275 = vmatprep.mubr.f32.mxu0 0.0
        %2276 = vmatmul.mubr.f32.gmra.mrb[0].mxu0 %v2206
        %v2277 = vpop.f32.mrb[0].mxu0
        %v2278 = vadd.f32 %v2203, %v2277
        %v2279 = vpop.f32.mrb[0].mxu0
        %2280 = vmatprep.mubr.f32.mxu0 0.0
        %2281 = vmatmul.mubr.f32.gmra.mrb[0].mxu0 %v2209
        %v2282 = vpop.f32.mrb[0].mxu0
        %v2283 = vadd.f32 %v2203, %v2282
        %v2284 = vpop.f32.mrb[0].mxu0
        %2285 = vdwg.mxu0
        %v2286 = vadd.f32 %v2278, %v1680
        %v2287 = vadd.f32 %v2283, %v1681
        %s2288 = scalar_lea.vmem %s8, 1
        %v2289 = vld [vmem:[%s2288] sm:$0x1]
        %s2290 = scalar_lea.vmem %s9, 1
        %v2291 = vld [vmem:[%s2290] sm:$0x1]
        %v2292 = vsel %vm576, %v2286, 0.0
        %2293 = vadd.xlane.f32.xlu0 %v2292
        %v2294 = vpop.xlane.xlu0 %2293
        %v2295 = vsel %vm576, %v2287, 0.0
        %2296 = vadd.xlane.f32.xlu0 %v2295
        %v2297 = vpop.xlane.xlu0 %2296
        %v2298 = vmul.f32 %v2294, %v1184
        %v2299 = vmul.f32 %v2297, %v1184
        %v2300 = vsub.f32 %v2286, %v2298
        %v2301 = vsub.f32 %v2287, %v2299
        %v2302 = vmul.f32 %v2300, %v2300
        %v2303 = vmul.f32 %v2301, %v2301
        %v2304 = vsel %vm576, %v2302, 0.0
        %2305 = vadd.xlane.f32.xlu0 %v2304
        %v2306 = vpop.xlane.xlu0 %2305
        %v2307 = vsel %vm576, %v2303, 0.0
        %2308 = vadd.xlane.f32.xlu0 %v2307
        %v2309 = vpop.xlane.xlu0 %2308
        %v2310 = vmul.f32 %v2306, %v1184
        %v2311 = vmul.f32 %v2309, %v1184
        %v2312 = vadd.f32 %v2310, 1e-05
        %v2313 = vadd.f32 %v2311, 1e-05
        %v2314 = vrsqrt.pop %v2312
        %v2315 = vrsqrt.pop %v2313
        %v2316 = vmul.f32 %v2300, %v2314
        %v2317 = vmul.f32 %v2301, %v2315
        %v2319 = vlaneseq
        %v2320 = vshrl.u32 %v2319, 7
        %v2321 = vsub.s32 0, %v2320
        %v2322 = vrot.slane %v2289, %v2321
        %v2324 = vmul.f32 %v2316, %v2322
        %v2325 = vmul.f32 %v2317, %v2322
        %v2327 = vlaneseq
        %v2328 = vshrl.u32 %v2327, 7
        %v2329 = vsub.s32 0, %v2328
        %v2330 = vrot.slane %v2291, %v2329
        %v2332 = vadd.f32 %v2324, %v2330
        %v2333 = vadd.f32 %v2325, %v2330
        %v2334 = vmul.f32 %v2332, %v1224
        %v2335 = vmul.f32 %v2333, %v1229
        %v2338 = vrot.slane %v2334, 4
        %v2339 = vrot.slane %v2335, 4
        %v2340 = vsel %vm1235, %v2338, %v2339
        %v2344 = vsel %vm1235, 0.0, %v2338
        %v2345 = vsel %vm1235, %v2339, 0.0
        %v2348 = vrot.slane %v2344, 1
        %v2349 = vrot.slane %v2340, 1
        %v2350 = vsel %vm1246, %v2348, %v2349
        %v2351 = vrot.slane %v2345, 1
        %v2352 = vsel %vm1246, %v2349, %v2351
        %2353 = vrot.lane.b32.xlu0 %v2350, 32
        %v2354 = vpop.permute.xlu0 %2353
        %2355 = vrot.lane.b32.xlu0 %v2352, 32
        %v2356 = vpop.permute.xlu0 %2355
        %v2359 = vrot.slane %v2344, 2
        %v2360 = vrot.slane %v2340, 2
        %v2361 = vsel %vm1258, %v2359, %v2360
        %v2362 = vrot.slane %v2345, 2
        %v2363 = vsel %vm1258, %v2360, %v2362
        %2364 = vrot.lane.b32.xlu0 %v2361, 64
        %v2365 = vpop.permute.xlu0 %2364
        %2366 = vrot.lane.b32.xlu0 %v2363, 64
        %v2367 = vpop.permute.xlu0 %2366
        %v2370 = vrot.slane %v2344, 3
        %v2371 = vrot.slane %v2340, 3
        %v2372 = vsel %vm1270, %v2370, %v2371
        %v2373 = vrot.slane %v2345, 3
        %v2374 = vsel %vm1270, %v2371, %v2373
        %2375 = vrot.lane.b32.xlu0 %v2372, 96
        %v2376 = vpop.permute.xlu0 %2375
        %2377 = vrot.lane.b32.xlu0 %v2374, 96
        %v2378 = vpop.permute.xlu0 %2377
        %v2381 = vrot.slane %v2344, 4
        %v2382 = vrot.slane %v2340, 4
        %v2383 = vsel %vm1235, %v2381, %v2382
        %v2384 = vrot.slane %v2345, 4
        %v2385 = vsel %vm1235, %v2382, %v2384
        %v2388 = vrot.slane %v2344, 5
        %v2389 = vrot.slane %v2340, 5
        %v2390 = vsel %vm1289, %v2388, %v2389
        %v2391 = vrot.slane %v2345, 5
        %v2392 = vsel %vm1289, %v2389, %v2391
        %2393 = vrot.lane.b32.xlu0 %v2390, 32
        %v2394 = vpop.permute.xlu0 %2393
        %2395 = vrot.lane.b32.xlu0 %v2392, 32
        %v2396 = vpop.permute.xlu0 %2395
        %v2399 = vrot.slane %v2344, 6
        %v2400 = vrot.slane %v2340, 6
        %v2401 = vsel %vm1301, %v2399, %v2400
        %v2402 = vrot.slane %v2345, 6
        %v2403 = vsel %vm1301, %v2400, %v2402
        %2404 = vrot.lane.b32.xlu0 %v2401, 64
        %v2405 = vpop.permute.xlu0 %2404
        %2406 = vrot.lane.b32.xlu0 %v2403, 64
        %v2407 = vpop.permute.xlu0 %2406
        %v2410 = vrot.slane %v2344, 7
        %v2411 = vrot.slane %v2340, 7
        %v2412 = vsel %vm1313, %v2410, %v2411
        %v2413 = vrot.slane %v2345, 7
        %v2414 = vsel %vm1313, %v2411, %v2413
        %2415 = vrot.lane.b32.xlu0 %v2412, 96
        %v2416 = vpop.permute.xlu0 %2415
        %2417 = vrot.lane.b32.xlu0 %v2414, 96
        %v2418 = vpop.permute.xlu0 %2417
        %v2421 = vsel %vm576, %v2344, %v2354
        %v2422 = vsel %vm576, %v2340, %v2356
        %v2423 = vsel %vm1327, %v2421, %v2365
        %v2424 = vsel %vm1327, %v2422, %v2367
        %v2425 = vsel %vm1330, %v2423, %v2376
        %v2426 = vsel %vm1330, %v2424, %v2378
        %v2427 = vsel %vm576, %v2383, %v2394
        %v2428 = vsel %vm576, %v2385, %v2396
        %v2429 = vsel %vm1327, %v2427, %v2405
        %v2430 = vsel %vm1327, %v2428, %v2407
        %v2431 = vsel %vm1330, %v2429, %v2416
        %v2432 = vsel %vm1330, %v2430, %v2418
        %s2433 = scalar_lea.vmem %s10, 288
        %v2434 = vld [vmem:[%s2433] sm:$0xff]
        %v2435 = vld [vmem:[%s2433 + $0x8] sm:$0xff]
        %v2436 = vld [vmem:[%s2433 + $0x10] sm:$0xff]
        %v2437 = vld [vmem:[%s2433 + $0x18] sm:$0xff]
        %v2438 = vld [vmem:[%s2433 + $0x20] sm:$0xff]
        %v2439 = vld [vmem:[%s2433 + $0x28] sm:$0xff]
        %v2440 = vld [vmem:[%s2433 + $0x30] sm:$0xff]
        %v2441 = vld [vmem:[%s2433 + $0x38] sm:$0xff]
        %v2442 = vld [vmem:[%s2433 + $0x40] sm:$0xff]
        %v2443 = vld [vmem:[%s2433 + $0x48] sm:$0xff]
        %v2444 = vld [vmem:[%s2433 + $0x50] sm:$0xff]
        %v2445 = vld [vmem:[%s2433 + $0x58] sm:$0xff]
        %v2446 = vld [vmem:[%s2433 + $0x60] sm:$0xff]
        %v2447 = vld [vmem:[%s2433 + $0x68] sm:$0xff]
        %v2448 = vld [vmem:[%s2433 + $0x70] sm:$0xff]
        %v2449 = vld [vmem:[%s2433 + $0x78] sm:$0xff]
        %v2450 = vld [vmem:[%s2433 + $0x80] sm:$0xff]
        %v2451 = vld [vmem:[%s2433 + $0x88] sm:$0xff]
        %v2452 = vld [vmem:[%s2433 + $0x90] sm:$0xff]
        %v2453 = vld [vmem:[%s2433 + $0x98] sm:$0xff]
        %v2454 = vld [vmem:[%s2433 + $0xa0] sm:$0xff]
        %v2455 = vld [vmem:[%s2433 + $0xa8] sm:$0xff]
        %v2456 = vld [vmem:[%s2433 + $0xb0] sm:$0xff]
        %v2457 = vld [vmem:[%s2433 + $0xb8] sm:$0xff]
        %v2458 = vld [vmem:[%s2433 + $0xc0] sm:$0xff]
        %v2459 = vld [vmem:[%s2433 + $0xc8] sm:$0xff]
        %v2460 = vld [vmem:[%s2433 + $0xd0] sm:$0xff]
        %v2461 = vld [vmem:[%s2433 + $0xd8] sm:$0xff]
        %v2462 = vld [vmem:[%s2433 + $0xe0] sm:$0xff]
        %v2463 = vld [vmem:[%s2433 + $0xe8] sm:$0xff]
        %v2464 = vld [vmem:[%s2433 + $0xf0] sm:$0xff]
        %v2465 = vld [vmem:[%s2433 + $0xf8] sm:$0xff]
        %v2466 = vld [vmem:[%s2433 + $0x100] sm:$0xff]
        %v2467 = vld [vmem:[%s2433 + $0x108] sm:$0xff]
        %v2468 = vld [vmem:[%s2433 + $0x110] sm:$0xff]
        %v2469 = vld [vmem:[%s2433 + $0x118] sm:$0xff]
        %s2470 = scalar_lea.vmem %s11, 1
        %v2471 = vld [vmem:[%s2470] sm:$0x1]
        %v2473 = vlaneseq
        %v2474 = vshrl.u32 %v2473, 7
        %v2475 = vsub.s32 0, %v2474
        %v2476 = vrot.slane %v2471, %v2475
        %v2478 = vsel %vm576, %v2340, 0
        %v2480 = vsel %vm576, %v2345, 0
        %2482 = vmatprep.subr.mxu0 0.0
        %2483 = vmatpush1.msra.mxu0 %v2434
        %2484 = vmatprep.subr.mxu0 0.0
        %2485 = vmatpush1.msra.mxu0 %v2435
        %2486 = vmatprep.subr.mxu0 0.0
        %2487 = vmatpush1.msra.mxu0 %v2436
        %2488 = vmatprep.subr.mxu0 0.0
        %2489 = vmatpush1.msra.mxu0 %v2437
        %2490 = vmatprep.subr.mxu0 0.0
        %2491 = vmatpush1.msra.mxu0 %v2438
        %2492 = vmatprep.subr.mxu0 0.0
        %2493 = vmatpush1.msra.mxu0 %v2439
        %2494 = vmatprep.subr.mxu0 0.0
        %2495 = vmatpush1.msra.mxu0 %v2440
        %2496 = vmatprep.subr.mxu0 0.0
        %2497 = vmatpush1.msra.mxu0 %v2441
        %2498 = vmatprep.subr.mxu0 0.0
        %2499 = vmatpush1.msra.mxu0 %v2442
        %2500 = vmatprep.subr.mxu0 0.0
        %2501 = vmatpush1.msra.mxu0 %v2443
        %2502 = vmatprep.subr.mxu0 0.0
        %2503 = vmatpush1.msra.mxu0 %v2444
        %2504 = vmatprep.subr.mxu0 0.0
        %2505 = vmatpush1.msra.mxu0 %v2445
        %2506 = vmatprep.subr.mxu0 0.0
        %2507 = vmatpush1.msra.mxu0 %v2446
        %2508 = vmatprep.subr.mxu0 0.0
        %2509 = vmatpush1.msra.mxu0 %v2447
        %2510 = vmatprep.subr.mxu0 0.0
        %2511 = vmatpush1.msra.mxu0 %v2448
        %2512 = vmatprep.subr.mxu0 0.0
        %2513 = vmatpush1.msra.mxu0 %v2449
        %2514 = vmatprep.subr.mxu0 0.0
        %2515 = vmatpush1.msra.mxu0 %v2450
        %2516 = vmatprep.subr.mxu0 0.0
        %2517 = vmatpush1.msra.mxu0 %v2451
        %2518 = vmatprep.subr.mxu0 0.0
        %2519 = vmatpush1.msra.mxu0 %v2452
        %2520 = vmatprep.subr.mxu0 0.0
        %2521 = vmatpush1.msra.mxu0 %v2453
        %2522 = vmatprep.subr.mxu0 0.0
        %2523 = vmatpush1.msra.mxu0 %v2454
        %2524 = vmatprep.subr.mxu0 0.0
        %2525 = vmatpush1.msra.mxu0 %v2455
        %2526 = vmatprep.subr.mxu0 0.0
        %2527 = vmatpush1.msra.mxu0 %v2456
        %2528 = vmatprep.subr.mxu0 0.0
        %2529 = vmatpush1.msra.mxu0 %v2457
        %2530 = vmatprep.subr.mxu0 0.0
        %2531 = vmatpush1.msra.mxu0 %v2458
        %2532 = vmatprep.subr.mxu0 0.0
        %2533 = vmatpush1.msra.mxu0 %v2459
        %2534 = vmatprep.subr.mxu0 0.0
        %2535 = vmatpush1.msra.mxu0 %v2460
        %2536 = vmatprep.subr.mxu0 0.0
        %2537 = vmatpush1.msra.mxu0 %v2461
        %2538 = vmatprep.subr.mxu0 0.0
        %2539 = vmatpush1.msra.mxu0 %v2462
        %2540 = vmatprep.subr.mxu0 0.0
        %2541 = vmatpush1.msra.mxu0 %v2463
        %2542 = vmatprep.subr.mxu0 0.0
        %2543 = vmatpush1.msra.mxu0 %v2464
        %2544 = vmatprep.subr.mxu0 0.0
        %2545 = vmatpush1.msra.mxu0 %v2465
        %2546 = vmatprep.mubr.f32.mxu0 %v2431
        %2547 = vmatmul.mubr.f32.gmra.mrb[0].mxu0 %v2425
        %v2548 = vpop.f32.mrb[0].mxu0
        %v2549 = vadd.f32 %v2476, %v2548
        %v2550 = vpop.f32.mrb[0].mxu0
        %2551 = vmatprep.mubr.f32.mxu0 %v2432
        %2552 = vmatmul.mubr.f32.gmra.mrb[0].mxu0 %v2426
        %v2553 = vpop.f32.mrb[0].mxu0
        %v2554 = vadd.f32 %v2476, %v2553
        %v2555 = vpop.f32.mrb[0].mxu0
        %2556 = vdwg.mxu0
        %2557 = vmatprep.subr.mxu0 0.0
        %2558 = vmatpush1.msra.mxu0 %v2466
        %2559 = vmatprep.subr.mxu0 0.0
        %2560 = vmatpush1.msra.mxu0 %v2467
        %2561 = vmatprep.subr.mxu0 0.0
        %2562 = vmatpush1.msra.mxu0 %v2468
        %2563 = vmatprep.subr.mxu0 0.0
        %2564 = vmatpush1.msra.mxu0 %v2469
        %2565 = vmatprep.subr.mxu0 0.0
        %2566 = vmatpush1.msra.mxu0 0.0
        %2567 = vmatprep.subr.mxu0 0.0
        %2568 = vmatpush1.msra.mxu0 0.0
        %2569 = vmatprep.subr.mxu0 0.0
        %2570 = vmatpush1.msra.mxu0 0.0
        %2571 = vmatprep.subr.mxu0 0.0
        %2572 = vmatpush1.msra.mxu0 0.0
        %2573 = vmatprep.subr.mxu0 0.0
        %2574 = vmatpush1.msra.mxu0 0.0
        %2575 = vmatprep.subr.mxu0 0.0
        %2576 = vmatpush1.msra.mxu0 0.0
        %2577 = vmatprep.subr.mxu0 0.0
        %2578 = vmatpush1.msra.mxu0 0.0
        %2579 = vmatprep.subr.mxu0 0.0
        %2580 = vmatpush1.msra.mxu0 0.0
        %2581 = vmatprep.subr.mxu0 0.0
        %2582 = vmatpush1.msra.mxu0 0.0
        %2583 = vmatprep.subr.mxu0 0.0
        %2584 = vmatpush1.msra.mxu0 0.0
        %2585 = vmatprep.subr.mxu0 0.0
        %2586 = vmatpush1.msra.mxu0 0.0
        %2587 = vmatprep.subr.mxu0 0.0
        %2588 = vmatpush1.msra.mxu0 0.0
        %2589 = vmatprep.subr.mxu0 0.0
        %2590 = vmatpush1.msra.mxu0 0.0
        %2591 = vmatprep.subr.mxu0 0.0
        %2592 = vmatpush1.msra.mxu0 0.0
        %2593 = vmatprep.subr.mxu0 0.0
        %2594 = vmatpush1.msra.mxu0 0.0
        %2595 = vmatprep.subr.mxu0 0.0
        %2596 = vmatpush1.msra.mxu0 0.0
        %2597 = vmatprep.subr.mxu0 0.0
        %2598 = vmatpush1.msra.mxu0 0.0
        %2599 = vmatprep.subr.mxu0 0.0
        %2600 = vmatpush1.msra.mxu0 0.0
        %2601 = vmatprep.subr.mxu0 0.0
        %2602 = vmatpush1.msra.mxu0 0.0
        %2603 = vmatprep.subr.mxu0 0.0
        %2604 = vmatpush1.msra.mxu0 0.0
        %2605 = vmatprep.subr.mxu0 0.0
        %2606 = vmatpush1.msra.mxu0 0.0
        %2607 = vmatprep.subr.mxu0 0.0
        %2608 = vmatpush1.msra.mxu0 0.0
        %2609 = vmatprep.subr.mxu0 0.0
        %2610 = vmatpush1.msra.mxu0 0.0
        %2611 = vmatprep.subr.mxu0 0.0
        %2612 = vmatpush1.msra.mxu0 0.0
        %2613 = vmatprep.subr.mxu0 0.0
        %2614 = vmatpush1.msra.mxu0 0.0
        %2615 = vmatprep.subr.mxu0 0.0
        %2616 = vmatpush1.msra.mxu0 0.0
        %2617 = vmatprep.subr.mxu0 0.0
        %2618 = vmatpush1.msra.mxu0 0.0
        %2619 = vmatprep.subr.mxu0 0.0
        %2620 = vmatpush1.msra.mxu0 0.0
        %2621 = vmatprep.mubr.f32.mxu0 0.0
        %2622 = vmatmul.mubr.f32.gmra.mrb[0].mxu0 %v2478
        %v2623 = vpop.f32.mrb[0].mxu0
        %v2624 = vadd.f32 %v2549, %v2623
        %v2625 = vpop.f32.mrb[0].mxu0
        %2626 = vmatprep.mubr.f32.mxu0 0.0
        %2627 = vmatmul.mubr.f32.gmra.mrb[0].mxu0 %v2480
        %v2628 = vpop.f32.mrb[0].mxu0
        %v2629 = vadd.f32 %v2554, %v2628
        %v2630 = vpop.f32.mrb[0].mxu0
        %2631 = vdwg.mxu0
        %v2632 = vmax.f32 %v2624, 0.0
        %v2633 = vmax.f32 %v2629, 0.0
        %s2634 = scalar_lea.vmem %s12, 64
        %v2635 = vld [vmem:[%s2634] sm:$0xff]
        %v2636 = vld [vmem:[%s2634 + $0x8] sm:$0xff]
        %v2637 = vld [vmem:[%s2634 + $0x10] sm:$0xff]
        %v2638 = vld [vmem:[%s2634 + $0x18] sm:$0xff]
        %v2639 = vld [vmem:[%s2634 + $0x20] sm:$0xff]
        %v2640 = vld [vmem:[%s2634 + $0x28] sm:$0xff]
        %v2641 = vld [vmem:[%s2634 + $0x30] sm:$0xff]
        %v2642 = vld [vmem:[%s2634 + $0x38] sm:$0xff]
        %s2643 = scalar_lea.vmem %s13, 1
        %v2644 = vld [vmem:[%s2643] sm:$0x1]
        %v2646 = vlaneseq
        %v2647 = vshrl.u32 %v2646, 7
        %v2648 = vsub.s32 0, %v2647
        %v2649 = vrot.slane %v2644, %v2648
        %v2652 = vsel %vm1327, %v2632, 0
        %v2655 = vsel %vm1327, %v2633, 0
        %2657 = vmatprep.subr.mxu0 0.0
        %2658 = vmatpush1.msra.mxu0 %v2635
        %2659 = vmatprep.subr.mxu0 0.0
        %2660 = vmatpush1.msra.mxu0 %v2636
        %2661 = vmatprep.subr.mxu0 0.0
        %2662 = vmatpush1.msra.mxu0 %v2637
        %2663 = vmatprep.subr.mxu0 0.0
        %2664 = vmatpush1.msra.mxu0 %v2638
        %2665 = vmatprep.subr.mxu0 0.0
        %2666 = vmatpush1.msra.mxu0 %v2639
        %2667 = vmatprep.subr.mxu0 0.0
        %2668 = vmatpush1.msra.mxu0 %v2640
        %2669 = vmatprep.subr.mxu0 0.0
        %2670 = vmatpush1.msra.mxu0 %v2641
        %2671 = vmatprep.subr.mxu0 0.0
        %2672 = vmatpush1.msra.mxu0 %v2642
        %2673 = vmatprep.subr.mxu0 0.0
        %2674 = vmatpush1.msra.mxu0 0.0
        %2675 = vmatprep.subr.mxu0 0.0
        %2676 = vmatpush1.msra.mxu0 0.0
        %2677 = vmatprep.subr.mxu0 0.0
        %2678 = vmatpush1.msra.mxu0 0.0
        %2679 = vmatprep.subr.mxu0 0.0
        %2680 = vmatpush1.msra.mxu0 0.0
        %2681 = vmatprep.subr.mxu0 0.0
        %2682 = vmatpush1.msra.mxu0 0.0
        %2683 = vmatprep.subr.mxu0 0.0
        %2684 = vmatpush1.msra.mxu0 0.0
        %2685 = vmatprep.subr.mxu0 0.0
        %2686 = vmatpush1.msra.mxu0 0.0
        %2687 = vmatprep.subr.mxu0 0.0
        %2688 = vmatpush1.msra.mxu0 0.0
        %2689 = vmatprep.subr.mxu0 0.0
        %2690 = vmatpush1.msra.mxu0 0.0
        %2691 = vmatprep.subr.mxu0 0.0
        %2692 = vmatpush1.msra.mxu0 0.0
        %2693 = vmatprep.subr.mxu0 0.0
        %2694 = vmatpush1.msra.mxu0 0.0
        %2695 = vmatprep.subr.mxu0 0.0
        %2696 = vmatpush1.msra.mxu0 0.0
        %2697 = vmatprep.subr.mxu0 0.0
        %2698 = vmatpush1.msra.mxu0 0.0
        %2699 = vmatprep.subr.mxu0 0.0
        %2700 = vmatpush1.msra.mxu0 0.0
        %2701 = vmatprep.subr.mxu0 0.0
        %2702 = vmatpush1.msra.mxu0 0.0
        %2703 = vmatprep.subr.mxu0 0.0
        %2704 = vmatpush1.msra.mxu0 0.0
        %2705 = vmatprep.subr.mxu0 0.0
        %2706 = vmatpush1.msra.mxu0 0.0
        %2707 = vmatprep.subr.mxu0 0.0
        %2708 = vmatpush1.msra.mxu0 0.0
        %2709 = vmatprep.subr.mxu0 0.0
        %2710 = vmatpush1.msra.mxu0 0.0
        %2711 = vmatprep.subr.mxu0 0.0
        %2712 = vmatpush1.msra.mxu0 0.0
        %2713 = vmatprep.subr.mxu0 0.0
        %2714 = vmatpush1.msra.mxu0 0.0
        %2715 = vmatprep.subr.mxu0 0.0
        %2716 = vmatpush1.msra.mxu0 0.0
        %2717 = vmatprep.subr.mxu0 0.0
        %2718 = vmatpush1.msra.mxu0 0.0
        %2719 = vmatprep.subr.mxu0 0.0
        %2720 = vmatpush1.msra.mxu0 0.0
        %2721 = vmatprep.mubr.f32.mxu0 0.0
        %2722 = vmatmul.mubr.f32.gmra.mrb[0].mxu0 %v2652
        %v2723 = vpop.f32.mrb[0].mxu0
        %v2724 = vadd.f32 %v2649, %v2723
        %v2725 = vpop.f32.mrb[0].mxu0
        %2726 = vmatprep.mubr.f32.mxu0 0.0
        %2727 = vmatmul.mubr.f32.gmra.mrb[0].mxu0 %v2655
        %v2728 = vpop.f32.mrb[0].mxu0
        %v2729 = vadd.f32 %v2649, %v2728
        %v2730 = vpop.f32.mrb[0].mxu0
        %2731 = vdwg.mxu0
        %v2732 = vadd.f32 %v2724, %v2334
        %v2733 = vadd.f32 %v2729, %v2335
        %s2734 = scalar_lea.vmem %s14, 1
        %v2735 = vld [vmem:[%s2734] sm:$0x1]
        %s2736 = scalar_lea.vmem %s15, 1
        %v2737 = vld [vmem:[%s2736] sm:$0x1]
        %v2738 = vsel %vm576, %v2732, 0.0
        %2739 = vadd.xlane.f32.xlu0 %v2738
        %v2740 = vpop.xlane.xlu0 %2739
        %v2741 = vsel %vm576, %v2733, 0.0
        %2742 = vadd.xlane.f32.xlu0 %v2741
        %v2743 = vpop.xlane.xlu0 %2742
        %v2744 = vmul.f32 %v2740, %v1184
        %v2745 = vmul.f32 %v2743, %v1184
        %v2746 = vsub.f32 %v2732, %v2744
        %v2747 = vsub.f32 %v2733, %v2745
        %v2748 = vmul.f32 %v2746, %v2746
        %v2749 = vmul.f32 %v2747, %v2747
        %v2750 = vsel %vm576, %v2748, 0.0
        %2751 = vadd.xlane.f32.xlu0 %v2750
        %v2752 = vpop.xlane.xlu0 %2751
        %v2753 = vsel %vm576, %v2749, 0.0
        %2754 = vadd.xlane.f32.xlu0 %v2753
        %v2755 = vpop.xlane.xlu0 %2754
        %v2756 = vmul.f32 %v2752, %v1184
        %v2757 = vmul.f32 %v2755, %v1184
        %v2758 = vadd.f32 %v2756, 1e-05
        %v2759 = vadd.f32 %v2757, 1e-05
        %v2760 = vrsqrt.pop %v2758
        %v2761 = vrsqrt.pop %v2759
        %v2762 = vmul.f32 %v2746, %v2760
        %v2763 = vmul.f32 %v2747, %v2761
        %v2765 = vlaneseq
        %v2766 = vshrl.u32 %v2765, 7
        %v2767 = vsub.s32 0, %v2766
        %v2768 = vrot.slane %v2735, %v2767
        %v2770 = vmul.f32 %v2762, %v2768
        %v2771 = vmul.f32 %v2763, %v2768
        %v2773 = vlaneseq
        %v2774 = vshrl.u32 %v2773, 7
        %v2775 = vsub.s32 0, %v2774
        %v2776 = vrot.slane %v2737, %v2775
        %v2778 = vadd.f32 %v2770, %v2776
        %v2779 = vadd.f32 %v2771, %v2776
        %v2780 = vmul.f32 %v2778, %v1224
        %v2781 = vmul.f32 %v2779, %v1229
        %2782 = vst.msk [vmem:[%s540] sm:$0xff] %vm576, %v2780
        %2783 = vst.msk [vmem:[%s540 + $0x8] sm:$0xff] %vm576, %v2781
        %s2784 = sand.u32 %s389, 1
        %s2785 = scalar_lea.sflag [#allocation3], %s2784
        %s2786 = sand.u32 %s389, 1
        %s2787 = smul.addr %s2786, 16
        %s2788 = scalar_lea.vmem [#allocation2], %s2787
        // Predicated region
        $region85: #{tpu_custom_call.1} parent=83 // pred_check
          %p2789 = pneg %p399
        $region86: #{tpu_custom_call.1} parent=83 // pred_check_branch
          %2791 = sbr.rel (%p2789) target = $region88
        $region87: #{tpu_custom_call.1} parent=83 // pred_region
          %s2793 = ssub.s32 256, 256
          %2794 = vsyncadd %s2785, %s2793
          %s2795 = smul.addr %s30, 2
          %s2796 = smul.addr %s2795, 128
          %s2797 = scalar_lea.hbm %s16, %s2796
          %s2798 = sshll.u32 %s2788, 4
          %s2799 = int_to_ptr.vmem [resolvable:$true] %s2798
          %2804 = dma.vmem_to_hbm [thread:$0]  %s2799, 256, %s2797, %s2785, 128, 128, 8
        $region88: #{tpu_custom_call.1} parent=83 // pred_fallthru
          _
      $region84: #{tpu_custom_call.1} parent=5 // pred_fallthru
        _
      %p2805 = scmp.le.s32.totalorder 2, %s25
      // Predicated region
      $region89: #{tpu_custom_call.1} parent=5 // pred_check
        %p2806 = pneg %p2805
      $region90: #{tpu_custom_call.1} parent=5 // pred_check_branch
        %2808 = sbr.rel (%p2806) target = $region92
      $region91: #{tpu_custom_call.1} parent=5 // pred_region
        %s2809 = ssub.s32 %s25, 2
        // Predicated region
        $region93: #{tpu_custom_call.1} parent=91 // pred_check
          %p2810 = pneg %p405
        $region94: #{tpu_custom_call.1} parent=91 // pred_check_branch
          %2812 = sbr.rel (%p2810) target = $region96
        $region95: #{tpu_custom_call.1} parent=91 // pred_region
          %s2813 = sand.u32 %s390, 1
          %s2814 = scalar_lea.sflag [#allocation3], %s2813
          %s2815 = sand.u32 %s390, 1
          %s2816 = smul.addr %s2815, 16
          %s2817 = scalar_lea.vmem [#allocation2], %s2816
          %2818 = dma.done %s2814, 256
        $region96: #{tpu_custom_call.1} parent=91 // pred_fallthru
          _
      $region92: #{tpu_custom_call.1} parent=5 // pred_fallthru
        _
    $region6: #{tpu_custom_call.1} parent=1 // loop_footer
      %s29 = sadd.s32 1, %s25
    $region7: #{tpu_custom_call.1} parent=1 // loop_footer_branch
      %24 = sbr.rel target = $region3
    $region8: #{tpu_custom_call.1} parent=1 // loop_exit
      _
    %2819 = vsyncpa [#allocation3], 1
    %s2820 = scalar_lea.sflag [#allocation3], 1
    %2821 = vsyncpa %s2820, 1

</llo_original>
